<compile_context>
chip_gen: v7x
topology: tpu7x:2x2x1
jax: 0.10.0
libtpu: 0.0.40
codegen_flags: <defaults>
</compile_context>

<pallas_src>
import functools

import jax
import jax.numpy as jnp
from jax.experimental import pallas as pl
from jax.experimental.pallas import tpu as pltpu

_BN_EPS = 1e-5


# ----------------------------------------------------------------------------
# Fused Conv3d(3x3x3) + BN + Z/F gating + directional fo-pool Pallas kernel
# ----------------------------------------------------------------------------
def _qrnn_layer_kernel(*refs, H, CW, has_skip):
    """One grid step = one (batch b, spectral slice d) of a QRNN layer.

    inputs:
      xm1, x0, xp1 : (1, 1, Hp, Cin*Wp) bf16   padded input at D-taps d-1, d, d+1
      w_ref        : (3, 3, Cin*Wp, 2C*W) bf16 width-expanded, BN-folded weight
      b_ref        : (1, 2C*W) f32             BN-folded bias
      [skip_ref]   : (1, 1, H, C*W) bf16       residual fused into the output
    output:
      o_ref        : (1, 1, H, C*W) bf16
    scratch:
      h_ref        : (H, C*W) f32              fo-pool hidden state over D
    """
    if has_skip:
        xm1, x0, xp1, w_ref, b_ref, skip_ref, o_ref, h_ref = refs
    else:
        xm1, x0, xp1, w_ref, b_ref, o_ref, h_ref = refs
        skip_ref = None

    # First step of this batch element's spectral scan -> reset hidden state.
    @pl.when(pl.program_id(1) == 0)
    def _():
        h_ref[...] = jnp.zeros_like(h_ref)

    # Conv3d as 9 lane-dense GEMMs: 3 D-taps x 3 H-taps (the 3 W-taps are
    # folded into the expanded weight).  bf16 operands, f32 MXU accumulation.
    acc = jnp.zeros((H, 2 * CW), jnp.float32)
    for kd, x_ref in enumerate((xm1, x0, xp1)):
        for kh in range(3):
            a = x_ref[0, 0, kh:kh + H, :]                  # (H, Cin*Wp) bf16
            acc = acc + jnp.dot(a, w_ref[kd, kh],
                                preferred_element_type=jnp.float32)
    gates = acc + b_ref[...]                               # (H, 2C*W) f32

    # fo-pool (math kept in f32; bf16 is only used for HBM storage).
    z = jnp.tanh(gates[:, :CW])
    f = jax.nn.sigmoid(gates[:, CW:])
    h = f * h_ref[...] + (1.0 - f) * z
    h_ref[...] = h

    out = h
    if has_skip:                                           # fused residual add
        out = out + skip_ref[0, 0].astype(jnp.float32)
    o_ref[0, 0] = out.astype(o_ref.dtype)


# ----------------------------------------------------------------------------
# Wrapper glue: BN folding, weight expansion, per-layer pallas_call
# ----------------------------------------------------------------------------
def _fold_bn(w, gamma, beta, mean, var):
    scale = gamma / jnp.sqrt(var + _BN_EPS)
    return w * scale[:, None, None, None, None], beta - mean * scale


def _expand_weights(w_f, W):
    """(2C, Cin, 3, 3, 3) folded conv weight -> (3, 3, Cin*Wp, 2C*W).

    Wbig[kd, kh, ci*Wp + wq, co*W + w] = w_f[co, ci, kd, kh, wq - w]
    for wq - w in {0, 1, 2}, else 0 (folds the 3 W-taps into one GEMM).
    """
    C2, Cin = w_f.shape[:2]
    Wp = W + 2
    kw = jnp.arange(Wp)[:, None] - jnp.arange(W)[None, :]          # (Wp, W)
    valid = (kw >= 0) & (kw <= 2)
    kwc = jnp.clip(kw, 0, 2)
    kt = jnp.transpose(w_f, (2, 3, 1, 0, 4))                       # (3,3,Cin,2C,3)
    t = kt[..., kwc] * valid[None, None, None, None]               # (3,3,Cin,2C,Wp,W)
    t = jnp.transpose(t, (0, 1, 2, 4, 3, 5))                       # (3,3,Cin,Wp,2C,W)
    return t.reshape(3, 3, Cin * Wp, C2 * W)


def qrnn_layer(x, out_skip, p, reverse, upsample):
    """One QRNNConv3D / QRNNUpsampleConv3d layer with fused output skip-add.

    x:        (B, D, H, Cin, W) bf16
    out_skip: (B, D, Ho, C, Wo) bf16 or None (added to this layer's output,
              i.e. the `x = x + xs.pop()` consumed by the next layer)
    """
    if upsample:
        # nearest-neighbour (1, 2, 2) upsample before the conv.
        # TODO(synk): fold the upsample into the expanded-weight / row indexing
        # instead of materializing the 4x activation in HBM.
        x = jnp.repeat(jnp.repeat(x, 2, axis=2), 2, axis=4)
    B, D, H, Cin, W = x.shape
    Hp, Wp = H + 2, W + 2
    C = p['w'].shape[0] // 2                    # hidden channels
    CW, C2W = C * W, 2 * C * W
    CinWp = Cin * Wp

    # Pad D/H/W by 1 and flatten (Cin, Wp) into the lane axis (free reshape).
    xpad = jnp.pad(x, ((0, 0), (1, 1), (1, 1), (0, 0), (1, 1)))
    xf = xpad.reshape(B, D + 2, Hp, CinWp)

    w_f, b_f = _fold_bn(p['w'], p['gamma'], p['beta'], p['mean'], p['var'])
    wbig = _expand_weights(w_f, W).astype(jnp.bfloat16)
    bias = jnp.repeat(b_f, W).reshape(1, C2W).astype(jnp.float32)

    if reverse:
        def x_map(t):
            return lambda b, d: (b, D - 1 - d + t, 0, 0)
        out_map = lambda b, d: (b, D - 1 - d, 0, 0)
    else:
        def x_map(t):
            return lambda b, d: (b, d + t, 0, 0)
        out_map = lambda b, d: (b, d, 0, 0)

    in_specs = [
        pl.BlockSpec((1, 1, Hp, CinWp), x_map(0)),
        pl.BlockSpec((1, 1, Hp, CinWp), x_map(1)),
        pl.BlockSpec((1, 1, Hp, CinWp), x_map(2)),
        pl.BlockSpec((3, 3, CinWp, C2W), lambda b, d: (0, 0, 0, 0)),
        pl.BlockSpec((1, C2W), lambda b, d: (0, 0)),
    ]
    inputs = [xf, xf, xf, wbig, bias]
    has_skip = out_skip is not None
    if has_skip:
        in_specs.append(pl.BlockSpec((1, 1, H, CW), out_map))
        inputs.append(out_skip.reshape(B, D, H, CW))

    out = pl.pallas_call(
        functools.partial(_qrnn_layer_kernel, H=H, CW=CW, has_skip=has_skip),
        out_shape=jax.ShapeDtypeStruct((B, D, H, CW), jnp.bfloat16),
        grid_spec=pltpu.PrefetchScalarGridSpec(
            num_scalar_prefetch=0,
            grid=(B, D),
            in_specs=in_specs,
            out_specs=pl.BlockSpec((1, 1, H, CW), out_map),
            scratch_shapes=[pltpu.VMEM((H, CW), jnp.float32)],
        ),
        compiler_params=pltpu.CompilerParams(
            dimension_semantics=("parallel", "arbitrary"),
            vmem_limit_bytes=48 * 1024 * 1024),
    )(*inputs)
    return out.reshape(B, D, H, C, W)


# ----------------------------------------------------------------------------
# Decoder.forward (Fusion=None)
# ----------------------------------------------------------------------------
def decoder_forward(params, x_ncdhw, xs_ncdhw, reverse):
    """x, xs are in PyTorch NCDHW layout; returns NCDHW f32."""
    to_internal = lambda a: jnp.transpose(a, (0, 2, 3, 1, 4)).astype(jnp.bfloat16)
    x = to_internal(x_ncdhw)
    xs = [to_internal(s) for s in xs_ncdhw]

    layers = params['layers']
    n = len(layers)
    r = reverse
    for i, (kind, p) in enumerate(layers):
        # The reference does `x = x + xs.pop()` right before layers[i+1];
        # that add is fused into layer i's output write.
        out_skip = xs.pop() if i < n - 1 else None
        x = qrnn_layer(x, out_skip, p, reverse=r, upsample=(kind == 'up'))
        r = not r
    return jnp.transpose(x, (0, 3, 1, 2, 4)).astype(jnp.float32)


# ----------------------------------------------------------------------------
# Parameter construction (deterministic, synthetic)
# ----------------------------------------------------------------------------
def _init_qrnn_layer(key, cin, hidden):
    c2 = 2 * hidden
    kw_, kg, kb, km = jax.random.split(key, 4)
    w = (0.3 / (27.0 * cin) ** 0.5) * jax.random.normal(
        kw_, (c2, cin, 3, 3, 3), jnp.float32)
    # TODO(synk): training-mode BatchNorm3d (batch statistics) is not
    # implemented; eval-mode BN with running stats is folded into the conv.
    return dict(
        w=w,
        gamma=1.0 + 0.1 * jax.random.normal(kg, (c2,), jnp.float32),
        beta=0.1 * jax.random.normal(kb, (c2,), jnp.float32),
        mean=0.1 * jax.random.normal(km, (c2,), jnp.float32),
        var=jnp.ones((c2,), jnp.float32),
    )


def init_decoder_params(key, channels, num_half_layer, sample_idx):
    """Mirrors Decoder.__init__ with Fusion=None."""
    # TODO(synk): the Fusion != None branch of Decoder is not implemented.
    keys = jax.random.split(key, num_half_layer)
    layers = []
    ch = channels
    for j, i in enumerate(reversed(range(num_half_layer))):
        if i not in sample_idx:
            layers.append(('plain', _init_qrnn_layer(keys[j], ch, ch)))
        else:
            layers.append(('up', _init_qrnn_layer(keys[j], ch, ch // 2)))
            ch //= 2
    return {'layers': layers, 'out_channels': ch}


# ----------------------------------------------------------------------------
if __name__ == "__main__":
    key = jax.random.PRNGKey(0)
    kp, kx, ks = jax.random.split(key, 3)

    channels, num_half_layer, sample_idx = 16, 2, (1,)
    B, D, H, W = 2, 8, 8, 8

    params = init_decoder_params(kp, channels, num_half_layer, sample_idx)

    # Decoder input (bottleneck activation) and one skip connection at the
    # resolution / channel count produced after the UpConv layer.
    x = jax.random.normal(kx, (B, channels, D, H, W), jnp.float32)
    skip = jax.random.normal(ks, (B, channels // 2, D, 2 * H, 2 * W),
                             jnp.float32)

    fwd = jax.jit(lambda a, s: decoder_forward(params, a, s, reverse=False))
    y = fwd(x, (skip,))
    jax.block_until_ready(y)

    assert y.shape == (B, channels // 2, D, 2 * H, 2 * W), y.shape
    assert bool(jnp.all(jnp.isfinite(y)))
    print("KERNEL_OK")
</pallas_src>

<mosaic_0001>
module attributes {stable_mosaic.version = 11 : i64} {
  func.func @_qrnn_layer_kernel(%arg0: i32, %arg1: i32, %arg2: memref<1x1x18x288xbf16, #tpu.memory_space<vmem>>, %arg3: memref<1x1x18x288xbf16, #tpu.memory_space<vmem>>, %arg4: memref<1x1x18x288xbf16, #tpu.memory_space<vmem>>, %arg5: memref<3x3x288x256xbf16, #tpu.memory_space<vmem>>, %arg6: memref<1x256xf32, #tpu.memory_space<vmem>>, %arg7: memref<1x1x16x128xbf16, #tpu.memory_space<vmem>>, %arg8: memref<1x1x16x128xbf16, #tpu.memory_space<vmem>>, %arg9: memref<16x128xf32, #tpu.memory_space<vmem>>) attributes {dimension_semantics = [#tpu.dimension_semantics<parallel>, #tpu.dimension_semantics<arbitrary>], iteration_bounds = array<i64: 2, 8>, scalar_prefetch = 0 : i64, scratch_operands = 1 : i64, tpu.core_type = #tpu.core_type<tc>, window_params = [{transform_indices = @transform_0, window_bounds = array<i64: 1, 1, 18, 288>}, {transform_indices = @transform_1, window_bounds = array<i64: 1, 1, 18, 288>}, {transform_indices = @transform_2, window_bounds = array<i64: 1, 1, 18, 288>}, {pipeline_mode = #tpu.pipeline_mode<synchronous>, transform_indices = @transform_3, window_bounds = array<i64: 3, 3, 288, 256>}, {pipeline_mode = #tpu.pipeline_mode<synchronous>, transform_indices = @transform_4, window_bounds = array<i64: 1, 256>}, {transform_indices = @transform_5, window_bounds = array<i64: 1, 1, 16, 128>}, {transform_indices = @transform_6, window_bounds = array<i64: 1, 1, 16, 128>}]} {
    %c0_i32 = arith.constant 0 : i32
    %0 = arith.cmpi eq, %arg1, %c0_i32 : i32
    %1 = arith.extui %0 : i1 to i32
    %c0_i32_0 = arith.constant 0 : i32
    %2 = arith.cmpi ne, %1, %c0_i32_0 : i32
    scf.if %2 {
      %cst_95 = arith.constant 0.000000e+00 : f32
      %84 = vector.broadcast %cst_95 : f32 to vector<16x128xf32>
      %c0_96 = arith.constant 0 : index
      %c0_97 = arith.constant 0 : index
      %85 = vector.load %arg9[%c0_96, %c0_97] : memref<16x128xf32, #tpu.memory_space<vmem>>, vector<16x128xf32>
      tpu.vector_store %arg9[%c0_96, %c0_97], %84 {strides = array<i32>} : memref<16x128xf32, #tpu.memory_space<vmem>>, vector<16x128xf32>,
    } else {
    }
    %cst = arith.constant 0.000000e+00 : f32
    %3 = vector.broadcast %cst : f32 to vector<16x256xf32>
    %c0 = arith.constant 0 : index
    %c0_1 = arith.constant 0 : index
    %c0_2 = arith.constant 0 : index
    %c0_3 = arith.constant 0 : index
    %4 = vector.load %arg2[%c0, %c0_1, %c0_2, %c0_3] : memref<1x1x18x288xbf16, #tpu.memory_space<vmem>>, vector<1x1x16x288xbf16>
    %5 = vector.shape_cast %4 : vector<1x1x16x288xbf16> to vector<16x288xbf16>
    %c0_4 = arith.constant 0 : index
    %c0_5 = arith.constant 0 : index
    %c0_6 = arith.constant 0 : index
    %c0_7 = arith.constant 0 : index
    %6 = vector.load %arg5[%c0_4, %c0_5, %c0_6, %c0_7] : memref<3x3x288x256xbf16, #tpu.memory_space<vmem>>, vector<1x1x288x256xbf16>
    %7 = vector.shape_cast %6 : vector<1x1x288x256xbf16> to vector<288x256xbf16>
    %cst_8 = arith.constant dense<0.000000e+00> : vector<16x256xf32>
    %8 = tpu.matmul %5, %7, %cst_8 {dimension_numbers = #tpu.dot_dimension_numbers<[1], [0], [0], [1], [0, 0, 1, 1], [], []>} : vector<16x288xbf16>, vector<288x256xbf16>, vector<16x256xf32> -> vector<16x256xf32>
    %9 = arith.addf %3, %8 : vector<16x256xf32>
    %c0_9 = arith.constant 0 : index
    %c0_10 = arith.constant 0 : index
    %c1 = arith.constant 1 : index
    %c0_11 = arith.constant 0 : index
    %10 = vector.load %arg2[%c0_9, %c0_10, %c1, %c0_11] : memref<1x1x18x288xbf16, #tpu.memory_space<vmem>>, vector<1x1x16x288xbf16>
    %11 = vector.shape_cast %10 : vector<1x1x16x288xbf16> to vector<16x288xbf16>
    %c0_12 = arith.constant 0 : index
    %c1_13 = arith.constant 1 : index
    %c0_14 = arith.constant 0 : index
    %c0_15 = arith.constant 0 : index
    %12 = vector.load %arg5[%c0_12, %c1_13, %c0_14, %c0_15] : memref<3x3x288x256xbf16, #tpu.memory_space<vmem>>, vector<1x1x288x256xbf16>
    %13 = vector.shape_cast %12 : vector<1x1x288x256xbf16> to vector<288x256xbf16>
    %cst_16 = arith.constant dense<0.000000e+00> : vector<16x256xf32>
    %14 = tpu.matmul %11, %13, %cst_16 {dimension_numbers = #tpu.dot_dimension_numbers<[1], [0], [0], [1], [0, 0, 1, 1], [], []>} : vector<16x288xbf16>, vector<288x256xbf16>, vector<16x256xf32> -> vector<16x256xf32>
    %15 = arith.addf %9, %14 : vector<16x256xf32>
    %c0_17 = arith.constant 0 : index
    %c0_18 = arith.constant 0 : index
    %c2 = arith.constant 2 : index
    %c0_19 = arith.constant 0 : index
    %16 = vector.load %arg2[%c0_17, %c0_18, %c2, %c0_19] : memref<1x1x18x288xbf16, #tpu.memory_space<vmem>>, vector<1x1x16x288xbf16>
    %17 = vector.shape_cast %16 : vector<1x1x16x288xbf16> to vector<16x288xbf16>
    %c0_20 = arith.constant 0 : index
    %c2_21 = arith.constant 2 : index
    %c0_22 = arith.constant 0 : index
    %c0_23 = arith.constant 0 : index
    %18 = vector.load %arg5[%c0_20, %c2_21, %c0_22, %c0_23] : memref<3x3x288x256xbf16, #tpu.memory_space<vmem>>, vector<1x1x288x256xbf16>
    %19 = vector.shape_cast %18 : vector<1x1x288x256xbf16> to vector<288x256xbf16>
    %cst_24 = arith.constant dense<0.000000e+00> : vector<16x256xf32>
    %20 = tpu.matmul %17, %19, %cst_24 {dimension_numbers = #tpu.dot_dimension_numbers<[1], [0], [0], [1], [0, 0, 1, 1], [], []>} : vector<16x288xbf16>, vector<288x256xbf16>, vector<16x256xf32> -> vector<16x256xf32>
    %21 = arith.addf %15, %20 : vector<16x256xf32>
    %c0_25 = arith.constant 0 : index
    %c0_26 = arith.constant 0 : index
    %c0_27 = arith.constant 0 : index
    %c0_28 = arith.constant 0 : index
    %22 = vector.load %arg3[%c0_25, %c0_26, %c0_27, %c0_28] : memref<1x1x18x288xbf16, #tpu.memory_space<vmem>>, vector<1x1x16x288xbf16>
    %23 = vector.shape_cast %22 : vector<1x1x16x288xbf16> to vector<16x288xbf16>
    %c1_29 = arith.constant 1 : index
    %c0_30 = arith.constant 0 : index
    %c0_31 = arith.constant 0 : index
    %c0_32 = arith.constant 0 : index
    %24 = vector.load %arg5[%c1_29, %c0_30, %c0_31, %c0_32] : memref<3x3x288x256xbf16, #tpu.memory_space<vmem>>, vector<1x1x288x256xbf16>
    %25 = vector.shape_cast %24 : vector<1x1x288x256xbf16> to vector<288x256xbf16>
    %cst_33 = arith.constant dense<0.000000e+00> : vector<16x256xf32>
    %26 = tpu.matmul %23, %25, %cst_33 {dimension_numbers = #tpu.dot_dimension_numbers<[1], [0], [0], [1], [0, 0, 1, 1], [], []>} : vector<16x288xbf16>, vector<288x256xbf16>, vector<16x256xf32> -> vector<16x256xf32>
    %27 = arith.addf %21, %26 : vector<16x256xf32>
    %c0_34 = arith.constant 0 : index
    %c0_35 = arith.constant 0 : index
    %c1_36 = arith.constant 1 : index
    %c0_37 = arith.constant 0 : index
    %28 = vector.load %arg3[%c0_34, %c0_35, %c1_36, %c0_37] : memref<1x1x18x288xbf16, #tpu.memory_space<vmem>>, vector<1x1x16x288xbf16>
    %29 = vector.shape_cast %28 : vector<1x1x16x288xbf16> to vector<16x288xbf16>
    %c1_38 = arith.constant 1 : index
    %c1_39 = arith.constant 1 : index
    %c0_40 = arith.constant 0 : index
    %c0_41 = arith.constant 0 : index
    %30 = vector.load %arg5[%c1_38, %c1_39, %c0_40, %c0_41] : memref<3x3x288x256xbf16, #tpu.memory_space<vmem>>, vector<1x1x288x256xbf16>
    %31 = vector.shape_cast %30 : vector<1x1x288x256xbf16> to vector<288x256xbf16>
    %cst_42 = arith.constant dense<0.000000e+00> : vector<16x256xf32>
    %32 = tpu.matmul %29, %31, %cst_42 {dimension_numbers = #tpu.dot_dimension_numbers<[1], [0], [0], [1], [0, 0, 1, 1], [], []>} : vector<16x288xbf16>, vector<288x256xbf16>, vector<16x256xf32> -> vector<16x256xf32>
    %33 = arith.addf %27, %32 : vector<16x256xf32>
    %c0_43 = arith.constant 0 : index
    %c0_44 = arith.constant 0 : index
    %c2_45 = arith.constant 2 : index
    %c0_46 = arith.constant 0 : index
    %34 = vector.load %arg3[%c0_43, %c0_44, %c2_45, %c0_46] : memref<1x1x18x288xbf16, #tpu.memory_space<vmem>>, vector<1x1x16x288xbf16>
    %35 = vector.shape_cast %34 : vector<1x1x16x288xbf16> to vector<16x288xbf16>
    %c1_47 = arith.constant 1 : index
    %c2_48 = arith.constant 2 : index
    %c0_49 = arith.constant 0 : index
    %c0_50 = arith.constant 0 : index
    %36 = vector.load %arg5[%c1_47, %c2_48, %c0_49, %c0_50] : memref<3x3x288x256xbf16, #tpu.memory_space<vmem>>, vector<1x1x288x256xbf16>
    %37 = vector.shape_cast %36 : vector<1x1x288x256xbf16> to vector<288x256xbf16>
    %cst_51 = arith.constant dense<0.000000e+00> : vector<16x256xf32>
    %38 = tpu.matmul %35, %37, %cst_51 {dimension_numbers = #tpu.dot_dimension_numbers<[1], [0], [0], [1], [0, 0, 1, 1], [], []>} : vector<16x288xbf16>, vector<288x256xbf16>, vector<16x256xf32> -> vector<16x256xf32>
    %39 = arith.addf %33, %38 : vector<16x256xf32>
    %c0_52 = arith.constant 0 : index
    %c0_53 = arith.constant 0 : index
    %c0_54 = arith.constant 0 : index
    %c0_55 = arith.constant 0 : index
    %40 = vector.load %arg4[%c0_52, %c0_53, %c0_54, %c0_55] : memref<1x1x18x288xbf16, #tpu.memory_space<vmem>>, vector<1x1x16x288xbf16>
    %41 = vector.shape_cast %40 : vector<1x1x16x288xbf16> to vector<16x288xbf16>
    %c2_56 = arith.constant 2 : index
    %c0_57 = arith.constant 0 : index
    %c0_58 = arith.constant 0 : index
    %c0_59 = arith.constant 0 : index
    %42 = vector.load %arg5[%c2_56, %c0_57, %c0_58, %c0_59] : memref<3x3x288x256xbf16, #tpu.memory_space<vmem>>, vector<1x1x288x256xbf16>
    %43 = vector.shape_cast %42 : vector<1x1x288x256xbf16> to vector<288x256xbf16>
    %cst_60 = arith.constant dense<0.000000e+00> : vector<16x256xf32>
    %44 = tpu.matmul %41, %43, %cst_60 {dimension_numbers = #tpu.dot_dimension_numbers<[1], [0], [0], [1], [0, 0, 1, 1], [], []>} : vector<16x288xbf16>, vector<288x256xbf16>, vector<16x256xf32> -> vector<16x256xf32>
    %45 = arith.addf %39, %44 : vector<16x256xf32>
    %c0_61 = arith.constant 0 : index
    %c0_62 = arith.constant 0 : index
    %c1_63 = arith.constant 1 : index
    %c0_64 = arith.constant 0 : index
    %46 = vector.load %arg4[%c0_61, %c0_62, %c1_63, %c0_64] : memref<1x1x18x288xbf16, #tpu.memory_space<vmem>>, vector<1x1x16x288xbf16>
    %47 = vector.shape_cast %46 : vector<1x1x16x288xbf16> to vector<16x288xbf16>
    %c2_65 = arith.constant 2 : index
    %c1_66 = arith.constant 1 : index
    %c0_67 = arith.constant 0 : index
    %c0_68 = arith.constant 0 : index
    %48 = vector.load %arg5[%c2_65, %c1_66, %c0_67, %c0_68] : memref<3x3x288x256xbf16, #tpu.memory_space<vmem>>, vector<1x1x288x256xbf16>
    %49 = vector.shape_cast %48 : vector<1x1x288x256xbf16> to vector<288x256xbf16>
    %cst_69 = arith.constant dense<0.000000e+00> : vector<16x256xf32>
    %50 = tpu.matmul %47, %49, %cst_69 {dimension_numbers = #tpu.dot_dimension_numbers<[1], [0], [0], [1], [0, 0, 1, 1], [], []>} : vector<16x288xbf16>, vector<288x256xbf16>, vector<16x256xf32> -> vector<16x256xf32>
    %51 = arith.addf %45, %50 : vector<16x256xf32>
    %c0_70 = arith.constant 0 : index
    %c0_71 = arith.constant 0 : index
    %c2_72 = arith.constant 2 : index
    %c0_73 = arith.constant 0 : index
    %52 = vector.load %arg4[%c0_70, %c0_71, %c2_72, %c0_73] : memref<1x1x18x288xbf16, #tpu.memory_space<vmem>>, vector<1x1x16x288xbf16>
    %53 = vector.shape_cast %52 : vector<1x1x16x288xbf16> to vector<16x288xbf16>
    %c2_74 = arith.constant 2 : index
    %c2_75 = arith.constant 2 : index
    %c0_76 = arith.constant 0 : index
    %c0_77 = arith.constant 0 : index
    %54 = vector.load %arg5[%c2_74, %c2_75, %c0_76, %c0_77] : memref<3x3x288x256xbf16, #tpu.memory_space<vmem>>, vector<1x1x288x256xbf16>
    %55 = vector.shape_cast %54 : vector<1x1x288x256xbf16> to vector<288x256xbf16>
    %cst_78 = arith.constant dense<0.000000e+00> : vector<16x256xf32>
    %56 = tpu.matmul %53, %55, %cst_78 {dimension_numbers = #tpu.dot_dimension_numbers<[1], [0], [0], [1], [0, 0, 1, 1], [], []>} : vector<16x288xbf16>, vector<288x256xbf16>, vector<16x256xf32> -> vector<16x256xf32>
    %57 = arith.addf %51, %56 : vector<16x256xf32>
    %c0_79 = arith.constant 0 : index
    %c0_80 = arith.constant 0 : index
    %58 = vector.load %arg6[%c0_79, %c0_80] : memref<1x256xf32, #tpu.memory_space<vmem>>, vector<1x256xf32>
    %59 = vector.broadcast %58 : vector<1x256xf32> to vector<16x256xf32>
    %60 = arith.addf %57, %59 : vector<16x256xf32>
    %61 = vector.extract_strided_slice %60 {offsets = [0, 0], sizes = [16, 128], strides = [1, 1]} : vector<16x256xf32> to vector<16x128xf32>
    %62 = math.tanh %61 : vector<16x128xf32>
    %63 = vector.extract_strided_slice %60 {offsets = [0, 128], sizes = [16, 128], strides = [1, 1]} : vector<16x256xf32> to vector<16x128xf32>
    %64 = arith.negf %63 : vector<16x128xf32>
    %65 = math.exp %64 : vector<16x128xf32>
    %cst_81 = arith.constant 1.000000e+00 : f32
    %66 = vector.broadcast %cst_81 : f32 to vector<16x128xf32>
    %67 = arith.addf %66, %65 : vector<16x128xf32>
    %68 = arith.divf %66, %67 : vector<16x128xf32>
    %c0_82 = arith.constant 0 : index
    %c0_83 = arith.constant 0 : index
    %69 = vector.load %arg9[%c0_82, %c0_83] : memref<16x128xf32, #tpu.memory_space<vmem>>, vector<16x128xf32>
    %70 = arith.mulf %68, %69 : vector<16x128xf32>
    %cst_84 = arith.constant 1.000000e+00 : f32
    %71 = vector.broadcast %cst_84 : f32 to vector<16x128xf32>
    %72 = arith.subf %71, %68 : vector<16x128xf32>
    %73 = arith.mulf %72, %62 : vector<16x128xf32>
    %74 = arith.addf %70, %73 : vector<16x128xf32>
    %c0_85 = arith.constant 0 : index
    %c0_86 = arith.constant 0 : index
    %75 = vector.load %arg9[%c0_85, %c0_86] : memref<16x128xf32, #tpu.memory_space<vmem>>, vector<16x128xf32>
    tpu.vector_store %arg9[%c0_85, %c0_86], %74 {strides = array<i32>} : memref<16x128xf32, #tpu.memory_space<vmem>>, vector<16x128xf32>,
    %c0_87 = arith.constant 0 : index
    %c0_88 = arith.constant 0 : index
    %c0_89 = arith.constant 0 : index
    %c0_90 = arith.constant 0 : index
    %76 = vector.load %arg7[%c0_87, %c0_88, %c0_89, %c0_90] : memref<1x1x16x128xbf16, #tpu.memory_space<vmem>>, vector<1x1x16x128xbf16>
    %77 = vector.shape_cast %76 : vector<1x1x16x128xbf16> to vector<16x128xbf16>
    %78 = arith.extf %77 : vector<16x128xbf16> to vector<16x128xf32>
    %79 = arith.addf %74, %78 : vector<16x128xf32>
    %80 = arith.truncf %79 : vector<16x128xf32> to vector<16x128xbf16>
    %c0_91 = arith.constant 0 : index
    %c0_92 = arith.constant 0 : index
    %c0_93 = arith.constant 0 : index
    %c0_94 = arith.constant 0 : index
    %81 = vector.load %arg8[%c0_91, %c0_92, %c0_93, %c0_94] : memref<1x1x16x128xbf16, #tpu.memory_space<vmem>>, vector<1x1x16x128xbf16>
    %82 = vector.shape_cast %81 : vector<1x1x16x128xbf16> to vector<16x128xbf16>
    %83 = vector.shape_cast %80 : vector<16x128xbf16> to vector<1x1x16x128xbf16>
    tpu.vector_store %arg8[%c0_91, %c0_92, %c0_93, %c0_94], %83 {strides = array<i32>} : memref<1x1x16x128xbf16, #tpu.memory_space<vmem>>, vector<1x1x16x128xbf16>,
    return
  }
  func.func @transform_0(%arg0: i32, %arg1: i32) -> (i32, i32, i32, i32) {
    %c0_i32 = arith.constant 0 : i32
    %0 = arith.addi %arg1, %c0_i32 : i32
    %c0_i32_0 = arith.constant 0 : i32
    %c0_i32_1 = arith.constant 0 : i32
    %c0_i32_2 = arith.constant 0 : i32
    return %arg0, %0, %c0_i32_0, %c0_i32_1 : i32, i32, i32, i32
  }
  func.func @transform_1(%arg0: i32, %arg1: i32) -> (i32, i32, i32, i32) {
    %c1_i32 = arith.constant 1 : i32
    %0 = arith.addi %arg1, %c1_i32 : i32
    %c0_i32 = arith.constant 0 : i32
    %c0_i32_0 = arith.constant 0 : i32
    %c0_i32_1 = arith.constant 0 : i32
    return %arg0, %0, %c0_i32, %c0_i32_0 : i32, i32, i32, i32
  }
  func.func @transform_2(%arg0: i32, %arg1: i32) -> (i32, i32, i32, i32) {
    %c2_i32 = arith.constant 2 : i32
    %0 = arith.addi %arg1, %c2_i32 : i32
    %c0_i32 = arith.constant 0 : i32
    %c0_i32_0 = arith.constant 0 : i32
    %c0_i32_1 = arith.constant 0 : i32
    return %arg0, %0, %c0_i32, %c0_i32_0 : i32, i32, i32, i32
  }
  func.func @transform_3(%arg0: i32, %arg1: i32) -> (i32, i32, i32, i32) {
    %c0_i32 = arith.constant 0 : i32
    %c0_i32_0 = arith.constant 0 : i32
    %c0_i32_1 = arith.constant 0 : i32
    %c0_i32_2 = arith.constant 0 : i32
    %c0_i32_3 = arith.constant 0 : i32
    return %c0_i32, %c0_i32_0, %c0_i32_1, %c0_i32_2 : i32, i32, i32, i32
  }
  func.func @transform_4(%arg0: i32, %arg1: i32) -> (i32, i32) {
    %c0_i32 = arith.constant 0 : i32
    %c0_i32_0 = arith.constant 0 : i32
    %c0_i32_1 = arith.constant 0 : i32
    return %c0_i32, %c0_i32_0 : i32, i32
  }
  func.func @transform_5(%arg0: i32, %arg1: i32) -> (i32, i32, i32, i32) {
    %c0_i32 = arith.constant 0 : i32
    %c0_i32_0 = arith.constant 0 : i32
    %c0_i32_1 = arith.constant 0 : i32
    return %arg0, %arg1, %c0_i32, %c0_i32_0 : i32, i32, i32, i32
  }
  func.func @transform_6(%arg0: i32, %arg1: i32) -> (i32, i32, i32, i32) {
    %c0_i32 = arith.constant 0 : i32
    %c0_i32_0 = arith.constant 0 : i32
    %c0_i32_1 = arith.constant 0 : i32
    return %arg0, %arg1, %c0_i32, %c0_i32_0 : i32, i32, i32, i32
  }
}

module attributes {stable_mosaic.version = 11 : i64} {
  func.func @_qrnn_layer_kernel(%arg0: i32, %arg1: i32, %arg2: memref<1x1x18x144xbf16, #tpu.memory_space<vmem>>, %arg3: memref<1x1x18x144xbf16, #tpu.memory_space<vmem>>, %arg4: memref<1x1x18x144xbf16, #tpu.memory_space<vmem>>, %arg5: memref<3x3x144x256xbf16, #tpu.memory_space<vmem>>, %arg6: memref<1x256xf32, #tpu.memory_space<vmem>>, %arg7: memref<1x1x16x128xbf16, #tpu.memory_space<vmem>>, %arg8: memref<16x128xf32, #tpu.memory_space<vmem>>) attributes {dimension_semantics = [#tpu.dimension_semantics<parallel>, #tpu.dimension_semantics<arbitrary>], iteration_bounds = array<i64: 2, 8>, scalar_prefetch = 0 : i64, scratch_operands = 1 : i64, tpu.core_type = #tpu.core_type<tc>, window_params = [{transform_indices = @transform_0, window_bounds = array<i64: 1, 1, 18, 144>}, {transform_indices = @transform_1, window_bounds = array<i64: 1, 1, 18, 144>}, {transform_indices = @transform_2, window_bounds = array<i64: 1, 1, 18, 144>}, {pipeline_mode = #tpu.pipeline_mode<synchronous>, transform_indices = @transform_3, window_bounds = array<i64: 3, 3, 144, 256>}, {pipeline_mode = #tpu.pipeline_mode<synchronous>, transform_indices = @transform_4, window_bounds = array<i64: 1, 256>}, {transform_indices = @transform_5, window_bounds = array<i64: 1, 1, 16, 128>}]} {
    %c0_i32 = arith.constant 0 : i32
    %0 = arith.cmpi eq, %arg1, %c0_i32 : i32
    %1 = arith.extui %0 : i1 to i32
    %c0_i32_0 = arith.constant 0 : i32
    %2 = arith.cmpi ne, %1, %c0_i32_0 : i32
    scf.if %2 {
      %cst_91 = arith.constant 0.000000e+00 : f32
      %80 = vector.broadcast %cst_91 : f32 to vector<16x128xf32>
      %c0_92 = arith.constant 0 : index
      %c0_93 = arith.constant 0 : index
      %81 = vector.load %arg8[%c0_92, %c0_93] : memref<16x128xf32, #tpu.memory_space<vmem>>, vector<16x128xf32>
      tpu.vector_store %arg8[%c0_92, %c0_93], %80 {strides = array<i32>} : memref<16x128xf32, #tpu.memory_space<vmem>>, vector<16x128xf32>,
    } else {
    }
    %cst = arith.constant 0.000000e+00 : f32
    %3 = vector.broadcast %cst : f32 to vector<16x256xf32>
    %c0 = arith.constant 0 : index
    %c0_1 = arith.constant 0 : index
    %c0_2 = arith.constant 0 : index
    %c0_3 = arith.constant 0 : index
    %4 = vector.load %arg2[%c0, %c0_1, %c0_2, %c0_3] : memref<1x1x18x144xbf16, #tpu.memory_space<vmem>>, vector<1x1x16x144xbf16>
    %5 = vector.shape_cast %4 : vector<1x1x16x144xbf16> to vector<16x144xbf16>
    %c0_4 = arith.constant 0 : index
    %c0_5 = arith.constant 0 : index
    %c0_6 = arith.constant 0 : index
    %c0_7 = arith.constant 0 : index
    %6 = vector.load %arg5[%c0_4, %c0_5, %c0_6, %c0_7] : memref<3x3x144x256xbf16, #tpu.memory_space<vmem>>, vector<1x1x144x256xbf16>
    %7 = vector.shape_cast %6 : vector<1x1x144x256xbf16> to vector<144x256xbf16>
    %cst_8 = arith.constant dense<0.000000e+00> : vector<16x256xf32>
    %8 = tpu.matmul %5, %7, %cst_8 {dimension_numbers = #tpu.dot_dimension_numbers<[1], [0], [0], [1], [0, 0, 1, 1], [], []>} : vector<16x144xbf16>, vector<144x256xbf16>, vector<16x256xf32> -> vector<16x256xf32>
    %9 = arith.addf %3, %8 : vector<16x256xf32>
    %c0_9 = arith.constant 0 : index
    %c0_10 = arith.constant 0 : index
    %c1 = arith.constant 1 : index
    %c0_11 = arith.constant 0 : index
    %10 = vector.load %arg2[%c0_9, %c0_10, %c1, %c0_11] : memref<1x1x18x144xbf16, #tpu.memory_space<vmem>>, vector<1x1x16x144xbf16>
    %11 = vector.shape_cast %10 : vector<1x1x16x144xbf16> to vector<16x144xbf16>
    %c0_12 = arith.constant 0 : index
    %c1_13 = arith.constant 1 : index
    %c0_14 = arith.constant 0 : index
    %c0_15 = arith.constant 0 : index
    %12 = vector.load %arg5[%c0_12, %c1_13, %c0_14, %c0_15] : memref<3x3x144x256xbf16, #tpu.memory_space<vmem>>, vector<1x1x144x256xbf16>
    %13 = vector.shape_cast %12 : vector<1x1x144x256xbf16> to vector<144x256xbf16>
    %cst_16 = arith.constant dense<0.000000e+00> : vector<16x256xf32>
    %14 = tpu.matmul %11, %13, %cst_16 {dimension_numbers = #tpu.dot_dimension_numbers<[1], [0], [0], [1], [0, 0, 1, 1], [], []>} : vector<16x144xbf16>, vector<144x256xbf16>, vector<16x256xf32> -> vector<16x256xf32>
    %15 = arith.addf %9, %14 : vector<16x256xf32>
    %c0_17 = arith.constant 0 : index
    %c0_18 = arith.constant 0 : index
    %c2 = arith.constant 2 : index
    %c0_19 = arith.constant 0 : index
    %16 = vector.load %arg2[%c0_17, %c0_18, %c2, %c0_19] : memref<1x1x18x144xbf16, #tpu.memory_space<vmem>>, vector<1x1x16x144xbf16>
    %17 = vector.shape_cast %16 : vector<1x1x16x144xbf16> to vector<16x144xbf16>
    %c0_20 = arith.constant 0 : index
    %c2_21 = arith.constant 2 : index
    %c0_22 = arith.constant 0 : index
    %c0_23 = arith.constant 0 : index
    %18 = vector.load %arg5[%c0_20, %c2_21, %c0_22, %c0_23] : memref<3x3x144x256xbf16, #tpu.memory_space<vmem>>, vector<1x1x144x256xbf16>
    %19 = vector.shape_cast %18 : vector<1x1x144x256xbf16> to vector<144x256xbf16>
    %cst_24 = arith.constant dense<0.000000e+00> : vector<16x256xf32>
    %20 = tpu.matmul %17, %19, %cst_24 {dimension_numbers = #tpu.dot_dimension_numbers<[1], [0], [0], [1], [0, 0, 1, 1], [], []>} : vector<16x144xbf16>, vector<144x256xbf16>, vector<16x256xf32> -> vector<16x256xf32>
    %21 = arith.addf %15, %20 : vector<16x256xf32>
    %c0_25 = arith.constant 0 : index
    %c0_26 = arith.constant 0 : index
    %c0_27 = arith.constant 0 : index
    %c0_28 = arith.constant 0 : index
    %22 = vector.load %arg3[%c0_25, %c0_26, %c0_27, %c0_28] : memref<1x1x18x144xbf16, #tpu.memory_space<vmem>>, vector<1x1x16x144xbf16>
    %23 = vector.shape_cast %22 : vector<1x1x16x144xbf16> to vector<16x144xbf16>
    %c1_29 = arith.constant 1 : index
    %c0_30 = arith.constant 0 : index
    %c0_31 = arith.constant 0 : index
    %c0_32 = arith.constant 0 : index
    %24 = vector.load %arg5[%c1_29, %c0_30, %c0_31, %c0_32] : memref<3x3x144x256xbf16, #tpu.memory_space<vmem>>, vector<1x1x144x256xbf16>
    %25 = vector.shape_cast %24 : vector<1x1x144x256xbf16> to vector<144x256xbf16>
    %cst_33 = arith.constant dense<0.000000e+00> : vector<16x256xf32>
    %26 = tpu.matmul %23, %25, %cst_33 {dimension_numbers = #tpu.dot_dimension_numbers<[1], [0], [0], [1], [0, 0, 1, 1], [], []>} : vector<16x144xbf16>, vector<144x256xbf16>, vector<16x256xf32> -> vector<16x256xf32>
    %27 = arith.addf %21, %26 : vector<16x256xf32>
    %c0_34 = arith.constant 0 : index
    %c0_35 = arith.constant 0 : index
    %c1_36 = arith.constant 1 : index
    %c0_37 = arith.constant 0 : index
    %28 = vector.load %arg3[%c0_34, %c0_35, %c1_36, %c0_37] : memref<1x1x18x144xbf16, #tpu.memory_space<vmem>>, vector<1x1x16x144xbf16>
    %29 = vector.shape_cast %28 : vector<1x1x16x144xbf16> to vector<16x144xbf16>
    %c1_38 = arith.constant 1 : index
    %c1_39 = arith.constant 1 : index
    %c0_40 = arith.constant 0 : index
    %c0_41 = arith.constant 0 : index
    %30 = vector.load %arg5[%c1_38, %c1_39, %c0_40, %c0_41] : memref<3x3x144x256xbf16, #tpu.memory_space<vmem>>, vector<1x1x144x256xbf16>
    %31 = vector.shape_cast %30 : vector<1x1x144x256xbf16> to vector<144x256xbf16>
    %cst_42 = arith.constant dense<0.000000e+00> : vector<16x256xf32>
    %32 = tpu.matmul %29, %31, %cst_42 {dimension_numbers = #tpu.dot_dimension_numbers<[1], [0], [0], [1], [0, 0, 1, 1], [], []>} : vector<16x144xbf16>, vector<144x256xbf16>, vector<16x256xf32> -> vector<16x256xf32>
    %33 = arith.addf %27, %32 : vector<16x256xf32>
    %c0_43 = arith.constant 0 : index
    %c0_44 = arith.constant 0 : index
    %c2_45 = arith.constant 2 : index
    %c0_46 = arith.constant 0 : index
    %34 = vector.load %arg3[%c0_43, %c0_44, %c2_45, %c0_46] : memref<1x1x18x144xbf16, #tpu.memory_space<vmem>>, vector<1x1x16x144xbf16>
    %35 = vector.shape_cast %34 : vector<1x1x16x144xbf16> to vector<16x144xbf16>
    %c1_47 = arith.constant 1 : index
    %c2_48 = arith.constant 2 : index
    %c0_49 = arith.constant 0 : index
    %c0_50 = arith.constant 0 : index
    %36 = vector.load %arg5[%c1_47, %c2_48, %c0_49, %c0_50] : memref<3x3x144x256xbf16, #tpu.memory_space<vmem>>, vector<1x1x144x256xbf16>
    %37 = vector.shape_cast %36 : vector<1x1x144x256xbf16> to vector<144x256xbf16>
    %cst_51 = arith.constant dense<0.000000e+00> : vector<16x256xf32>
    %38 = tpu.matmul %35, %37, %cst_51 {dimension_numbers = #tpu.dot_dimension_numbers<[1], [0], [0], [1], [0, 0, 1, 1], [], []>} : vector<16x144xbf16>, vector<144x256xbf16>, vector<16x256xf32> -> vector<16x256xf32>
    %39 = arith.addf %33, %38 : vector<16x256xf32>
    %c0_52 = arith.constant 0 : index
    %c0_53 = arith.constant 0 : index
    %c0_54 = arith.constant 0 : index
    %c0_55 = arith.constant 0 : index
    %40 = vector.load %arg4[%c0_52, %c0_53, %c0_54, %c0_55] : memref<1x1x18x144xbf16, #tpu.memory_space<vmem>>, vector<1x1x16x144xbf16>
    %41 = vector.shape_cast %40 : vector<1x1x16x144xbf16> to vector<16x144xbf16>
    %c2_56 = arith.constant 2 : index
    %c0_57 = arith.constant 0 : index
    %c0_58 = arith.constant 0 : index
    %c0_59 = arith.constant 0 : index
    %42 = vector.load %arg5[%c2_56, %c0_57, %c0_58, %c0_59] : memref<3x3x144x256xbf16, #tpu.memory_space<vmem>>, vector<1x1x144x256xbf16>
    %43 = vector.shape_cast %42 : vector<1x1x144x256xbf16> to vector<144x256xbf16>
    %cst_60 = arith.constant dense<0.000000e+00> : vector<16x256xf32>
    %44 = tpu.matmul %41, %43, %cst_60 {dimension_numbers = #tpu.dot_dimension_numbers<[1], [0], [0], [1], [0, 0, 1, 1], [], []>} : vector<16x144xbf16>, vector<144x256xbf16>, vector<16x256xf32> -> vector<16x256xf32>
    %45 = arith.addf %39, %44 : vector<16x256xf32>
    %c0_61 = arith.constant 0 : index
    %c0_62 = arith.constant 0 : index
    %c1_63 = arith.constant 1 : index
    %c0_64 = arith.constant 0 : index
    %46 = vector.load %arg4[%c0_61, %c0_62, %c1_63, %c0_64] : memref<1x1x18x144xbf16, #tpu.memory_space<vmem>>, vector<1x1x16x144xbf16>
    %47 = vector.shape_cast %46 : vector<1x1x16x144xbf16> to vector<16x144xbf16>
    %c2_65 = arith.constant 2 : index
    %c1_66 = arith.constant 1 : index
    %c0_67 = arith.constant 0 : index
    %c0_68 = arith.constant 0 : index
    %48 = vector.load %arg5[%c2_65, %c1_66, %c0_67, %c0_68] : memref<3x3x144x256xbf16, #tpu.memory_space<vmem>>, vector<1x1x144x256xbf16>
    %49 = vector.shape_cast %48 : vector<1x1x144x256xbf16> to vector<144x256xbf16>
    %cst_69 = arith.constant dense<0.000000e+00> : vector<16x256xf32>
    %50 = tpu.matmul %47, %49, %cst_69 {dimension_numbers = #tpu.dot_dimension_numbers<[1], [0], [0], [1], [0, 0, 1, 1], [], []>} : vector<16x144xbf16>, vector<144x256xbf16>, vector<16x256xf32> -> vector<16x256xf32>
    %51 = arith.addf %45, %50 : vector<16x256xf32>
    %c0_70 = arith.constant 0 : index
    %c0_71 = arith.constant 0 : index
    %c2_72 = arith.constant 2 : index
    %c0_73 = arith.constant 0 : index
    %52 = vector.load %arg4[%c0_70, %c0_71, %c2_72, %c0_73] : memref<1x1x18x144xbf16, #tpu.memory_space<vmem>>, vector<1x1x16x144xbf16>
    %53 = vector.shape_cast %52 : vector<1x1x16x144xbf16> to vector<16x144xbf16>
    %c2_74 = arith.constant 2 : index
    %c2_75 = arith.constant 2 : index
    %c0_76 = arith.constant 0 : index
    %c0_77 = arith.constant 0 : index
    %54 = vector.load %arg5[%c2_74, %c2_75, %c0_76, %c0_77] : memref<3x3x144x256xbf16, #tpu.memory_space<vmem>>, vector<1x1x144x256xbf16>
    %55 = vector.shape_cast %54 : vector<1x1x144x256xbf16> to vector<144x256xbf16>
    %cst_78 = arith.constant dense<0.000000e+00> : vector<16x256xf32>
    %56 = tpu.matmul %53, %55, %cst_78 {dimension_numbers = #tpu.dot_dimension_numbers<[1], [0], [0], [1], [0, 0, 1, 1], [], []>} : vector<16x144xbf16>, vector<144x256xbf16>, vector<16x256xf32> -> vector<16x256xf32>
    %57 = arith.addf %51, %56 : vector<16x256xf32>
    %c0_79 = arith.constant 0 : index
    %c0_80 = arith.constant 0 : index
    %58 = vector.load %arg6[%c0_79, %c0_80] : memref<1x256xf32, #tpu.memory_space<vmem>>, vector<1x256xf32>
    %59 = vector.broadcast %58 : vector<1x256xf32> to vector<16x256xf32>
    %60 = arith.addf %57, %59 : vector<16x256xf32>
    %61 = vector.extract_strided_slice %60 {offsets = [0, 0], sizes = [16, 128], strides = [1, 1]} : vector<16x256xf32> to vector<16x128xf32>
    %62 = math.tanh %61 : vector<16x128xf32>
    %63 = vector.extract_strided_slice %60 {offsets = [0, 128], sizes = [16, 128], strides = [1, 1]} : vector<16x256xf32> to vector<16x128xf32>
    %64 = arith.negf %63 : vector<16x128xf32>
    %65 = math.exp %64 : vector<16x128xf32>
    %cst_81 = arith.constant 1.000000e+00 : f32
    %66 = vector.broadcast %cst_81 : f32 to vector<16x128xf32>
    %67 = arith.addf %66, %65 : vector<16x128xf32>
    %68 = arith.divf %66, %67 : vector<16x128xf32>
    %c0_82 = arith.constant 0 : index
    %c0_83 = arith.constant 0 : index
    %69 = vector.load %arg8[%c0_82, %c0_83] : memref<16x128xf32, #tpu.memory_space<vmem>>, vector<16x128xf32>
    %70 = arith.mulf %68, %69 : vector<16x128xf32>
    %cst_84 = arith.constant 1.000000e+00 : f32
    %71 = vector.broadcast %cst_84 : f32 to vector<16x128xf32>
    %72 = arith.subf %71, %68 : vector<16x128xf32>
    %73 = arith.mulf %72, %62 : vector<16x128xf32>
    %74 = arith.addf %70, %73 : vector<16x128xf32>
    %c0_85 = arith.constant 0 : index
    %c0_86 = arith.constant 0 : index
    %75 = vector.load %arg8[%c0_85, %c0_86] : memref<16x128xf32, #tpu.memory_space<vmem>>, vector<16x128xf32>
    tpu.vector_store %arg8[%c0_85, %c0_86], %74 {strides = array<i32>} : memref<16x128xf32, #tpu.memory_space<vmem>>, vector<16x128xf32>,
    %76 = arith.truncf %74 : vector<16x128xf32> to vector<16x128xbf16>
    %c0_87 = arith.constant 0 : index
    %c0_88 = arith.constant 0 : index
    %c0_89 = arith.constant 0 : index
    %c0_90 = arith.constant 0 : index
    %77 = vector.load %arg7[%c0_87, %c0_88, %c0_89, %c0_90] : memref<1x1x16x128xbf16, #tpu.memory_space<vmem>>, vector<1x1x16x128xbf16>
    %78 = vector.shape_cast %77 : vector<1x1x16x128xbf16> to vector<16x128xbf16>
    %79 = vector.shape_cast %76 : vector<16x128xbf16> to vector<1x1x16x128xbf16>
    tpu.vector_store %arg7[%c0_87, %c0_88, %c0_89, %c0_90], %79 {strides = array<i32>} : memref<1x1x16x128xbf16, #tpu.memory_space<vmem>>, vector<1x1x16x128xbf16>,
    return
  }
  func.func @transform_0(%arg0: i32, %arg1: i32) -> (i32, i32, i32, i32) {
    %c7_i32 = arith.constant 7 : i32
    %0 = arith.subi %c7_i32, %arg1 : i32
    %c0_i32 = arith.constant 0 : i32
    %1 = arith.addi %0, %c0_i32 : i32
    %c0_i32_0 = arith.constant 0 : i32
    %c0_i32_1 = arith.constant 0 : i32
    %c0_i32_2 = arith.constant 0 : i32
    return %arg0, %1, %c0_i32_0, %c0_i32_1 : i32, i32, i32, i32
  }
  func.func @transform_1(%arg0: i32, %arg1: i32) -> (i32, i32, i32, i32) {
    %c7_i32 = arith.constant 7 : i32
    %0 = arith.subi %c7_i32, %arg1 : i32
    %c1_i32 = arith.constant 1 : i32
    %1 = arith.addi %0, %c1_i32 : i32
    %c0_i32 = arith.constant 0 : i32
    %c0_i32_0 = arith.constant 0 : i32
    %c0_i32_1 = arith.constant 0 : i32
    return %arg0, %1, %c0_i32, %c0_i32_0 : i32, i32, i32, i32
  }
  func.func @transform_2(%arg0: i32, %arg1: i32) -> (i32, i32, i32, i32) {
    %c7_i32 = arith.constant 7 : i32
    %0 = arith.subi %c7_i32, %arg1 : i32
    %c2_i32 = arith.constant 2 : i32
    %1 = arith.addi %0, %c2_i32 : i32
    %c0_i32 = arith.constant 0 : i32
    %c0_i32_0 = arith.constant 0 : i32
    %c0_i32_1 = arith.constant 0 : i32
    return %arg0, %1, %c0_i32, %c0_i32_0 : i32, i32, i32, i32
  }
  func.func @transform_3(%arg0: i32, %arg1: i32) -> (i32, i32, i32, i32) {
    %c0_i32 = arith.constant 0 : i32
    %c0_i32_0 = arith.constant 0 : i32
    %c0_i32_1 = arith.constant 0 : i32
    %c0_i32_2 = arith.constant 0 : i32
    %c0_i32_3 = arith.constant 0 : i32
    return %c0_i32, %c0_i32_0, %c0_i32_1, %c0_i32_2 : i32, i32, i32, i32
  }
  func.func @transform_4(%arg0: i32, %arg1: i32) -> (i32, i32) {
    %c0_i32 = arith.constant 0 : i32
    %c0_i32_0 = arith.constant 0 : i32
    %c0_i32_1 = arith.constant 0 : i32
    return %c0_i32, %c0_i32_0 : i32, i32
  }
  func.func @transform_5(%arg0: i32, %arg1: i32) -> (i32, i32, i32, i32) {
    %c7_i32 = arith.constant 7 : i32
    %0 = arith.subi %c7_i32, %arg1 : i32
    %c0_i32 = arith.constant 0 : i32
    %c0_i32_0 = arith.constant 0 : i32
    %c0_i32_1 = arith.constant 0 : i32
    return %arg0, %0, %c0_i32, %c0_i32_0 : i32, i32, i32, i32
  }
}

</mosaic_0001>

<llo_original>
// kernel: _lambda_.2
$region0: #{_lambda_.2}
  #allocation0 [shape = 'u32[]', space=smem, size = 0x4, offset = 0x4, fixed_abs, tag = 'smem constant byte address 0x4 - core index']
  #allocation1 [shape = 'u32[144,128]{1,0:T(1,128)}', space=vmem, size = 0x12000, scoped, tag = 'internal scratch']
  #allocation2 [shape = 'f32[16,128]{1,0:T(8,128)}', space=vmem, size = 0x2000, scoped, tag = 'scratch operand']
  %s0 = inlined_call_operand.vmem [shape: bf16[2,10,18,288], index: 0, kind: input, shape index: {}, may-alias: {0,1,2}]
  %s1 = inlined_call_operand.vmem [shape: bf16[2,10,18,288], index: 1, kind: input, shape index: {}, may-alias: {0,1,2}]
  %s2 = inlined_call_operand.vmem [shape: bf16[2,10,18,288], index: 2, kind: input, shape index: {}, may-alias: {0,1,2}]
  %s3 = inlined_call_operand.vmem [shape: bf16[3,3,288,256], index: 3, kind: input, shape index: {}]
  %s4 = inlined_call_operand.vmem [shape: f32[1,256], index: 4, kind: input, shape index: {}]
  %s5 = inlined_call_operand.vmem [shape: bf16[2,8,16,128], index: 5, kind: input, shape index: {}]
  %s6 = inlined_call_operand.vmem [shape: bf16[2,8,16,128], index: 6, kind: output, shape index: {}]
  %s7 = sld [smem:[#allocation0]]
  $region61: #{_lambda_.2} parent=0
    _
  %s9 = ssub.s32 1, %s7
  %s10 = scalar_select 0, %s9, %s7
  loop: start=0, step=1, limit=18
  $region2: #{_lambda_.2} parent=0 // loop_pre_header
    _
  $region3: #{_lambda_.2} parent=0 // loop_header
    %s12 = sphi 0, %s16
    %p13 = scmp.ge.s32.totalorder %s12, 18
    %s19 = sphi 0, %s31
    %s20 = sphi 0, %s27
    %s21 = sphi 0, %s19
    %s22 = sphi 0, %s20
    %s23 = sphi 0, %s21
    %s24 = sphi 0, %s22
    %s36 = sphi 0, %s38
    %s39 = sphi 0, %s36
    %s40 = sphi 0, %s39
    %s56 = sphi 0, %s40
    %s66 = sphi 0, %s68
    %s69 = sphi 0, %s66
    %s70 = sphi 0, %s69
    %s86 = sphi 0, %s70
    %s96 = sphi 0, %s98
    %s99 = sphi 0, %s96
    %s100 = sphi 0, %s99
    %s116 = sphi 0, %s100
    %s120 = sphi 0, %s120
    %s122 = sphi 0, %s120
    %s123 = sphi 0, %s122
    %s137 = sphi 0, %s123
    %s141 = sphi 0, %s141
    %s143 = sphi 0, %s141
    %s144 = sphi 0, %s143
    %s158 = sphi 0, %s144
    %s166 = sphi 0, %s168
    %s169 = sphi 0, %s166
    %s170 = sphi 0, %s169
    %s186 = sphi 0, %s170
    %s194 = sphi 0, %s196
    %s197 = sphi 0, %s194
    %s198 = sphi 0, %s197
    %s214 = sphi 0, %s198
  $region4: #{_lambda_.2} parent=0 // loop_header_branch
    %15 = sbr.rel (%p13) target = $region8
  $region5: #{_lambda_.2} parent=0 // loop_body
    %s17 = ssub.s32 %s12, 1
    %s18 = ssub.s32 %s12, 2
    %s25 = sadd.s32 1, %s20
    %p26 = scmp.ge.s32.totalorder %s25, 8
    %s27 = scalar_select %p26, 0, %s25
    %s28 = sadd.s32 1, %s19
    %s29 = scalar_select %p26, %s28, %s19
    %p30 = scmp.ge.s32.totalorder %s29, 2
    %s31 = scalar_select %p30, 0, %s29
    %s32 = ssub.s32 %s19, %s31
    %s33 = ssub.s32 %s20, %s27
    %s34 = sor.u32 %s32, %s33
    %p35 = scmp.eq.s32.totalorder %s34, 0
    %s37 = sadd.s32 %s36, 1
    %s38 = scalar_select %p35, %s36, %s37
    %p41 = pneg %p35
    %p42 = scmp.eq.s32.totalorder %s12, 15
    %p43 = por %p41, %p42
    %p44 = scmp.ne.s32.totalorder %s36, %s39
    %p45 = scmp.eq.s32.totalorder %s12, 0
    %p46 = por %p44, %p45
    %p47 = scmp.ne.s32.totalorder %s36, %s39
    %p48 = scmp.eq.s32.totalorder %s17, 15
    %p49 = por %p47, %p48
    %p50 = scmp.ne.s32.totalorder %s39, %s40
    %p51 = scmp.eq.s32.totalorder %s17, 0
    %p52 = por %p50, %p51
    %p53 = scmp.ne.s32.totalorder %s39, %s40
    %p54 = scmp.eq.s32.totalorder %s18, 15
    %p55 = por %p53, %p54
    %p57 = scmp.ne.s32.totalorder %s40, %s56
    %p58 = scmp.eq.s32.totalorder %s18, 0
    %p59 = por %p57, %p58
    %s60 = sadd.s32 %s20, 1
    %s61 = sadd.s32 %s27, 1
    %s62 = ssub.s32 %s19, %s31
    %s63 = ssub.s32 %s60, %s61
    %s64 = sor.u32 %s62, %s63
    %p65 = scmp.eq.s32.totalorder %s64, 0
    %s67 = sadd.s32 %s66, 1
    %s68 = scalar_select %p65, %s66, %s67
    %p71 = pneg %p65
    %p72 = scmp.eq.s32.totalorder %s12, 15
    %p73 = por %p71, %p72
    %p74 = scmp.ne.s32.totalorder %s66, %s69
    %p75 = scmp.eq.s32.totalorder %s12, 0
    %p76 = por %p74, %p75
    %p77 = scmp.ne.s32.totalorder %s66, %s69
    %p78 = scmp.eq.s32.totalorder %s17, 15
    %p79 = por %p77, %p78
    %p80 = scmp.ne.s32.totalorder %s69, %s70
    %p81 = scmp.eq.s32.totalorder %s17, 0
    %p82 = por %p80, %p81
    %p83 = scmp.ne.s32.totalorder %s69, %s70
    %p84 = scmp.eq.s32.totalorder %s18, 15
    %p85 = por %p83, %p84
    %p87 = scmp.ne.s32.totalorder %s70, %s86
    %p88 = scmp.eq.s32.totalorder %s18, 0
    %p89 = por %p87, %p88
    %s90 = sadd.s32 %s20, 2
    %s91 = sadd.s32 %s27, 2
    %s92 = ssub.s32 %s19, %s31
    %s93 = ssub.s32 %s90, %s91
    %s94 = sor.u32 %s92, %s93
    %p95 = scmp.eq.s32.totalorder %s94, 0
    %s97 = sadd.s32 %s96, 1
    %s98 = scalar_select %p95, %s96, %s97
    %p101 = pneg %p95
    %p102 = scmp.eq.s32.totalorder %s12, 15
    %p103 = por %p101, %p102
    %p104 = scmp.ne.s32.totalorder %s96, %s99
    %p105 = scmp.eq.s32.totalorder %s12, 0
    %p106 = por %p104, %p105
    %p107 = scmp.ne.s32.totalorder %s96, %s99
    %p108 = scmp.eq.s32.totalorder %s17, 15
    %p109 = por %p107, %p108
    %p110 = scmp.ne.s32.totalorder %s99, %s100
    %p111 = scmp.eq.s32.totalorder %s17, 0
    %p112 = por %p110, %p111
    %p113 = scmp.ne.s32.totalorder %s99, %s100
    %p114 = scmp.eq.s32.totalorder %s18, 15
    %p115 = por %p113, %p114
    %p117 = scmp.ne.s32.totalorder %s100, %s116
    %p118 = scmp.eq.s32.totalorder %s18, 0
    %p119 = por %p117, %p118
    %s121 = sadd.s32 %s120, 1
    %p124 = scmp.eq.s32.totalorder %s12, 15
    %p125 = scmp.ne.s32.totalorder %s120, %s122
    %p126 = scmp.eq.s32.totalorder %s12, 0
    %p127 = por %p125, %p126
    %p128 = scmp.ne.s32.totalorder %s120, %s122
    %p129 = scmp.eq.s32.totalorder %s17, 15
    %p130 = por %p128, %p129
    %p131 = scmp.ne.s32.totalorder %s122, %s123
    %p132 = scmp.eq.s32.totalorder %s17, 0
    %p133 = por %p131, %p132
    %p134 = scmp.ne.s32.totalorder %s122, %s123
    %p135 = scmp.eq.s32.totalorder %s18, 15
    %p136 = por %p134, %p135
    %p138 = scmp.ne.s32.totalorder %s123, %s137
    %p139 = scmp.eq.s32.totalorder %s18, 0
    %p140 = por %p138, %p139
    %s142 = sadd.s32 %s141, 1
    %p145 = scmp.eq.s32.totalorder %s12, 15
    %p146 = scmp.ne.s32.totalorder %s141, %s143
    %p147 = scmp.eq.s32.totalorder %s12, 0
    %p148 = por %p146, %p147
    %p149 = scmp.ne.s32.totalorder %s141, %s143
    %p150 = scmp.eq.s32.totalorder %s17, 15
    %p151 = por %p149, %p150
    %p152 = scmp.ne.s32.totalorder %s143, %s144
    %p153 = scmp.eq.s32.totalorder %s17, 0
    %p154 = por %p152, %p153
    %p155 = scmp.ne.s32.totalorder %s143, %s144
    %p156 = scmp.eq.s32.totalorder %s18, 15
    %p157 = por %p155, %p156
    %p159 = scmp.ne.s32.totalorder %s144, %s158
    %p160 = scmp.eq.s32.totalorder %s18, 0
    %p161 = por %p159, %p160
    %s162 = ssub.s32 %s19, %s31
    %s163 = ssub.s32 %s20, %s27
    %s164 = sor.u32 %s162, %s163
    %p165 = scmp.eq.s32.totalorder %s164, 0
    %s167 = sadd.s32 %s166, 1
    %s168 = scalar_select %p165, %s166, %s167
    %p171 = pneg %p165
    %p172 = scmp.eq.s32.totalorder %s12, 15
    %p173 = por %p171, %p172
    %p174 = scmp.ne.s32.totalorder %s166, %s169
    %p175 = scmp.eq.s32.totalorder %s12, 0
    %p176 = por %p174, %p175
    %p177 = scmp.ne.s32.totalorder %s166, %s169
    %p178 = scmp.eq.s32.totalorder %s17, 15
    %p179 = por %p177, %p178
    %p180 = scmp.ne.s32.totalorder %s169, %s170
    %p181 = scmp.eq.s32.totalorder %s17, 0
    %p182 = por %p180, %p181
    %p183 = scmp.ne.s32.totalorder %s169, %s170
    %p184 = scmp.eq.s32.totalorder %s18, 15
    %p185 = por %p183, %p184
    %p187 = scmp.ne.s32.totalorder %s170, %s186
    %p188 = scmp.eq.s32.totalorder %s18, 0
    %p189 = por %p187, %p188
    %s190 = ssub.s32 %s19, %s31
    %s191 = ssub.s32 %s20, %s27
    %s192 = sor.u32 %s190, %s191
    %p193 = scmp.eq.s32.totalorder %s192, 0
    %s195 = sadd.s32 %s194, 1
    %s196 = scalar_select %p193, %s194, %s195
    %p199 = pneg %p193
    %p200 = scmp.eq.s32.totalorder %s12, 15
    %p201 = por %p199, %p200
    %p202 = scmp.ne.s32.totalorder %s194, %s197
    %p203 = scmp.eq.s32.totalorder %s12, 0
    %p204 = por %p202, %p203
    %p205 = scmp.ne.s32.totalorder %s194, %s197
    %p206 = scmp.eq.s32.totalorder %s17, 15
    %p207 = por %p205, %p206
    %p208 = scmp.ne.s32.totalorder %s197, %s198
    %p209 = scmp.eq.s32.totalorder %s17, 0
    %p210 = por %p208, %p209
    %p211 = scmp.ne.s32.totalorder %s197, %s198
    %p212 = scmp.eq.s32.totalorder %s18, 15
    %p213 = por %p211, %p212
    %p215 = scmp.ne.s32.totalorder %s198, %s214
    %p216 = scmp.eq.s32.totalorder %s18, 0
    %p217 = por %p215, %p216
    %p218 = scmp.le.s32.totalorder 1, %s12
    %p219 = scmp.lt.s32.totalorder %s12, 17
    %p220 = pnand %p218, %p219
    %p221 = pneg %p220
    // Predicated region
    $region9: #{_lambda_.2} parent=5 // pred_check
      _
    $region10: #{_lambda_.2} parent=5 // pred_check_branch
      %223 = sbr.rel (%p220) target = $region12
    $region11: #{_lambda_.2} parent=5 // pred_region
      %s224 = ssub.s32 %s12, 1
      // Predicated region
      $region13: #{_lambda_.2} parent=11 // pred_check
        %p225 = pneg %p133
      $region14: #{_lambda_.2} parent=11 // pred_check_branch
        %227 = sbr.rel (%p225) target = $region16
      $region15: #{_lambda_.2} parent=11 // pred_region
        _
      $region16: #{_lambda_.2} parent=11 // pred_fallthru
        _
      // Predicated region
      $region17: #{_lambda_.2} parent=11 // pred_check
        %p228 = pneg %p154
      $region18: #{_lambda_.2} parent=11 // pred_check_branch
        %230 = sbr.rel (%p228) target = $region20
      $region19: #{_lambda_.2} parent=11 // pred_region
        _
      $region20: #{_lambda_.2} parent=11 // pred_fallthru
        _
    $region12: #{_lambda_.2} parent=5 // pred_fallthru
      _
    %p231 = scmp.lt.s32.totalorder %s12, 16
    // Predicated region
    $region21: #{_lambda_.2} parent=5 // pred_check
      %p232 = pneg %p231
    $region22: #{_lambda_.2} parent=5 // pred_check_branch
      %234 = sbr.rel (%p232) target = $region24
    $region23: #{_lambda_.2} parent=5 // pred_region
      // Predicated region
      $region25: #{_lambda_.2} parent=23 // pred_check
        %p235 = pneg %p46
      $region26: #{_lambda_.2} parent=23 // pred_check_branch
        %237 = sbr.rel (%p235) target = $region28
      $region27: #{_lambda_.2} parent=23 // pred_region
        %p238 = scmp.lt.s32.totalorder %s19, 1
        %s239 = scalar_select %p238, %s19, 1
        %p240 = scmp.lt.s32.totalorder %s20, 9
        %s241 = scalar_select %p240, %s20, 9
        %s242 = smul.addr %s241, 9
        %s243 = smul.addr %s239, 90
        %s244 = sadd.s32 %s242, %s243
        %s245 = smul.addr %s244, 4
        %s246 = scalar_lea.vmem %s0, %s245
      $region28: #{_lambda_.2} parent=23 // pred_fallthru
        _
      // Predicated region
      $region29: #{_lambda_.2} parent=23 // pred_check
        %p247 = pneg %p76
      $region30: #{_lambda_.2} parent=23 // pred_check_branch
        %249 = sbr.rel (%p247) target = $region32
      $region31: #{_lambda_.2} parent=23 // pred_region
        %s250 = sadd.s32 %s20, 1
        %p251 = scmp.lt.s32.totalorder %s19, 1
        %s252 = scalar_select %p251, %s19, 1
        %p253 = scmp.lt.s32.totalorder %s250, 9
        %s254 = scalar_select %p253, %s250, 9
        %s255 = smul.addr %s254, 9
        %s256 = smul.addr %s252, 90
        %s257 = sadd.s32 %s255, %s256
        %s258 = smul.addr %s257, 4
        %s259 = scalar_lea.vmem %s1, %s258
        %s260 = sadd.s32 %s20, 1
      $region32: #{_lambda_.2} parent=23 // pred_fallthru
        _
      // Predicated region
      $region33: #{_lambda_.2} parent=23 // pred_check
        %p261 = pneg %p106
      $region34: #{_lambda_.2} parent=23 // pred_check_branch
        %263 = sbr.rel (%p261) target = $region36
      $region35: #{_lambda_.2} parent=23 // pred_region
        %s264 = sadd.s32 %s20, 2
        %p265 = scmp.lt.s32.totalorder %s19, 1
        %s266 = scalar_select %p265, %s19, 1
        %p267 = scmp.lt.s32.totalorder %s264, 9
        %s268 = scalar_select %p267, %s264, 9
        %s269 = smul.addr %s268, 9
        %s270 = smul.addr %s266, 90
        %s271 = sadd.s32 %s269, %s270
        %s272 = smul.addr %s271, 4
        %s273 = scalar_lea.vmem %s2, %s272
        %s274 = sadd.s32 %s20, 2
      $region36: #{_lambda_.2} parent=23 // pred_fallthru
        _
      // Predicated region
      $region37: #{_lambda_.2} parent=23 // pred_check
        %p275 = pneg %p176
      $region38: #{_lambda_.2} parent=23 // pred_check_branch
        %277 = sbr.rel (%p275) target = $region40
      $region39: #{_lambda_.2} parent=23 // pred_region
        %p278 = scmp.lt.s32.totalorder %s19, 1
        %s279 = scalar_select %p278, %s19, 1
        %p280 = scmp.lt.s32.totalorder %s20, 7
        %s281 = scalar_select %p280, %s20, 7
        %s282 = smul.addr %s281, 2
        %s283 = smul.addr %s279, 16
        %s284 = sadd.s32 %s282, %s283
        %s285 = smul.addr %s284, 4
        %s286 = scalar_lea.vmem %s5, %s285
      $region40: #{_lambda_.2} parent=23 // pred_fallthru
        _
    $region24: #{_lambda_.2} parent=5 // pred_fallthru
      _
    %p287 = scmp.le.s32.totalorder 1, %s12
    %p288 = scmp.lt.s32.totalorder %s12, 17
    %p289 = pnand %p287, %p288
    %p290 = pneg %p289
    // Predicated region
    $region41: #{_lambda_.2} parent=5 // pred_check
      _
    $region42: #{_lambda_.2} parent=5 // pred_check_branch
      %292 = sbr.rel (%p289) target = $region44
    $region43: #{_lambda_.2} parent=5 // pred_region
      %s293 = ssub.s32 %s12, 1
      %p294 = scmp.lt.s32.totalorder %s21, 1
      %s295 = scalar_select %p294, %s21, 1
      %p296 = scmp.lt.s32.totalorder %s22, 9
      %s297 = scalar_select %p296, %s22, 9
      %s298 = smul.addr %s297, 9
      %s299 = smul.addr %s295, 90
      %s300 = sadd.s32 %s298, %s299
      %s301 = smul.addr %s300, 4
      %s302 = scalar_lea.vmem %s0, %s301
      %p303 = pneg %p52
      %p304 = pneg %p49
      %s305 = sadd.s32 %s22, 1
      %p306 = scmp.lt.s32.totalorder %s21, 1
      %s307 = scalar_select %p306, %s21, 1
      %p308 = scmp.lt.s32.totalorder %s305, 9
      %s309 = scalar_select %p308, %s305, 9
      %s310 = smul.addr %s309, 9
      %s311 = smul.addr %s307, 90
      %s312 = sadd.s32 %s310, %s311
      %s313 = smul.addr %s312, 4
      %s314 = scalar_lea.vmem %s1, %s313
      %p315 = pneg %p82
      %p316 = pneg %p79
      %s317 = sadd.s32 %s22, 2
      %p318 = scmp.lt.s32.totalorder %s21, 1
      %s319 = scalar_select %p318, %s21, 1
      %p320 = scmp.lt.s32.totalorder %s317, 9
      %s321 = scalar_select %p320, %s317, 9
      %s322 = smul.addr %s321, 9
      %s323 = smul.addr %s319, 90
      %s324 = sadd.s32 %s322, %s323
      %s325 = smul.addr %s324, 4
      %s326 = scalar_lea.vmem %s2, %s325
      %p327 = pneg %p112
      %p328 = pneg %p109
      %p329 = pneg %p133
      %p330 = pneg %p130
      %p331 = pneg %p154
      %p332 = pneg %p151
      %p333 = scmp.lt.s32.totalorder %s21, 1
      %s334 = scalar_select %p333, %s21, 1
      %p335 = scmp.lt.s32.totalorder %s22, 7
      %s336 = scalar_select %p335, %s22, 7
      %s337 = smul.addr %s336, 2
      %s338 = smul.addr %s334, 16
      %s339 = sadd.s32 %s337, %s338
      %s340 = smul.addr %s339, 4
      %s341 = scalar_lea.vmem %s5, %s340
      %p342 = pneg %p182
      %p343 = pneg %p179
      %p344 = pneg %p210
      %p345 = pneg %p207
      %p346 = scmp.lt.s32.totalorder %s21, 1
      %s347 = scalar_select %p346, %s21, 1
      %p348 = scmp.lt.s32.totalorder %s22, 7
      %s349 = scalar_select %p348, %s22, 7
      %s350 = smul.addr %s349, 2
      %s351 = smul.addr %s347, 16
      %s352 = sadd.s32 %s350, %s351
      %s353 = smul.addr %s352, 4
      %s354 = scalar_lea.vmem %s6, %s353
      %p355 = scmp.lt.s32.totalorder %s21, 1
      %s356 = scalar_select %p355, %s21, 1
      %p357 = scmp.lt.s32.totalorder %s22, 9
      %s358 = scalar_select %p357, %s22, 9
      %s359 = smul.addr %s358, 9
      %s360 = smul.addr %s356, 90
      %s361 = sadd.s32 %s359, %s360
      %s362 = smul.addr %s361, 4
      %s363 = scalar_lea.vmem %s0, %s362
      %s364 = sadd.s32 %s22, 1
      %p365 = scmp.lt.s32.totalorder %s21, 1
      %s366 = scalar_select %p365, %s21, 1
      %p367 = scmp.lt.s32.totalorder %s364, 9
      %s368 = scalar_select %p367, %s364, 9
      %s369 = smul.addr %s368, 9
      %s370 = smul.addr %s366, 90
      %s371 = sadd.s32 %s369, %s370
      %s372 = smul.addr %s371, 4
      %s373 = scalar_lea.vmem %s1, %s372
      %s374 = sadd.s32 %s22, 1
      %s375 = sadd.s32 %s22, 2
      %p376 = scmp.lt.s32.totalorder %s21, 1
      %s377 = scalar_select %p376, %s21, 1
      %p378 = scmp.lt.s32.totalorder %s375, 9
      %s379 = scalar_select %p378, %s375, 9
      %s380 = smul.addr %s379, 9
      %s381 = smul.addr %s377, 90
      %s382 = sadd.s32 %s380, %s381
      %s383 = smul.addr %s382, 4
      %s384 = scalar_lea.vmem %s2, %s383
      %s385 = sadd.s32 %s22, 2
      %p386 = scmp.lt.s32.totalorder %s21, 1
      %s387 = scalar_select %p386, %s21, 1
      %p388 = scmp.lt.s32.totalorder %s22, 7
      %s389 = scalar_select %p388, %s22, 7
      %s390 = smul.addr %s389, 2
      %s391 = smul.addr %s387, 16
      %s392 = sadd.s32 %s390, %s391
      %s393 = smul.addr %s392, 4
      %s394 = scalar_lea.vmem %s5, %s393
      %p395 = scmp.lt.s32.totalorder %s21, 1
      %s396 = scalar_select %p395, %s21, 1
      %p397 = scmp.lt.s32.totalorder %s22, 7
      %s398 = scalar_select %p397, %s22, 7
      %s399 = smul.addr %s398, 2
      %s400 = smul.addr %s396, 16
      %s401 = sadd.s32 %s399, %s400
      %s402 = smul.addr %s401, 4
      %s403 = scalar_lea.vmem %s6, %s402
      %p405 = scmp.eq.s32.totalorder %s22, 0
      // Predicated region
      $region45: #{_lambda_.2} parent=43 // pred_check
        %p406 = pneg %p405
      $region46: #{_lambda_.2} parent=43 // pred_check_branch
        %408 = sbr.rel (%p406) target = $region48
      $region47: #{_lambda_.2} parent=43 // pred_region
        %409 = vst [vmem:[#allocation2] sm:$0xff] 0.0
        %410 = vst [vmem:[#allocation2 + $0x8] sm:$0xff] 0.0
      $region48: #{_lambda_.2} parent=43 // pred_fallthru
        _
      %v411 = vld [vmem:[%s363] sm:$0xff]
      %v412 = vld [vmem:[%s363 + $0x8] sm:$0xf]
      %v413 = vld [vmem:[%s363 + $0xc] sm:$0xff]
      %v414 = vld [vmem:[%s363 + $0x14] sm:$0xf]
      %v415 = vld [vmem:[%s3] sm:$0xff]
      %v416 = vld [vmem:[%s3 + $0x8] sm:$0xff]
      %v417 = vld [vmem:[%s3 + $0x10] sm:$0xff]
      %v418 = vld [vmem:[%s3 + $0x18] sm:$0xff]
      %v419 = vld [vmem:[%s3 + $0x20] sm:$0xff]
      %v420 = vld [vmem:[%s3 + $0x28] sm:$0xff]
      %v421 = vld [vmem:[%s3 + $0x30] sm:$0xff]
      %v422 = vld [vmem:[%s3 + $0x38] sm:$0xff]
      %v423 = vld [vmem:[%s3 + $0x40] sm:$0xff]
      %v424 = vld [vmem:[%s3 + $0x48] sm:$0xff]
      %v425 = vld [vmem:[%s3 + $0x50] sm:$0xff]
      %v426 = vld [vmem:[%s3 + $0x58] sm:$0xff]
      %v427 = vld [vmem:[%s3 + $0x60] sm:$0xff]
      %v428 = vld [vmem:[%s3 + $0x68] sm:$0xff]
      %v429 = vld [vmem:[%s3 + $0x70] sm:$0xff]
      %v430 = vld [vmem:[%s3 + $0x78] sm:$0xff]
      %v431 = vld [vmem:[%s3 + $0x80] sm:$0xff]
      %v432 = vld [vmem:[%s3 + $0x88] sm:$0xff]
      %v433 = vld [vmem:[%s3 + $0x90] sm:$0xff]
      %v434 = vld [vmem:[%s3 + $0x98] sm:$0xff]
      %v435 = vld [vmem:[%s3 + $0xa0] sm:$0xff]
      %v436 = vld [vmem:[%s3 + $0xa8] sm:$0xff]
      %v437 = vld [vmem:[%s3 + $0xb0] sm:$0xff]
      %v438 = vld [vmem:[%s3 + $0xb8] sm:$0xff]
      %v439 = vld [vmem:[%s3 + $0xc0] sm:$0xff]
      %v440 = vld [vmem:[%s3 + $0xc8] sm:$0xff]
      %v441 = vld [vmem:[%s3 + $0xd0] sm:$0xff]
      %v442 = vld [vmem:[%s3 + $0xd8] sm:$0xff]
      %v443 = vld [vmem:[%s3 + $0xe0] sm:$0xff]
      %v444 = vld [vmem:[%s3 + $0xe8] sm:$0xff]
      %v445 = vld [vmem:[%s3 + $0xf0] sm:$0xff]
      %v446 = vld [vmem:[%s3 + $0xf8] sm:$0xff]
      %v447 = vld [vmem:[%s3 + $0x100] sm:$0xff]
      %v448 = vld [vmem:[%s3 + $0x108] sm:$0xff]
      %v449 = vld [vmem:[%s3 + $0x110] sm:$0xff]
      %v450 = vld [vmem:[%s3 + $0x118] sm:$0xff]
      %v451 = vld [vmem:[%s363 + $0x18] sm:$0x11]
      %v452 = vld [vmem:[%s363 + $0x20] sm:$0x1]
      %s453 = scalar_lea.vmem %s3, 288
      %v454 = vld [vmem:[%s453] sm:$0xff]
      %v455 = vld [vmem:[%s453 + $0x8] sm:$0xff]
      %v456 = vld [vmem:[%s453 + $0x10] sm:$0xff]
      %v457 = vld [vmem:[%s453 + $0x18] sm:$0xff]
      %v458 = vld [vmem:[%s453 + $0x20] sm:$0xff]
      %v459 = vld [vmem:[%s453 + $0x28] sm:$0xff]
      %v460 = vld [vmem:[%s453 + $0x30] sm:$0xff]
      %v461 = vld [vmem:[%s453 + $0x38] sm:$0xff]
      %v462 = vld [vmem:[%s453 + $0x40] sm:$0xff]
      %v463 = vld [vmem:[%s453 + $0x48] sm:$0xff]
      %v464 = vld [vmem:[%s453 + $0x50] sm:$0xff]
      %v465 = vld [vmem:[%s453 + $0x58] sm:$0xff]
      %v466 = vld [vmem:[%s453 + $0x60] sm:$0xff]
      %v467 = vld [vmem:[%s453 + $0x68] sm:$0xff]
      %v468 = vld [vmem:[%s453 + $0x70] sm:$0xff]
      %v469 = vld [vmem:[%s453 + $0x78] sm:$0xff]
      %v470 = vld [vmem:[%s453 + $0x80] sm:$0xff]
      %v471 = vld [vmem:[%s453 + $0x88] sm:$0xff]
      %v472 = vld [vmem:[%s453 + $0x90] sm:$0xff]
      %v473 = vld [vmem:[%s453 + $0x98] sm:$0xff]
      %v474 = vld [vmem:[%s453 + $0xa0] sm:$0xff]
      %v475 = vld [vmem:[%s453 + $0xa8] sm:$0xff]
      %v476 = vld [vmem:[%s453 + $0xb0] sm:$0xff]
      %v477 = vld [vmem:[%s453 + $0xb8] sm:$0xff]
      %v478 = vld [vmem:[%s453 + $0xc0] sm:$0xff]
      %v479 = vld [vmem:[%s453 + $0xc8] sm:$0xff]
      %v480 = vld [vmem:[%s453 + $0xd0] sm:$0xff]
      %v481 = vld [vmem:[%s453 + $0xd8] sm:$0xff]
      %v482 = vld [vmem:[%s453 + $0xe0] sm:$0xff]
      %v483 = vld [vmem:[%s453 + $0xe8] sm:$0xff]
      %v484 = vld [vmem:[%s453 + $0xf0] sm:$0xff]
      %v485 = vld [vmem:[%s453 + $0xf8] sm:$0xff]
      %v486 = vld [vmem:[%s453 + $0x100] sm:$0xff]
      %v487 = vld [vmem:[%s453 + $0x108] sm:$0xff]
      %v488 = vld [vmem:[%s453 + $0x110] sm:$0xff]
      %v489 = vld [vmem:[%s453 + $0x118] sm:$0xff]
      %v496 = vunpack.c.l.b16 %v411
      %v497 = vunpack.c.h.b16 %v411
      %v498 = vunpack.c.l.b16 %v412
      %v499 = vunpack.c.l.b16 %v413
      %v500 = vunpack.c.h.b16 %v413
      %v501 = vunpack.c.l.b16 %v414
      %v502 = vunpack.c.l.b16 %v451
      %v503 = vunpack.c.h.b16 %v451
      %v504 = vunpack.c.l.b16 %v452
      %v505 = vpack.c.b16 %v499, %v496
      %v506 = vpack.c.b16 %v500, %v497
      %v507 = vpack.c.b16 %v501, %v498
      %v508 = vpack.c.b16 %v502, %v502
      %v509 = vpack.c.b16 %v503, %v503
      %v510 = vpack.c.b16 %v504, %v504
      %vm511 = vsmask.f32 7424
      %v513 = vshrl.u32 %v505, 16
      %v515 = vshll.u32 %v505, 16
      %v517 = vrot.slane %v515, 1
      %v518 = vor.u32 %v513, %v517
      %v520 = vshll.u32 %v508, 16
      %v522 = vrot.slane %v520, 1
      %v523 = vsel %vm511, %v518, %v522
      %v525 = vshrl.u32 %v506, 16
      %v527 = vshll.u32 %v506, 16
      %v529 = vrot.slane %v527, 1
      %v530 = vor.u32 %v525, %v529
      %v532 = vshll.u32 %v509, 16
      %v534 = vrot.slane %v532, 1
      %v535 = vsel %vm511, %v530, %v534
      %v537 = vshrl.u32 %v507, 16
      %v539 = vshll.u32 %v507, 16
      %v541 = vrot.slane %v539, 1
      %v542 = vor.u32 %v537, %v541
      %v544 = vshll.u32 %v510, 16
      %v546 = vrot.slane %v544, 1
      %v547 = vsel %vm511, %v542, %v546
      %v586 = vunpack.c.l.b16 %v454
      %v587 = vunpack.c.h.b16 %v454
      %v588 = vunpack.c.l.b16 %v455
      %v589 = vunpack.c.h.b16 %v455
      %v590 = vunpack.c.l.b16 %v456
      %v591 = vunpack.c.h.b16 %v456
      %v592 = vunpack.c.l.b16 %v457
      %v593 = vunpack.c.h.b16 %v457
      %v594 = vunpack.c.l.b16 %v458
      %v595 = vunpack.c.h.b16 %v458
      %v596 = vunpack.c.l.b16 %v459
      %v597 = vunpack.c.h.b16 %v459
      %v598 = vunpack.c.l.b16 %v460
      %v599 = vunpack.c.h.b16 %v460
      %v600 = vunpack.c.l.b16 %v461
      %v601 = vunpack.c.h.b16 %v461
      %v602 = vunpack.c.l.b16 %v462
      %v603 = vunpack.c.h.b16 %v462
      %v604 = vunpack.c.l.b16 %v463
      %v605 = vunpack.c.h.b16 %v463
      %v606 = vunpack.c.l.b16 %v464
      %v607 = vunpack.c.h.b16 %v464
      %v608 = vunpack.c.l.b16 %v465
      %v609 = vunpack.c.h.b16 %v465
      %v610 = vunpack.c.l.b16 %v466
      %v611 = vunpack.c.h.b16 %v466
      %v612 = vunpack.c.l.b16 %v467
      %v613 = vunpack.c.h.b16 %v467
      %v614 = vunpack.c.l.b16 %v468
      %v615 = vunpack.c.h.b16 %v468
      %v616 = vunpack.c.l.b16 %v469
      %v617 = vunpack.c.h.b16 %v469
      %v618 = vunpack.c.l.b16 %v470
      %v619 = vunpack.c.h.b16 %v470
      %v620 = vunpack.c.l.b16 %v471
      %v621 = vunpack.c.h.b16 %v471
      %v622 = vunpack.c.l.b16 %v472
      %v623 = vunpack.c.h.b16 %v472
      %v624 = vunpack.c.l.b16 %v473
      %v625 = vunpack.c.h.b16 %v473
      %v626 = vunpack.c.l.b16 %v474
      %v627 = vunpack.c.h.b16 %v474
      %v628 = vunpack.c.l.b16 %v475
      %v629 = vunpack.c.h.b16 %v475
      %v630 = vunpack.c.l.b16 %v476
      %v631 = vunpack.c.h.b16 %v476
      %v632 = vunpack.c.l.b16 %v477
      %v633 = vunpack.c.h.b16 %v477
      %v634 = vunpack.c.l.b16 %v478
      %v635 = vunpack.c.h.b16 %v478
      %v636 = vunpack.c.l.b16 %v479
      %v637 = vunpack.c.h.b16 %v479
      %v638 = vunpack.c.l.b16 %v480
      %v639 = vunpack.c.h.b16 %v480
      %v640 = vunpack.c.l.b16 %v481
      %v641 = vunpack.c.h.b16 %v481
      %v642 = vunpack.c.l.b16 %v482
      %v643 = vunpack.c.h.b16 %v482
      %v644 = vunpack.c.l.b16 %v483
      %v645 = vunpack.c.h.b16 %v483
      %v646 = vunpack.c.l.b16 %v484
      %v647 = vunpack.c.h.b16 %v484
      %v648 = vunpack.c.l.b16 %v485
      %v649 = vunpack.c.h.b16 %v485
      %v650 = vunpack.c.l.b16 %v486
      %v651 = vunpack.c.h.b16 %v486
      %v652 = vunpack.c.l.b16 %v487
      %v653 = vunpack.c.h.b16 %v487
      %v654 = vunpack.c.l.b16 %v488
      %v655 = vunpack.c.h.b16 %v488
      %v656 = vunpack.c.l.b16 %v489
      %v657 = vunpack.c.h.b16 %v489
      %v658 = vpack.c.b16 %v588, %v586
      %v659 = vpack.c.b16 %v589, %v587
      %v660 = vpack.c.b16 %v592, %v590
      %v661 = vpack.c.b16 %v593, %v591
      %v662 = vpack.c.b16 %v596, %v594
      %v663 = vpack.c.b16 %v597, %v595
      %v664 = vpack.c.b16 %v600, %v598
      %v665 = vpack.c.b16 %v601, %v599
      %v666 = vpack.c.b16 %v604, %v602
      %v667 = vpack.c.b16 %v605, %v603
      %v668 = vpack.c.b16 %v608, %v606
      %v669 = vpack.c.b16 %v609, %v607
      %v670 = vpack.c.b16 %v612, %v610
      %v671 = vpack.c.b16 %v613, %v611
      %v672 = vpack.c.b16 %v616, %v614
      %v673 = vpack.c.b16 %v617, %v615
      %v674 = vpack.c.b16 %v620, %v618
      %v675 = vpack.c.b16 %v621, %v619
      %v676 = vpack.c.b16 %v624, %v622
      %v677 = vpack.c.b16 %v625, %v623
      %v678 = vpack.c.b16 %v628, %v626
      %v679 = vpack.c.b16 %v629, %v627
      %v680 = vpack.c.b16 %v632, %v630
      %v681 = vpack.c.b16 %v633, %v631
      %v682 = vpack.c.b16 %v636, %v634
      %v683 = vpack.c.b16 %v637, %v635
      %v684 = vpack.c.b16 %v640, %v638
      %v685 = vpack.c.b16 %v641, %v639
      %v686 = vpack.c.b16 %v644, %v642
      %v687 = vpack.c.b16 %v645, %v643
      %v688 = vpack.c.b16 %v648, %v646
      %v689 = vpack.c.b16 %v649, %v647
      %v690 = vpack.c.b16 %v652, %v650
      %v691 = vpack.c.b16 %v653, %v651
      %v692 = vpack.c.b16 %v656, %v654
      %v693 = vpack.c.b16 %v657, %v655
      %vm730 = vcmask 261120
      %v732 = vsel %vm730, %v547, 0
      %734 = vmatprep.subr.bf16.mxu0 %v659
      %735 = vmatpush1.bf16.msra.mxu0 %v658
      %736 = vmatprep.subr.bf16.mxu0 %v661
      %737 = vmatpush1.bf16.msra.mxu0 %v660
      %738 = vmatprep.subr.bf16.mxu0 %v663
      %739 = vmatpush1.bf16.msra.mxu0 %v662
      %740 = vmatprep.subr.bf16.mxu0 %v665
      %741 = vmatpush1.bf16.msra.mxu0 %v664
      %742 = vmatprep.subr.bf16.mxu0 %v667
      %743 = vmatpush1.bf16.msra.mxu0 %v666
      %744 = vmatprep.subr.bf16.mxu0 %v669
      %745 = vmatpush1.bf16.msra.mxu0 %v668
      %746 = vmatprep.subr.bf16.mxu0 %v671
      %747 = vmatpush1.bf16.msra.mxu0 %v670
      %748 = vmatprep.subr.bf16.mxu0 %v673
      %749 = vmatpush1.bf16.msra.mxu0 %v672
      %750 = vmatprep.subr.bf16.mxu0 %v675
      %751 = vmatpush1.bf16.msra.mxu0 %v674
      %752 = vmatprep.subr.bf16.mxu0 %v677
      %753 = vmatpush1.bf16.msra.mxu0 %v676
      %754 = vmatprep.subr.bf16.mxu0 %v679
      %755 = vmatpush1.bf16.msra.mxu0 %v678
      %756 = vmatprep.subr.bf16.mxu0 %v681
      %757 = vmatpush1.bf16.msra.mxu0 %v680
      %758 = vmatprep.subr.bf16.mxu0 %v683
      %759 = vmatpush1.bf16.msra.mxu0 %v682
      %760 = vmatprep.subr.bf16.mxu0 %v685
      %761 = vmatpush1.bf16.msra.mxu0 %v684
      %762 = vmatprep.subr.bf16.mxu0 %v687
      %763 = vmatpush1.bf16.msra.mxu0 %v686
      %764 = vmatprep.subr.bf16.mxu0 %v689
      %765 = vmatpush1.bf16.msra.mxu0 %v688
      %766 = vmatprep.mubr.bf16.mxu0 %v535
      %767 = vmatmul.mubr.bf16.gmra.mrb[0].mxu0 %v523
      %v768 = vpop.f32.mrb[0].mxu0
      %v769 = vadd.f32 0.0, %v768
      %v770 = vpop.f32.mrb[0].mxu0
      %v771 = vadd.f32 0.0, %v770
      %v772 = vpop.f32.mrb[0].mxu0
      %v773 = vadd.f32 0.0, %v772
      %v774 = vpop.f32.mrb[0].mxu0
      %v775 = vadd.f32 0.0, %v774
      %776 = vdwg.mxu0
      %777 = vmatprep.subr.bf16.mxu0 %v691
      %778 = vmatpush1.bf16.msra.mxu0 %v690
      %779 = vmatprep.subr.bf16.mxu0 %v693
      %780 = vmatpush1.bf16.msra.mxu0 %v692
      %781 = vmatprep.subr.bf16.mxu0 0
      %782 = vmatpush1.bf16.msra.mxu0 0
      %783 = vmatprep.subr.bf16.mxu0 0
      %784 = vmatpush1.bf16.msra.mxu0 0
      %785 = vmatprep.subr.bf16.mxu0 0
      %786 = vmatpush1.bf16.msra.mxu0 0
      %787 = vmatprep.subr.bf16.mxu0 0
      %788 = vmatpush1.bf16.msra.mxu0 0
      %789 = vmatprep.subr.bf16.mxu0 0
      %790 = vmatpush1.bf16.msra.mxu0 0
      %791 = vmatprep.subr.bf16.mxu0 0
      %792 = vmatpush1.bf16.msra.mxu0 0
      %793 = vmatprep.subr.bf16.mxu0 0
      %794 = vmatpush1.bf16.msra.mxu0 0
      %795 = vmatprep.subr.bf16.mxu0 0
      %796 = vmatpush1.bf16.msra.mxu0 0
      %797 = vmatprep.subr.bf16.mxu0 0
      %798 = vmatpush1.bf16.msra.mxu0 0
      %799 = vmatprep.subr.bf16.mxu0 0
      %800 = vmatpush1.bf16.msra.mxu0 0
      %801 = vmatprep.subr.bf16.mxu0 0
      %802 = vmatpush1.bf16.msra.mxu0 0
      %803 = vmatprep.subr.bf16.mxu0 0
      %804 = vmatpush1.bf16.msra.mxu0 0
      %805 = vmatprep.subr.bf16.mxu0 0
      %806 = vmatpush1.bf16.msra.mxu0 0
      %807 = vmatprep.subr.bf16.mxu0 0
      %808 = vmatpush1.bf16.msra.mxu0 0
      %809 = vmatprep.mubr.bf16.mxu0 0
      %810 = vmatmul.mubr.bf16.gmra.mrb[0].mxu0 %v732
      %v811 = vpop.f32.mrb[0].mxu0
      %v812 = vadd.f32 %v769, %v811
      %v813 = vpop.f32.mrb[0].mxu0
      %v814 = vadd.f32 %v771, %v813
      %v815 = vpop.f32.mrb[0].mxu0
      %v816 = vadd.f32 %v773, %v815
      %v817 = vpop.f32.mrb[0].mxu0
      %v818 = vadd.f32 %v775, %v817
      %819 = vdwg.mxu0
      %v858 = vunpack.c.l.b16 %v415
      %v859 = vunpack.c.h.b16 %v415
      %v860 = vunpack.c.l.b16 %v416
      %v861 = vunpack.c.h.b16 %v416
      %v862 = vunpack.c.l.b16 %v417
      %v863 = vunpack.c.h.b16 %v417
      %v864 = vunpack.c.l.b16 %v418
      %v865 = vunpack.c.h.b16 %v418
      %v866 = vunpack.c.l.b16 %v419
      %v867 = vunpack.c.h.b16 %v419
      %v868 = vunpack.c.l.b16 %v420
      %v869 = vunpack.c.h.b16 %v420
      %v870 = vunpack.c.l.b16 %v421
      %v871 = vunpack.c.h.b16 %v421
      %v872 = vunpack.c.l.b16 %v422
      %v873 = vunpack.c.h.b16 %v422
      %v874 = vunpack.c.l.b16 %v423
      %v875 = vunpack.c.h.b16 %v423
      %v876 = vunpack.c.l.b16 %v424
      %v877 = vunpack.c.h.b16 %v424
      %v878 = vunpack.c.l.b16 %v425
      %v879 = vunpack.c.h.b16 %v425
      %v880 = vunpack.c.l.b16 %v426
      %v881 = vunpack.c.h.b16 %v426
      %v882 = vunpack.c.l.b16 %v427
      %v883 = vunpack.c.h.b16 %v427
      %v884 = vunpack.c.l.b16 %v428
      %v885 = vunpack.c.h.b16 %v428
      %v886 = vunpack.c.l.b16 %v429
      %v887 = vunpack.c.h.b16 %v429
      %v888 = vunpack.c.l.b16 %v430
      %v889 = vunpack.c.h.b16 %v430
      %v890 = vunpack.c.l.b16 %v431
      %v891 = vunpack.c.h.b16 %v431
      %v892 = vunpack.c.l.b16 %v432
      %v893 = vunpack.c.h.b16 %v432
      %v894 = vunpack.c.l.b16 %v433
      %v895 = vunpack.c.h.b16 %v433
      %v896 = vunpack.c.l.b16 %v434
      %v897 = vunpack.c.h.b16 %v434
      %v898 = vunpack.c.l.b16 %v435
      %v899 = vunpack.c.h.b16 %v435
      %v900 = vunpack.c.l.b16 %v436
      %v901 = vunpack.c.h.b16 %v436
      %v902 = vunpack.c.l.b16 %v437
      %v903 = vunpack.c.h.b16 %v437
      %v904 = vunpack.c.l.b16 %v438
      %v905 = vunpack.c.h.b16 %v438
      %v906 = vunpack.c.l.b16 %v439
      %v907 = vunpack.c.h.b16 %v439
      %v908 = vunpack.c.l.b16 %v440
      %v909 = vunpack.c.h.b16 %v440
      %v910 = vunpack.c.l.b16 %v441
      %v911 = vunpack.c.h.b16 %v441
      %v912 = vunpack.c.l.b16 %v442
      %v913 = vunpack.c.h.b16 %v442
      %v914 = vunpack.c.l.b16 %v443
      %v915 = vunpack.c.h.b16 %v443
      %v916 = vunpack.c.l.b16 %v444
      %v917 = vunpack.c.h.b16 %v444
      %v918 = vunpack.c.l.b16 %v445
      %v919 = vunpack.c.h.b16 %v445
      %v920 = vunpack.c.l.b16 %v446
      %v921 = vunpack.c.h.b16 %v446
      %v922 = vunpack.c.l.b16 %v447
      %v923 = vunpack.c.h.b16 %v447
      %v924 = vunpack.c.l.b16 %v448
      %v925 = vunpack.c.h.b16 %v448
      %v926 = vunpack.c.l.b16 %v449
      %v927 = vunpack.c.h.b16 %v449
      %v928 = vunpack.c.l.b16 %v450
      %v929 = vunpack.c.h.b16 %v450
      %v930 = vpack.c.b16 %v860, %v858
      %v931 = vpack.c.b16 %v861, %v859
      %v932 = vpack.c.b16 %v864, %v862
      %v933 = vpack.c.b16 %v865, %v863
      %v934 = vpack.c.b16 %v868, %v866
      %v935 = vpack.c.b16 %v869, %v867
      %v936 = vpack.c.b16 %v872, %v870
      %v937 = vpack.c.b16 %v873, %v871
      %v938 = vpack.c.b16 %v876, %v874
      %v939 = vpack.c.b16 %v877, %v875
      %v940 = vpack.c.b16 %v880, %v878
      %v941 = vpack.c.b16 %v881, %v879
      %v942 = vpack.c.b16 %v884, %v882
      %v943 = vpack.c.b16 %v885, %v883
      %v944 = vpack.c.b16 %v888, %v886
      %v945 = vpack.c.b16 %v889, %v887
      %v946 = vpack.c.b16 %v892, %v890
      %v947 = vpack.c.b16 %v893, %v891
      %v948 = vpack.c.b16 %v896, %v894
      %v949 = vpack.c.b16 %v897, %v895
      %v950 = vpack.c.b16 %v900, %v898
      %v951 = vpack.c.b16 %v901, %v899
      %v952 = vpack.c.b16 %v904, %v902
      %v953 = vpack.c.b16 %v905, %v903
      %v954 = vpack.c.b16 %v908, %v906
      %v955 = vpack.c.b16 %v909, %v907
      %v956 = vpack.c.b16 %v912, %v910
      %v957 = vpack.c.b16 %v913, %v911
      %v958 = vpack.c.b16 %v916, %v914
      %v959 = vpack.c.b16 %v917, %v915
      %v960 = vpack.c.b16 %v920, %v918
      %v961 = vpack.c.b16 %v921, %v919
      %v962 = vpack.c.b16 %v924, %v922
      %v963 = vpack.c.b16 %v925, %v923
      %v964 = vpack.c.b16 %v928, %v926
      %v965 = vpack.c.b16 %v929, %v927
      %v1002 = vsel %vm730, %v507, 0
      %1004 = vmatprep.subr.bf16.mxu0 %v931
      %1005 = vmatpush1.bf16.msra.mxu0 %v930
      %1006 = vmatprep.subr.bf16.mxu0 %v933
      %1007 = vmatpush1.bf16.msra.mxu0 %v932
      %1008 = vmatprep.subr.bf16.mxu0 %v935
      %1009 = vmatpush1.bf16.msra.mxu0 %v934
      %1010 = vmatprep.subr.bf16.mxu0 %v937
      %1011 = vmatpush1.bf16.msra.mxu0 %v936
      %1012 = vmatprep.subr.bf16.mxu0 %v939
      %1013 = vmatpush1.bf16.msra.mxu0 %v938
      %1014 = vmatprep.subr.bf16.mxu0 %v941
      %1015 = vmatpush1.bf16.msra.mxu0 %v940
      %1016 = vmatprep.subr.bf16.mxu0 %v943
      %1017 = vmatpush1.bf16.msra.mxu0 %v942
      %1018 = vmatprep.subr.bf16.mxu0 %v945
      %1019 = vmatpush1.bf16.msra.mxu0 %v944
      %1020 = vmatprep.subr.bf16.mxu0 %v947
      %1021 = vmatpush1.bf16.msra.mxu0 %v946
      %1022 = vmatprep.subr.bf16.mxu0 %v949
      %1023 = vmatpush1.bf16.msra.mxu0 %v948
      %1024 = vmatprep.subr.bf16.mxu0 %v951
      %1025 = vmatpush1.bf16.msra.mxu0 %v950
      %1026 = vmatprep.subr.bf16.mxu0 %v953
      %1027 = vmatpush1.bf16.msra.mxu0 %v952
      %1028 = vmatprep.subr.bf16.mxu0 %v955
      %1029 = vmatpush1.bf16.msra.mxu0 %v954
      %1030 = vmatprep.subr.bf16.mxu0 %v957
      %1031 = vmatpush1.bf16.msra.mxu0 %v956
      %1032 = vmatprep.subr.bf16.mxu0 %v959
      %1033 = vmatpush1.bf16.msra.mxu0 %v958
      %1034 = vmatprep.subr.bf16.mxu0 %v961
      %1035 = vmatpush1.bf16.msra.mxu0 %v960
      %1036 = vmatprep.mubr.bf16.mxu0 %v506
      %1037 = vmatmul.mubr.bf16.gmra.mrb[0].mxu0 %v505
      %v1038 = vpop.f32.mrb[0].mxu0
      %v1039 = vadd.f32 %v812, %v1038
      %v1040 = vpop.f32.mrb[0].mxu0
      %v1041 = vadd.f32 %v814, %v1040
      %v1042 = vpop.f32.mrb[0].mxu0
      %v1043 = vadd.f32 %v816, %v1042
      %v1044 = vpop.f32.mrb[0].mxu0
      %v1045 = vadd.f32 %v818, %v1044
      %1046 = vdwg.mxu0
      %1047 = vmatprep.subr.bf16.mxu0 %v963
      %1048 = vmatpush1.bf16.msra.mxu0 %v962
      %1049 = vmatprep.subr.bf16.mxu0 %v965
      %1050 = vmatpush1.bf16.msra.mxu0 %v964
      %1051 = vmatprep.subr.bf16.mxu0 0
      %1052 = vmatpush1.bf16.msra.mxu0 0
      %1053 = vmatprep.subr.bf16.mxu0 0
      %1054 = vmatpush1.bf16.msra.mxu0 0
      %1055 = vmatprep.subr.bf16.mxu0 0
      %1056 = vmatpush1.bf16.msra.mxu0 0
      %1057 = vmatprep.subr.bf16.mxu0 0
      %1058 = vmatpush1.bf16.msra.mxu0 0
      %1059 = vmatprep.subr.bf16.mxu0 0
      %1060 = vmatpush1.bf16.msra.mxu0 0
      %1061 = vmatprep.subr.bf16.mxu0 0
      %1062 = vmatpush1.bf16.msra.mxu0 0
      %1063 = vmatprep.subr.bf16.mxu0 0
      %1064 = vmatpush1.bf16.msra.mxu0 0
      %1065 = vmatprep.subr.bf16.mxu0 0
      %1066 = vmatpush1.bf16.msra.mxu0 0
      %1067 = vmatprep.subr.bf16.mxu0 0
      %1068 = vmatpush1.bf16.msra.mxu0 0
      %1069 = vmatprep.subr.bf16.mxu0 0
      %1070 = vmatpush1.bf16.msra.mxu0 0
      %1071 = vmatprep.subr.bf16.mxu0 0
      %1072 = vmatpush1.bf16.msra.mxu0 0
      %1073 = vmatprep.subr.bf16.mxu0 0
      %1074 = vmatpush1.bf16.msra.mxu0 0
      %1075 = vmatprep.subr.bf16.mxu0 0
      %1076 = vmatpush1.bf16.msra.mxu0 0
      %1077 = vmatprep.subr.bf16.mxu0 0
      %1078 = vmatpush1.bf16.msra.mxu0 0
      %1079 = vmatprep.mubr.bf16.mxu0 0
      %1080 = vmatmul.mubr.bf16.gmra.mrb[0].mxu0 %v1002
      %v1081 = vpop.f32.mrb[0].mxu0
      %v1082 = vadd.f32 %v1039, %v1081
      %v1083 = vpop.f32.mrb[0].mxu0
      %v1084 = vadd.f32 %v1041, %v1083
      %v1085 = vpop.f32.mrb[0].mxu0
      %v1086 = vadd.f32 %v1043, %v1085
      %v1087 = vpop.f32.mrb[0].mxu0
      %v1088 = vadd.f32 %v1045, %v1087
      %1089 = vdwg.mxu0
      %v1090 = vld [vmem:[%s363] sm:$0xee]
      %v1091 = vld [vmem:[%s363 + $0x8] sm:$0xe]
      %s1092 = scalar_lea.vmem %s3, 576
      %v1093 = vld [vmem:[%s1092] sm:$0xff]
      %v1094 = vld [vmem:[%s1092 + $0x8] sm:$0xff]
      %v1095 = vld [vmem:[%s1092 + $0x10] sm:$0xff]
      %v1096 = vld [vmem:[%s1092 + $0x18] sm:$0xff]
      %v1097 = vld [vmem:[%s1092 + $0x20] sm:$0xff]
      %v1098 = vld [vmem:[%s1092 + $0x28] sm:$0xff]
      %v1099 = vld [vmem:[%s1092 + $0x30] sm:$0xff]
      %v1100 = vld [vmem:[%s1092 + $0x38] sm:$0xff]
      %v1101 = vld [vmem:[%s1092 + $0x40] sm:$0xff]
      %v1102 = vld [vmem:[%s1092 + $0x48] sm:$0xff]
      %v1103 = vld [vmem:[%s1092 + $0x50] sm:$0xff]
      %v1104 = vld [vmem:[%s1092 + $0x58] sm:$0xff]
      %v1105 = vld [vmem:[%s1092 + $0x60] sm:$0xff]
      %v1106 = vld [vmem:[%s1092 + $0x68] sm:$0xff]
      %v1107 = vld [vmem:[%s1092 + $0x70] sm:$0xff]
      %v1108 = vld [vmem:[%s1092 + $0x78] sm:$0xff]
      %v1109 = vld [vmem:[%s1092 + $0x80] sm:$0xff]
      %v1110 = vld [vmem:[%s1092 + $0x88] sm:$0xff]
      %v1111 = vld [vmem:[%s1092 + $0x90] sm:$0xff]
      %v1112 = vld [vmem:[%s1092 + $0x98] sm:$0xff]
      %v1113 = vld [vmem:[%s1092 + $0xa0] sm:$0xff]
      %v1114 = vld [vmem:[%s1092 + $0xa8] sm:$0xff]
      %v1115 = vld [vmem:[%s1092 + $0xb0] sm:$0xff]
      %v1116 = vld [vmem:[%s1092 + $0xb8] sm:$0xff]
      %v1117 = vld [vmem:[%s1092 + $0xc0] sm:$0xff]
      %v1118 = vld [vmem:[%s1092 + $0xc8] sm:$0xff]
      %v1119 = vld [vmem:[%s1092 + $0xd0] sm:$0xff]
      %v1120 = vld [vmem:[%s1092 + $0xd8] sm:$0xff]
      %v1121 = vld [vmem:[%s1092 + $0xe0] sm:$0xff]
      %v1122 = vld [vmem:[%s1092 + $0xe8] sm:$0xff]
      %v1123 = vld [vmem:[%s1092 + $0xf0] sm:$0xff]
      %v1124 = vld [vmem:[%s1092 + $0xf8] sm:$0xff]
      %v1125 = vld [vmem:[%s1092 + $0x100] sm:$0xff]
      %v1126 = vld [vmem:[%s1092 + $0x108] sm:$0xff]
      %v1127 = vld [vmem:[%s1092 + $0x110] sm:$0xff]
      %v1128 = vld [vmem:[%s1092 + $0x118] sm:$0xff]
      %v1131 = vunpack.c.l.b16 %v1090
      %v1132 = vunpack.c.h.b16 %v1090
      %v1133 = vunpack.c.l.b16 %v1091
      %v1134 = vpack.c.b16 %v499, %v1131
      %v1135 = vpack.c.b16 %v500, %v1132
      %v1136 = vpack.c.b16 %v501, %v1133
      %vm1137 = vcmask 1046528
      %v1138 = vrot.slane %v1134, 1
      %v1139 = vrot.slane %v508, 1
      %v1140 = vsel %vm1137, %v1138, %v1139
      %v1141 = vrot.slane %v1135, 1
      %v1142 = vrot.slane %v509, 1
      %v1143 = vsel %vm1137, %v1141, %v1142
      %v1144 = vrot.slane %v1136, 1
      %v1145 = vrot.slane %v510, 1
      %v1146 = vsel %vm1137, %v1144, %v1145
      %v1185 = vunpack.c.l.b16 %v1093
      %v1186 = vunpack.c.h.b16 %v1093
      %v1187 = vunpack.c.l.b16 %v1094
      %v1188 = vunpack.c.h.b16 %v1094
      %v1189 = vunpack.c.l.b16 %v1095
      %v1190 = vunpack.c.h.b16 %v1095
      %v1191 = vunpack.c.l.b16 %v1096
      %v1192 = vunpack.c.h.b16 %v1096
      %v1193 = vunpack.c.l.b16 %v1097
      %v1194 = vunpack.c.h.b16 %v1097
      %v1195 = vunpack.c.l.b16 %v1098
      %v1196 = vunpack.c.h.b16 %v1098
      %v1197 = vunpack.c.l.b16 %v1099
      %v1198 = vunpack.c.h.b16 %v1099
      %v1199 = vunpack.c.l.b16 %v1100
      %v1200 = vunpack.c.h.b16 %v1100
      %v1201 = vunpack.c.l.b16 %v1101
      %v1202 = vunpack.c.h.b16 %v1101
      %v1203 = vunpack.c.l.b16 %v1102
      %v1204 = vunpack.c.h.b16 %v1102
      %v1205 = vunpack.c.l.b16 %v1103
      %v1206 = vunpack.c.h.b16 %v1103
      %v1207 = vunpack.c.l.b16 %v1104
      %v1208 = vunpack.c.h.b16 %v1104
      %v1209 = vunpack.c.l.b16 %v1105
      %v1210 = vunpack.c.h.b16 %v1105
      %v1211 = vunpack.c.l.b16 %v1106
      %v1212 = vunpack.c.h.b16 %v1106
      %v1213 = vunpack.c.l.b16 %v1107
      %v1214 = vunpack.c.h.b16 %v1107
      %v1215 = vunpack.c.l.b16 %v1108
      %v1216 = vunpack.c.h.b16 %v1108
      %v1217 = vunpack.c.l.b16 %v1109
      %v1218 = vunpack.c.h.b16 %v1109
      %v1219 = vunpack.c.l.b16 %v1110
      %v1220 = vunpack.c.h.b16 %v1110
      %v1221 = vunpack.c.l.b16 %v1111
      %v1222 = vunpack.c.h.b16 %v1111
      %v1223 = vunpack.c.l.b16 %v1112
      %v1224 = vunpack.c.h.b16 %v1112
      %v1225 = vunpack.c.l.b16 %v1113
      %v1226 = vunpack.c.h.b16 %v1113
      %v1227 = vunpack.c.l.b16 %v1114
      %v1228 = vunpack.c.h.b16 %v1114
      %v1229 = vunpack.c.l.b16 %v1115
      %v1230 = vunpack.c.h.b16 %v1115
      %v1231 = vunpack.c.l.b16 %v1116
      %v1232 = vunpack.c.h.b16 %v1116
      %v1233 = vunpack.c.l.b16 %v1117
      %v1234 = vunpack.c.h.b16 %v1117
      %v1235 = vunpack.c.l.b16 %v1118
      %v1236 = vunpack.c.h.b16 %v1118
      %v1237 = vunpack.c.l.b16 %v1119
      %v1238 = vunpack.c.h.b16 %v1119
      %v1239 = vunpack.c.l.b16 %v1120
      %v1240 = vunpack.c.h.b16 %v1120
      %v1241 = vunpack.c.l.b16 %v1121
      %v1242 = vunpack.c.h.b16 %v1121
      %v1243 = vunpack.c.l.b16 %v1122
      %v1244 = vunpack.c.h.b16 %v1122
      %v1245 = vunpack.c.l.b16 %v1123
      %v1246 = vunpack.c.h.b16 %v1123
      %v1247 = vunpack.c.l.b16 %v1124
      %v1248 = vunpack.c.h.b16 %v1124
      %v1249 = vunpack.c.l.b16 %v1125
      %v1250 = vunpack.c.h.b16 %v1125
      %v1251 = vunpack.c.l.b16 %v1126
      %v1252 = vunpack.c.h.b16 %v1126
      %v1253 = vunpack.c.l.b16 %v1127
      %v1254 = vunpack.c.h.b16 %v1127
      %v1255 = vunpack.c.l.b16 %v1128
      %v1256 = vunpack.c.h.b16 %v1128
      %v1257 = vpack.c.b16 %v1187, %v1185
      %v1258 = vpack.c.b16 %v1188, %v1186
      %v1259 = vpack.c.b16 %v1191, %v1189
      %v1260 = vpack.c.b16 %v1192, %v1190
      %v1261 = vpack.c.b16 %v1195, %v1193
      %v1262 = vpack.c.b16 %v1196, %v1194
      %v1263 = vpack.c.b16 %v1199, %v1197
      %v1264 = vpack.c.b16 %v1200, %v1198
      %v1265 = vpack.c.b16 %v1203, %v1201
      %v1266 = vpack.c.b16 %v1204, %v1202
      %v1267 = vpack.c.b16 %v1207, %v1205
      %v1268 = vpack.c.b16 %v1208, %v1206
      %v1269 = vpack.c.b16 %v1211, %v1209
      %v1270 = vpack.c.b16 %v1212, %v1210
      %v1271 = vpack.c.b16 %v1215, %v1213
      %v1272 = vpack.c.b16 %v1216, %v1214
      %v1273 = vpack.c.b16 %v1219, %v1217
      %v1274 = vpack.c.b16 %v1220, %v1218
      %v1275 = vpack.c.b16 %v1223, %v1221
      %v1276 = vpack.c.b16 %v1224, %v1222
      %v1277 = vpack.c.b16 %v1227, %v1225
      %v1278 = vpack.c.b16 %v1228, %v1226
      %v1279 = vpack.c.b16 %v1231, %v1229
      %v1280 = vpack.c.b16 %v1232, %v1230
      %v1281 = vpack.c.b16 %v1235, %v1233
      %v1282 = vpack.c.b16 %v1236, %v1234
      %v1283 = vpack.c.b16 %v1239, %v1237
      %v1284 = vpack.c.b16 %v1240, %v1238
      %v1285 = vpack.c.b16 %v1243, %v1241
      %v1286 = vpack.c.b16 %v1244, %v1242
      %v1287 = vpack.c.b16 %v1247, %v1245
      %v1288 = vpack.c.b16 %v1248, %v1246
      %v1289 = vpack.c.b16 %v1251, %v1249
      %v1290 = vpack.c.b16 %v1252, %v1250
      %v1291 = vpack.c.b16 %v1255, %v1253
      %v1292 = vpack.c.b16 %v1256, %v1254
      %v1330 = vsel %vm730, %v1146, 0
      %1332 = vmatprep.subr.bf16.mxu0 %v1258
      %1333 = vmatpush1.bf16.msra.mxu0 %v1257
      %1334 = vmatprep.subr.bf16.mxu0 %v1260
      %1335 = vmatpush1.bf16.msra.mxu0 %v1259
      %1336 = vmatprep.subr.bf16.mxu0 %v1262
      %1337 = vmatpush1.bf16.msra.mxu0 %v1261
      %1338 = vmatprep.subr.bf16.mxu0 %v1264
      %1339 = vmatpush1.bf16.msra.mxu0 %v1263
      %1340 = vmatprep.subr.bf16.mxu0 %v1266
      %1341 = vmatpush1.bf16.msra.mxu0 %v1265
      %1342 = vmatprep.subr.bf16.mxu0 %v1268
      %1343 = vmatpush1.bf16.msra.mxu0 %v1267
      %1344 = vmatprep.subr.bf16.mxu0 %v1270
      %1345 = vmatpush1.bf16.msra.mxu0 %v1269
      %1346 = vmatprep.subr.bf16.mxu0 %v1272
      %1347 = vmatpush1.bf16.msra.mxu0 %v1271
      %1348 = vmatprep.subr.bf16.mxu0 %v1274
      %1349 = vmatpush1.bf16.msra.mxu0 %v1273
      %1350 = vmatprep.subr.bf16.mxu0 %v1276
      %1351 = vmatpush1.bf16.msra.mxu0 %v1275
      %1352 = vmatprep.subr.bf16.mxu0 %v1278
      %1353 = vmatpush1.bf16.msra.mxu0 %v1277
      %1354 = vmatprep.subr.bf16.mxu0 %v1280
      %1355 = vmatpush1.bf16.msra.mxu0 %v1279
      %1356 = vmatprep.subr.bf16.mxu0 %v1282
      %1357 = vmatpush1.bf16.msra.mxu0 %v1281
      %1358 = vmatprep.subr.bf16.mxu0 %v1284
      %1359 = vmatpush1.bf16.msra.mxu0 %v1283
      %1360 = vmatprep.subr.bf16.mxu0 %v1286
      %1361 = vmatpush1.bf16.msra.mxu0 %v1285
      %1362 = vmatprep.subr.bf16.mxu0 %v1288
      %1363 = vmatpush1.bf16.msra.mxu0 %v1287
      %1364 = vmatprep.mubr.bf16.mxu0 %v1143
      %1365 = vmatmul.mubr.bf16.gmra.mrb[0].mxu0 %v1140
      %v1366 = vpop.f32.mrb[0].mxu0
      %v1367 = vadd.f32 0.0, %v1366
      %v1368 = vpop.f32.mrb[0].mxu0
      %v1369 = vadd.f32 0.0, %v1368
      %v1370 = vpop.f32.mrb[0].mxu0
      %v1371 = vadd.f32 0.0, %v1370
      %v1372 = vpop.f32.mrb[0].mxu0
      %v1373 = vadd.f32 0.0, %v1372
      %1374 = vdwg.mxu0
      %1375 = vmatprep.subr.bf16.mxu0 %v1290
      %1376 = vmatpush1.bf16.msra.mxu0 %v1289
      %1377 = vmatprep.subr.bf16.mxu0 %v1292
      %1378 = vmatpush1.bf16.msra.mxu0 %v1291
      %1379 = vmatprep.subr.bf16.mxu0 0
      %1380 = vmatpush1.bf16.msra.mxu0 0
      %1381 = vmatprep.subr.bf16.mxu0 0
      %1382 = vmatpush1.bf16.msra.mxu0 0
      %1383 = vmatprep.subr.bf16.mxu0 0
      %1384 = vmatpush1.bf16.msra.mxu0 0
      %1385 = vmatprep.subr.bf16.mxu0 0
      %1386 = vmatpush1.bf16.msra.mxu0 0
      %1387 = vmatprep.subr.bf16.mxu0 0
      %1388 = vmatpush1.bf16.msra.mxu0 0
      %1389 = vmatprep.subr.bf16.mxu0 0
      %1390 = vmatpush1.bf16.msra.mxu0 0
      %1391 = vmatprep.subr.bf16.mxu0 0
      %1392 = vmatpush1.bf16.msra.mxu0 0
      %1393 = vmatprep.subr.bf16.mxu0 0
      %1394 = vmatpush1.bf16.msra.mxu0 0
      %1395 = vmatprep.subr.bf16.mxu0 0
      %1396 = vmatpush1.bf16.msra.mxu0 0
      %1397 = vmatprep.subr.bf16.mxu0 0
      %1398 = vmatpush1.bf16.msra.mxu0 0
      %1399 = vmatprep.subr.bf16.mxu0 0
      %1400 = vmatpush1.bf16.msra.mxu0 0
      %1401 = vmatprep.subr.bf16.mxu0 0
      %1402 = vmatpush1.bf16.msra.mxu0 0
      %1403 = vmatprep.subr.bf16.mxu0 0
      %1404 = vmatpush1.bf16.msra.mxu0 0
      %1405 = vmatprep.subr.bf16.mxu0 0
      %1406 = vmatpush1.bf16.msra.mxu0 0
      %1407 = vmatprep.mubr.bf16.mxu0 0
      %1408 = vmatmul.mubr.bf16.gmra.mrb[0].mxu0 %v1330
      %v1409 = vpop.f32.mrb[0].mxu0
      %v1410 = vadd.f32 %v1367, %v1409
      %v1411 = vpop.f32.mrb[0].mxu0
      %v1412 = vadd.f32 %v1369, %v1411
      %v1413 = vpop.f32.mrb[0].mxu0
      %v1414 = vadd.f32 %v1371, %v1413
      %v1415 = vpop.f32.mrb[0].mxu0
      %v1416 = vadd.f32 %v1373, %v1415
      %1417 = vdwg.mxu0
      %v1418 = vadd.f32 %v1082, %v1410
      %v1419 = vadd.f32 %v1084, %v1412
      %v1420 = vadd.f32 %v1086, %v1414
      %v1421 = vadd.f32 %v1088, %v1416
      %v1422 = vld [vmem:[%s373] sm:$0xff]
      %v1423 = vld [vmem:[%s373 + $0x8] sm:$0xf]
      %v1424 = vld [vmem:[%s373 + $0xc] sm:$0xff]
      %v1425 = vld [vmem:[%s373 + $0x14] sm:$0xf]
      %s1426 = scalar_lea.vmem %s3, 864
      %v1427 = vld [vmem:[%s1426] sm:$0xff]
      %v1428 = vld [vmem:[%s1426 + $0x8] sm:$0xff]
      %v1429 = vld [vmem:[%s1426 + $0x10] sm:$0xff]
      %v1430 = vld [vmem:[%s1426 + $0x18] sm:$0xff]
      %v1431 = vld [vmem:[%s1426 + $0x20] sm:$0xff]
      %v1432 = vld [vmem:[%s1426 + $0x28] sm:$0xff]
      %v1433 = vld [vmem:[%s1426 + $0x30] sm:$0xff]
      %v1434 = vld [vmem:[%s1426 + $0x38] sm:$0xff]
      %v1435 = vld [vmem:[%s1426 + $0x40] sm:$0xff]
      %v1436 = vld [vmem:[%s1426 + $0x48] sm:$0xff]
      %v1437 = vld [vmem:[%s1426 + $0x50] sm:$0xff]
      %v1438 = vld [vmem:[%s1426 + $0x58] sm:$0xff]
      %v1439 = vld [vmem:[%s1426 + $0x60] sm:$0xff]
      %v1440 = vld [vmem:[%s1426 + $0x68] sm:$0xff]
      %v1441 = vld [vmem:[%s1426 + $0x70] sm:$0xff]
      %v1442 = vld [vmem:[%s1426 + $0x78] sm:$0xff]
      %v1443 = vld [vmem:[%s1426 + $0x80] sm:$0xff]
      %v1444 = vld [vmem:[%s1426 + $0x88] sm:$0xff]
      %v1445 = vld [vmem:[%s1426 + $0x90] sm:$0xff]
      %v1446 = vld [vmem:[%s1426 + $0x98] sm:$0xff]
      %v1447 = vld [vmem:[%s1426 + $0xa0] sm:$0xff]
      %v1448 = vld [vmem:[%s1426 + $0xa8] sm:$0xff]
      %v1449 = vld [vmem:[%s1426 + $0xb0] sm:$0xff]
      %v1450 = vld [vmem:[%s1426 + $0xb8] sm:$0xff]
      %v1451 = vld [vmem:[%s1426 + $0xc0] sm:$0xff]
      %v1452 = vld [vmem:[%s1426 + $0xc8] sm:$0xff]
      %v1453 = vld [vmem:[%s1426 + $0xd0] sm:$0xff]
      %v1454 = vld [vmem:[%s1426 + $0xd8] sm:$0xff]
      %v1455 = vld [vmem:[%s1426 + $0xe0] sm:$0xff]
      %v1456 = vld [vmem:[%s1426 + $0xe8] sm:$0xff]
      %v1457 = vld [vmem:[%s1426 + $0xf0] sm:$0xff]
      %v1458 = vld [vmem:[%s1426 + $0xf8] sm:$0xff]
      %v1459 = vld [vmem:[%s1426 + $0x100] sm:$0xff]
      %v1460 = vld [vmem:[%s1426 + $0x108] sm:$0xff]
      %v1461 = vld [vmem:[%s1426 + $0x110] sm:$0xff]
      %v1462 = vld [vmem:[%s1426 + $0x118] sm:$0xff]
      %v1467 = vunpack.c.l.b16 %v1422
      %v1468 = vunpack.c.h.b16 %v1422
      %v1469 = vunpack.c.l.b16 %v1423
      %v1470 = vunpack.c.l.b16 %v1424
      %v1471 = vunpack.c.h.b16 %v1424
      %v1472 = vunpack.c.l.b16 %v1425
      %v1473 = vpack.c.b16 %v1470, %v1467
      %v1474 = vpack.c.b16 %v1471, %v1468
      %v1475 = vpack.c.b16 %v1472, %v1469
      %v1514 = vunpack.c.l.b16 %v1427
      %v1515 = vunpack.c.h.b16 %v1427
      %v1516 = vunpack.c.l.b16 %v1428
      %v1517 = vunpack.c.h.b16 %v1428
      %v1518 = vunpack.c.l.b16 %v1429
      %v1519 = vunpack.c.h.b16 %v1429
      %v1520 = vunpack.c.l.b16 %v1430
      %v1521 = vunpack.c.h.b16 %v1430
      %v1522 = vunpack.c.l.b16 %v1431
      %v1523 = vunpack.c.h.b16 %v1431
      %v1524 = vunpack.c.l.b16 %v1432
      %v1525 = vunpack.c.h.b16 %v1432
      %v1526 = vunpack.c.l.b16 %v1433
      %v1527 = vunpack.c.h.b16 %v1433
      %v1528 = vunpack.c.l.b16 %v1434
      %v1529 = vunpack.c.h.b16 %v1434
      %v1530 = vunpack.c.l.b16 %v1435
      %v1531 = vunpack.c.h.b16 %v1435
      %v1532 = vunpack.c.l.b16 %v1436
      %v1533 = vunpack.c.h.b16 %v1436
      %v1534 = vunpack.c.l.b16 %v1437
      %v1535 = vunpack.c.h.b16 %v1437
      %v1536 = vunpack.c.l.b16 %v1438
      %v1537 = vunpack.c.h.b16 %v1438
      %v1538 = vunpack.c.l.b16 %v1439
      %v1539 = vunpack.c.h.b16 %v1439
      %v1540 = vunpack.c.l.b16 %v1440
      %v1541 = vunpack.c.h.b16 %v1440
      %v1542 = vunpack.c.l.b16 %v1441
      %v1543 = vunpack.c.h.b16 %v1441
      %v1544 = vunpack.c.l.b16 %v1442
      %v1545 = vunpack.c.h.b16 %v1442
      %v1546 = vunpack.c.l.b16 %v1443
      %v1547 = vunpack.c.h.b16 %v1443
      %v1548 = vunpack.c.l.b16 %v1444
      %v1549 = vunpack.c.h.b16 %v1444
      %v1550 = vunpack.c.l.b16 %v1445
      %v1551 = vunpack.c.h.b16 %v1445
      %v1552 = vunpack.c.l.b16 %v1446
      %v1553 = vunpack.c.h.b16 %v1446
      %v1554 = vunpack.c.l.b16 %v1447
      %v1555 = vunpack.c.h.b16 %v1447
      %v1556 = vunpack.c.l.b16 %v1448
      %v1557 = vunpack.c.h.b16 %v1448
      %v1558 = vunpack.c.l.b16 %v1449
      %v1559 = vunpack.c.h.b16 %v1449
      %v1560 = vunpack.c.l.b16 %v1450
      %v1561 = vunpack.c.h.b16 %v1450
      %v1562 = vunpack.c.l.b16 %v1451
      %v1563 = vunpack.c.h.b16 %v1451
      %v1564 = vunpack.c.l.b16 %v1452
      %v1565 = vunpack.c.h.b16 %v1452
      %v1566 = vunpack.c.l.b16 %v1453
      %v1567 = vunpack.c.h.b16 %v1453
      %v1568 = vunpack.c.l.b16 %v1454
      %v1569 = vunpack.c.h.b16 %v1454
      %v1570 = vunpack.c.l.b16 %v1455
      %v1571 = vunpack.c.h.b16 %v1455
      %v1572 = vunpack.c.l.b16 %v1456
      %v1573 = vunpack.c.h.b16 %v1456
      %v1574 = vunpack.c.l.b16 %v1457
      %v1575 = vunpack.c.h.b16 %v1457
      %v1576 = vunpack.c.l.b16 %v1458
      %v1577 = vunpack.c.h.b16 %v1458
      %v1578 = vunpack.c.l.b16 %v1459
      %v1579 = vunpack.c.h.b16 %v1459
      %v1580 = vunpack.c.l.b16 %v1460
      %v1581 = vunpack.c.h.b16 %v1460
      %v1582 = vunpack.c.l.b16 %v1461
      %v1583 = vunpack.c.h.b16 %v1461
      %v1584 = vunpack.c.l.b16 %v1462
      %v1585 = vunpack.c.h.b16 %v1462
      %v1586 = vpack.c.b16 %v1516, %v1514
      %v1587 = vpack.c.b16 %v1517, %v1515
      %v1588 = vpack.c.b16 %v1520, %v1518
      %v1589 = vpack.c.b16 %v1521, %v1519
      %v1590 = vpack.c.b16 %v1524, %v1522
      %v1591 = vpack.c.b16 %v1525, %v1523
      %v1592 = vpack.c.b16 %v1528, %v1526
      %v1593 = vpack.c.b16 %v1529, %v1527
      %v1594 = vpack.c.b16 %v1532, %v1530
      %v1595 = vpack.c.b16 %v1533, %v1531
      %v1596 = vpack.c.b16 %v1536, %v1534
      %v1597 = vpack.c.b16 %v1537, %v1535
      %v1598 = vpack.c.b16 %v1540, %v1538
      %v1599 = vpack.c.b16 %v1541, %v1539
      %v1600 = vpack.c.b16 %v1544, %v1542
      %v1601 = vpack.c.b16 %v1545, %v1543
      %v1602 = vpack.c.b16 %v1548, %v1546
      %v1603 = vpack.c.b16 %v1549, %v1547
      %v1604 = vpack.c.b16 %v1552, %v1550
      %v1605 = vpack.c.b16 %v1553, %v1551
      %v1606 = vpack.c.b16 %v1556, %v1554
      %v1607 = vpack.c.b16 %v1557, %v1555
      %v1608 = vpack.c.b16 %v1560, %v1558
      %v1609 = vpack.c.b16 %v1561, %v1559
      %v1610 = vpack.c.b16 %v1564, %v1562
      %v1611 = vpack.c.b16 %v1565, %v1563
      %v1612 = vpack.c.b16 %v1568, %v1566
      %v1613 = vpack.c.b16 %v1569, %v1567
      %v1614 = vpack.c.b16 %v1572, %v1570
      %v1615 = vpack.c.b16 %v1573, %v1571
      %v1616 = vpack.c.b16 %v1576, %v1574
      %v1617 = vpack.c.b16 %v1577, %v1575
      %v1618 = vpack.c.b16 %v1580, %v1578
      %v1619 = vpack.c.b16 %v1581, %v1579
      %v1620 = vpack.c.b16 %v1584, %v1582
      %v1621 = vpack.c.b16 %v1585, %v1583
      %v1659 = vsel %vm730, %v1475, 0
      %1661 = vmatprep.subr.bf16.mxu0 %v1587
      %1662 = vmatpush1.bf16.msra.mxu0 %v1586
      %1663 = vmatprep.subr.bf16.mxu0 %v1589
      %1664 = vmatpush1.bf16.msra.mxu0 %v1588
      %1665 = vmatprep.subr.bf16.mxu0 %v1591
      %1666 = vmatpush1.bf16.msra.mxu0 %v1590
      %1667 = vmatprep.subr.bf16.mxu0 %v1593
      %1668 = vmatpush1.bf16.msra.mxu0 %v1592
      %1669 = vmatprep.subr.bf16.mxu0 %v1595
      %1670 = vmatpush1.bf16.msra.mxu0 %v1594
      %1671 = vmatprep.subr.bf16.mxu0 %v1597
      %1672 = vmatpush1.bf16.msra.mxu0 %v1596
      %1673 = vmatprep.subr.bf16.mxu0 %v1599
      %1674 = vmatpush1.bf16.msra.mxu0 %v1598
      %1675 = vmatprep.subr.bf16.mxu0 %v1601
      %1676 = vmatpush1.bf16.msra.mxu0 %v1600
      %1677 = vmatprep.subr.bf16.mxu0 %v1603
      %1678 = vmatpush1.bf16.msra.mxu0 %v1602
      %1679 = vmatprep.subr.bf16.mxu0 %v1605
      %1680 = vmatpush1.bf16.msra.mxu0 %v1604
      %1681 = vmatprep.subr.bf16.mxu0 %v1607
      %1682 = vmatpush1.bf16.msra.mxu0 %v1606
      %1683 = vmatprep.subr.bf16.mxu0 %v1609
      %1684 = vmatpush1.bf16.msra.mxu0 %v1608
      %1685 = vmatprep.subr.bf16.mxu0 %v1611
      %1686 = vmatpush1.bf16.msra.mxu0 %v1610
      %1687 = vmatprep.subr.bf16.mxu0 %v1613
      %1688 = vmatpush1.bf16.msra.mxu0 %v1612
      %1689 = vmatprep.subr.bf16.mxu0 %v1615
      %1690 = vmatpush1.bf16.msra.mxu0 %v1614
      %1691 = vmatprep.subr.bf16.mxu0 %v1617
      %1692 = vmatpush1.bf16.msra.mxu0 %v1616
      %1693 = vmatprep.mubr.bf16.mxu0 %v1474
      %1694 = vmatmul.mubr.bf16.gmra.mrb[0].mxu0 %v1473
      %v1695 = vpop.f32.mrb[0].mxu0
      %v1696 = vadd.f32 0.0, %v1695
      %v1697 = vpop.f32.mrb[0].mxu0
      %v1698 = vadd.f32 0.0, %v1697
      %v1699 = vpop.f32.mrb[0].mxu0
      %v1700 = vadd.f32 0.0, %v1699
      %v1701 = vpop.f32.mrb[0].mxu0
      %v1702 = vadd.f32 0.0, %v1701
      %1703 = vdwg.mxu0
      %1704 = vmatprep.subr.bf16.mxu0 %v1619
      %1705 = vmatpush1.bf16.msra.mxu0 %v1618
      %1706 = vmatprep.subr.bf16.mxu0 %v1621
      %1707 = vmatpush1.bf16.msra.mxu0 %v1620
      %1708 = vmatprep.subr.bf16.mxu0 0
      %1709 = vmatpush1.bf16.msra.mxu0 0
      %1710 = vmatprep.subr.bf16.mxu0 0
      %1711 = vmatpush1.bf16.msra.mxu0 0
      %1712 = vmatprep.subr.bf16.mxu0 0
      %1713 = vmatpush1.bf16.msra.mxu0 0
      %1714 = vmatprep.subr.bf16.mxu0 0
      %1715 = vmatpush1.bf16.msra.mxu0 0
      %1716 = vmatprep.subr.bf16.mxu0 0
      %1717 = vmatpush1.bf16.msra.mxu0 0
      %1718 = vmatprep.subr.bf16.mxu0 0
      %1719 = vmatpush1.bf16.msra.mxu0 0
      %1720 = vmatprep.subr.bf16.mxu0 0
      %1721 = vmatpush1.bf16.msra.mxu0 0
      %1722 = vmatprep.subr.bf16.mxu0 0
      %1723 = vmatpush1.bf16.msra.mxu0 0
      %1724 = vmatprep.subr.bf16.mxu0 0
      %1725 = vmatpush1.bf16.msra.mxu0 0
      %1726 = vmatprep.subr.bf16.mxu0 0
      %1727 = vmatpush1.bf16.msra.mxu0 0
      %1728 = vmatprep.subr.bf16.mxu0 0
      %1729 = vmatpush1.bf16.msra.mxu0 0
      %1730 = vmatprep.subr.bf16.mxu0 0
      %1731 = vmatpush1.bf16.msra.mxu0 0
      %1732 = vmatprep.subr.bf16.mxu0 0
      %1733 = vmatpush1.bf16.msra.mxu0 0
      %1734 = vmatprep.subr.bf16.mxu0 0
      %1735 = vmatpush1.bf16.msra.mxu0 0
      %1736 = vmatprep.mubr.bf16.mxu0 0
      %1737 = vmatmul.mubr.bf16.gmra.mrb[0].mxu0 %v1659
      %v1738 = vpop.f32.mrb[0].mxu0
      %v1739 = vadd.f32 %v1696, %v1738
      %v1740 = vpop.f32.mrb[0].mxu0
      %v1741 = vadd.f32 %v1698, %v1740
      %v1742 = vpop.f32.mrb[0].mxu0
      %v1743 = vadd.f32 %v1700, %v1742
      %v1744 = vpop.f32.mrb[0].mxu0
      %v1745 = vadd.f32 %v1702, %v1744
      %1746 = vdwg.mxu0
      %v1747 = vadd.f32 %v1418, %v1739
      %v1748 = vadd.f32 %v1419, %v1741
      %v1749 = vadd.f32 %v1420, %v1743
      %v1750 = vadd.f32 %v1421, %v1745
      %v1751 = vld [vmem:[%s373] sm:$0xff]
      %v1752 = vld [vmem:[%s373 + $0x8] sm:$0xf]
      %v1753 = vld [vmem:[%s373 + $0xc] sm:$0xff]
      %v1754 = vld [vmem:[%s373 + $0x14] sm:$0xf]
      %v1755 = vld [vmem:[%s373 + $0x18] sm:$0x11]
      %v1756 = vld [vmem:[%s373 + $0x20] sm:$0x1]
      %s1757 = scalar_lea.vmem %s3, 1152
      %v1758 = vld [vmem:[%s1757] sm:$0xff]
      %v1759 = vld [vmem:[%s1757 + $0x8] sm:$0xff]
      %v1760 = vld [vmem:[%s1757 + $0x10] sm:$0xff]
      %v1761 = vld [vmem:[%s1757 + $0x18] sm:$0xff]
      %v1762 = vld [vmem:[%s1757 + $0x20] sm:$0xff]
      %v1763 = vld [vmem:[%s1757 + $0x28] sm:$0xff]
      %v1764 = vld [vmem:[%s1757 + $0x30] sm:$0xff]
      %v1765 = vld [vmem:[%s1757 + $0x38] sm:$0xff]
      %v1766 = vld [vmem:[%s1757 + $0x40] sm:$0xff]
      %v1767 = vld [vmem:[%s1757 + $0x48] sm:$0xff]
      %v1768 = vld [vmem:[%s1757 + $0x50] sm:$0xff]
      %v1769 = vld [vmem:[%s1757 + $0x58] sm:$0xff]
      %v1770 = vld [vmem:[%s1757 + $0x60] sm:$0xff]
      %v1771 = vld [vmem:[%s1757 + $0x68] sm:$0xff]
      %v1772 = vld [vmem:[%s1757 + $0x70] sm:$0xff]
      %v1773 = vld [vmem:[%s1757 + $0x78] sm:$0xff]
      %v1774 = vld [vmem:[%s1757 + $0x80] sm:$0xff]
      %v1775 = vld [vmem:[%s1757 + $0x88] sm:$0xff]
      %v1776 = vld [vmem:[%s1757 + $0x90] sm:$0xff]
      %v1777 = vld [vmem:[%s1757 + $0x98] sm:$0xff]
      %v1778 = vld [vmem:[%s1757 + $0xa0] sm:$0xff]
      %v1779 = vld [vmem:[%s1757 + $0xa8] sm:$0xff]
      %v1780 = vld [vmem:[%s1757 + $0xb0] sm:$0xff]
      %v1781 = vld [vmem:[%s1757 + $0xb8] sm:$0xff]
      %v1782 = vld [vmem:[%s1757 + $0xc0] sm:$0xff]
      %v1783 = vld [vmem:[%s1757 + $0xc8] sm:$0xff]
      %v1784 = vld [vmem:[%s1757 + $0xd0] sm:$0xff]
      %v1785 = vld [vmem:[%s1757 + $0xd8] sm:$0xff]
      %v1786 = vld [vmem:[%s1757 + $0xe0] sm:$0xff]
      %v1787 = vld [vmem:[%s1757 + $0xe8] sm:$0xff]
      %v1788 = vld [vmem:[%s1757 + $0xf0] sm:$0xff]
      %v1789 = vld [vmem:[%s1757 + $0xf8] sm:$0xff]
      %v1790 = vld [vmem:[%s1757 + $0x100] sm:$0xff]
      %v1791 = vld [vmem:[%s1757 + $0x108] sm:$0xff]
      %v1792 = vld [vmem:[%s1757 + $0x110] sm:$0xff]
      %v1793 = vld [vmem:[%s1757 + $0x118] sm:$0xff]
      %v1800 = vunpack.c.l.b16 %v1751
      %v1801 = vunpack.c.h.b16 %v1751
      %v1802 = vunpack.c.l.b16 %v1752
      %v1803 = vunpack.c.l.b16 %v1753
      %v1804 = vunpack.c.h.b16 %v1753
      %v1805 = vunpack.c.l.b16 %v1754
      %v1806 = vunpack.c.l.b16 %v1755
      %v1807 = vunpack.c.h.b16 %v1755
      %v1808 = vunpack.c.l.b16 %v1756
      %v1809 = vpack.c.b16 %v1803, %v1800
      %v1810 = vpack.c.b16 %v1804, %v1801
      %v1811 = vpack.c.b16 %v1805, %v1802
      %v1812 = vpack.c.b16 %v1806, %v1806
      %v1813 = vpack.c.b16 %v1807, %v1807
      %v1814 = vpack.c.b16 %v1808, %v1808
      %v1816 = vshrl.u32 %v1809, 16
      %v1818 = vshll.u32 %v1809, 16
      %v1820 = vrot.slane %v1818, 1
      %v1821 = vor.u32 %v1816, %v1820
      %v1823 = vshll.u32 %v1812, 16
      %v1825 = vrot.slane %v1823, 1
      %v1826 = vsel %vm511, %v1821, %v1825
      %v1828 = vshrl.u32 %v1810, 16
      %v1830 = vshll.u32 %v1810, 16
      %v1832 = vrot.slane %v1830, 1
      %v1833 = vor.u32 %v1828, %v1832
      %v1835 = vshll.u32 %v1813, 16
      %v1837 = vrot.slane %v1835, 1
      %v1838 = vsel %vm511, %v1833, %v1837
      %v1840 = vshrl.u32 %v1811, 16
      %v1842 = vshll.u32 %v1811, 16
      %v1844 = vrot.slane %v1842, 1
      %v1845 = vor.u32 %v1840, %v1844
      %v1847 = vshll.u32 %v1814, 16
      %v1849 = vrot.slane %v1847, 1
      %v1850 = vsel %vm511, %v1845, %v1849
      %v1889 = vunpack.c.l.b16 %v1758
      %v1890 = vunpack.c.h.b16 %v1758
      %v1891 = vunpack.c.l.b16 %v1759
      %v1892 = vunpack.c.h.b16 %v1759
      %v1893 = vunpack.c.l.b16 %v1760
      %v1894 = vunpack.c.h.b16 %v1760
      %v1895 = vunpack.c.l.b16 %v1761
      %v1896 = vunpack.c.h.b16 %v1761
      %v1897 = vunpack.c.l.b16 %v1762
      %v1898 = vunpack.c.h.b16 %v1762
      %v1899 = vunpack.c.l.b16 %v1763
      %v1900 = vunpack.c.h.b16 %v1763
      %v1901 = vunpack.c.l.b16 %v1764
      %v1902 = vunpack.c.h.b16 %v1764
      %v1903 = vunpack.c.l.b16 %v1765
      %v1904 = vunpack.c.h.b16 %v1765
      %v1905 = vunpack.c.l.b16 %v1766
      %v1906 = vunpack.c.h.b16 %v1766
      %v1907 = vunpack.c.l.b16 %v1767
      %v1908 = vunpack.c.h.b16 %v1767
      %v1909 = vunpack.c.l.b16 %v1768
      %v1910 = vunpack.c.h.b16 %v1768
      %v1911 = vunpack.c.l.b16 %v1769
      %v1912 = vunpack.c.h.b16 %v1769
      %v1913 = vunpack.c.l.b16 %v1770
      %v1914 = vunpack.c.h.b16 %v1770
      %v1915 = vunpack.c.l.b16 %v1771
      %v1916 = vunpack.c.h.b16 %v1771
      %v1917 = vunpack.c.l.b16 %v1772
      %v1918 = vunpack.c.h.b16 %v1772
      %v1919 = vunpack.c.l.b16 %v1773
      %v1920 = vunpack.c.h.b16 %v1773
      %v1921 = vunpack.c.l.b16 %v1774
      %v1922 = vunpack.c.h.b16 %v1774
      %v1923 = vunpack.c.l.b16 %v1775
      %v1924 = vunpack.c.h.b16 %v1775
      %v1925 = vunpack.c.l.b16 %v1776
      %v1926 = vunpack.c.h.b16 %v1776
      %v1927 = vunpack.c.l.b16 %v1777
      %v1928 = vunpack.c.h.b16 %v1777
      %v1929 = vunpack.c.l.b16 %v1778
      %v1930 = vunpack.c.h.b16 %v1778
      %v1931 = vunpack.c.l.b16 %v1779
      %v1932 = vunpack.c.h.b16 %v1779
      %v1933 = vunpack.c.l.b16 %v1780
      %v1934 = vunpack.c.h.b16 %v1780
      %v1935 = vunpack.c.l.b16 %v1781
      %v1936 = vunpack.c.h.b16 %v1781
      %v1937 = vunpack.c.l.b16 %v1782
      %v1938 = vunpack.c.h.b16 %v1782
      %v1939 = vunpack.c.l.b16 %v1783
      %v1940 = vunpack.c.h.b16 %v1783
      %v1941 = vunpack.c.l.b16 %v1784
      %v1942 = vunpack.c.h.b16 %v1784
      %v1943 = vunpack.c.l.b16 %v1785
      %v1944 = vunpack.c.h.b16 %v1785
      %v1945 = vunpack.c.l.b16 %v1786
      %v1946 = vunpack.c.h.b16 %v1786
      %v1947 = vunpack.c.l.b16 %v1787
      %v1948 = vunpack.c.h.b16 %v1787
      %v1949 = vunpack.c.l.b16 %v1788
      %v1950 = vunpack.c.h.b16 %v1788
      %v1951 = vunpack.c.l.b16 %v1789
      %v1952 = vunpack.c.h.b16 %v1789
      %v1953 = vunpack.c.l.b16 %v1790
      %v1954 = vunpack.c.h.b16 %v1790
      %v1955 = vunpack.c.l.b16 %v1791
      %v1956 = vunpack.c.h.b16 %v1791
      %v1957 = vunpack.c.l.b16 %v1792
      %v1958 = vunpack.c.h.b16 %v1792
      %v1959 = vunpack.c.l.b16 %v1793
      %v1960 = vunpack.c.h.b16 %v1793
      %v1961 = vpack.c.b16 %v1891, %v1889
      %v1962 = vpack.c.b16 %v1892, %v1890
      %v1963 = vpack.c.b16 %v1895, %v1893
      %v1964 = vpack.c.b16 %v1896, %v1894
      %v1965 = vpack.c.b16 %v1899, %v1897
      %v1966 = vpack.c.b16 %v1900, %v1898
      %v1967 = vpack.c.b16 %v1903, %v1901
      %v1968 = vpack.c.b16 %v1904, %v1902
      %v1969 = vpack.c.b16 %v1907, %v1905
      %v1970 = vpack.c.b16 %v1908, %v1906
      %v1971 = vpack.c.b16 %v1911, %v1909
      %v1972 = vpack.c.b16 %v1912, %v1910
      %v1973 = vpack.c.b16 %v1915, %v1913
      %v1974 = vpack.c.b16 %v1916, %v1914
      %v1975 = vpack.c.b16 %v1919, %v1917
      %v1976 = vpack.c.b16 %v1920, %v1918
      %v1977 = vpack.c.b16 %v1923, %v1921
      %v1978 = vpack.c.b16 %v1924, %v1922
      %v1979 = vpack.c.b16 %v1927, %v1925
      %v1980 = vpack.c.b16 %v1928, %v1926
      %v1981 = vpack.c.b16 %v1931, %v1929
      %v1982 = vpack.c.b16 %v1932, %v1930
      %v1983 = vpack.c.b16 %v1935, %v1933
      %v1984 = vpack.c.b16 %v1936, %v1934
      %v1985 = vpack.c.b16 %v1939, %v1937
      %v1986 = vpack.c.b16 %v1940, %v1938
      %v1987 = vpack.c.b16 %v1943, %v1941
      %v1988 = vpack.c.b16 %v1944, %v1942
      %v1989 = vpack.c.b16 %v1947, %v1945
      %v1990 = vpack.c.b16 %v1948, %v1946
      %v1991 = vpack.c.b16 %v1951, %v1949
      %v1992 = vpack.c.b16 %v1952, %v1950
      %v1993 = vpack.c.b16 %v1955, %v1953
      %v1994 = vpack.c.b16 %v1956, %v1954
      %v1995 = vpack.c.b16 %v1959, %v1957
      %v1996 = vpack.c.b16 %v1960, %v1958
      %v2034 = vsel %vm730, %v1850, 0
      %2036 = vmatprep.subr.bf16.mxu0 %v1962
      %2037 = vmatpush1.bf16.msra.mxu0 %v1961
      %2038 = vmatprep.subr.bf16.mxu0 %v1964
      %2039 = vmatpush1.bf16.msra.mxu0 %v1963
      %2040 = vmatprep.subr.bf16.mxu0 %v1966
      %2041 = vmatpush1.bf16.msra.mxu0 %v1965
      %2042 = vmatprep.subr.bf16.mxu0 %v1968
      %2043 = vmatpush1.bf16.msra.mxu0 %v1967
      %2044 = vmatprep.subr.bf16.mxu0 %v1970
      %2045 = vmatpush1.bf16.msra.mxu0 %v1969
      %2046 = vmatprep.subr.bf16.mxu0 %v1972
      %2047 = vmatpush1.bf16.msra.mxu0 %v1971
      %2048 = vmatprep.subr.bf16.mxu0 %v1974
      %2049 = vmatpush1.bf16.msra.mxu0 %v1973
      %2050 = vmatprep.subr.bf16.mxu0 %v1976
      %2051 = vmatpush1.bf16.msra.mxu0 %v1975
      %2052 = vmatprep.subr.bf16.mxu0 %v1978
      %2053 = vmatpush1.bf16.msra.mxu0 %v1977
      %2054 = vmatprep.subr.bf16.mxu0 %v1980
      %2055 = vmatpush1.bf16.msra.mxu0 %v1979
      %2056 = vmatprep.subr.bf16.mxu0 %v1982
      %2057 = vmatpush1.bf16.msra.mxu0 %v1981
      %2058 = vmatprep.subr.bf16.mxu0 %v1984
      %2059 = vmatpush1.bf16.msra.mxu0 %v1983
      %2060 = vmatprep.subr.bf16.mxu0 %v1986
      %2061 = vmatpush1.bf16.msra.mxu0 %v1985
      %2062 = vmatprep.subr.bf16.mxu0 %v1988
      %2063 = vmatpush1.bf16.msra.mxu0 %v1987
      %2064 = vmatprep.subr.bf16.mxu0 %v1990
      %2065 = vmatpush1.bf16.msra.mxu0 %v1989
      %2066 = vmatprep.subr.bf16.mxu0 %v1992
      %2067 = vmatpush1.bf16.msra.mxu0 %v1991
      %2068 = vmatprep.mubr.bf16.mxu0 %v1838
      %2069 = vmatmul.mubr.bf16.gmra.mrb[0].mxu0 %v1826
      %v2070 = vpop.f32.mrb[0].mxu0
      %v2071 = vadd.f32 0.0, %v2070
      %v2072 = vpop.f32.mrb[0].mxu0
      %v2073 = vadd.f32 0.0, %v2072
      %v2074 = vpop.f32.mrb[0].mxu0
      %v2075 = vadd.f32 0.0, %v2074
      %v2076 = vpop.f32.mrb[0].mxu0
      %v2077 = vadd.f32 0.0, %v2076
      %2078 = vdwg.mxu0
      %2079 = vmatprep.subr.bf16.mxu0 %v1994
      %2080 = vmatpush1.bf16.msra.mxu0 %v1993
      %2081 = vmatprep.subr.bf16.mxu0 %v1996
      %2082 = vmatpush1.bf16.msra.mxu0 %v1995
      %2083 = vmatprep.subr.bf16.mxu0 0
      %2084 = vmatpush1.bf16.msra.mxu0 0
      %2085 = vmatprep.subr.bf16.mxu0 0
      %2086 = vmatpush1.bf16.msra.mxu0 0
      %2087 = vmatprep.subr.bf16.mxu0 0
      %2088 = vmatpush1.bf16.msra.mxu0 0
      %2089 = vmatprep.subr.bf16.mxu0 0
      %2090 = vmatpush1.bf16.msra.mxu0 0
      %2091 = vmatprep.subr.bf16.mxu0 0
      %2092 = vmatpush1.bf16.msra.mxu0 0
      %2093 = vmatprep.subr.bf16.mxu0 0
      %2094 = vmatpush1.bf16.msra.mxu0 0
      %2095 = vmatprep.subr.bf16.mxu0 0
      %2096 = vmatpush1.bf16.msra.mxu0 0
      %2097 = vmatprep.subr.bf16.mxu0 0
      %2098 = vmatpush1.bf16.msra.mxu0 0
      %2099 = vmatprep.subr.bf16.mxu0 0
      %2100 = vmatpush1.bf16.msra.mxu0 0
      %2101 = vmatprep.subr.bf16.mxu0 0
      %2102 = vmatpush1.bf16.msra.mxu0 0
      %2103 = vmatprep.subr.bf16.mxu0 0
      %2104 = vmatpush1.bf16.msra.mxu0 0
      %2105 = vmatprep.subr.bf16.mxu0 0
      %2106 = vmatpush1.bf16.msra.mxu0 0
      %2107 = vmatprep.subr.bf16.mxu0 0
      %2108 = vmatpush1.bf16.msra.mxu0 0
      %2109 = vmatprep.subr.bf16.mxu0 0
      %2110 = vmatpush1.bf16.msra.mxu0 0
      %2111 = vmatprep.mubr.bf16.mxu0 0
      %2112 = vmatmul.mubr.bf16.gmra.mrb[0].mxu0 %v2034
      %v2113 = vpop.f32.mrb[0].mxu0
      %v2114 = vadd.f32 %v2071, %v2113
      %v2115 = vpop.f32.mrb[0].mxu0
      %v2116 = vadd.f32 %v2073, %v2115
      %v2117 = vpop.f32.mrb[0].mxu0
      %v2118 = vadd.f32 %v2075, %v2117
      %v2119 = vpop.f32.mrb[0].mxu0
      %v2120 = vadd.f32 %v2077, %v2119
      %2121 = vdwg.mxu0
      %v2122 = vadd.f32 %v1747, %v2114
      %v2123 = vadd.f32 %v1748, %v2116
      %v2124 = vadd.f32 %v1749, %v2118
      %v2125 = vadd.f32 %v1750, %v2120
      %v2126 = vld [vmem:[%s373] sm:$0xee]
      %v2127 = vld [vmem:[%s373 + $0x8] sm:$0xe]
      %s2128 = scalar_lea.vmem %s3, 1440
      %v2129 = vld [vmem:[%s2128] sm:$0xff]
      %v2130 = vld [vmem:[%s2128 + $0x8] sm:$0xff]
      %v2131 = vld [vmem:[%s2128 + $0x10] sm:$0xff]
      %v2132 = vld [vmem:[%s2128 + $0x18] sm:$0xff]
      %v2133 = vld [vmem:[%s2128 + $0x20] sm:$0xff]
      %v2134 = vld [vmem:[%s2128 + $0x28] sm:$0xff]
      %v2135 = vld [vmem:[%s2128 + $0x30] sm:$0xff]
      %v2136 = vld [vmem:[%s2128 + $0x38] sm:$0xff]
      %v2137 = vld [vmem:[%s2128 + $0x40] sm:$0xff]
      %v2138 = vld [vmem:[%s2128 + $0x48] sm:$0xff]
      %v2139 = vld [vmem:[%s2128 + $0x50] sm:$0xff]
      %v2140 = vld [vmem:[%s2128 + $0x58] sm:$0xff]
      %v2141 = vld [vmem:[%s2128 + $0x60] sm:$0xff]
      %v2142 = vld [vmem:[%s2128 + $0x68] sm:$0xff]
      %v2143 = vld [vmem:[%s2128 + $0x70] sm:$0xff]
      %v2144 = vld [vmem:[%s2128 + $0x78] sm:$0xff]
      %v2145 = vld [vmem:[%s2128 + $0x80] sm:$0xff]
      %v2146 = vld [vmem:[%s2128 + $0x88] sm:$0xff]
      %v2147 = vld [vmem:[%s2128 + $0x90] sm:$0xff]
      %v2148 = vld [vmem:[%s2128 + $0x98] sm:$0xff]
      %v2149 = vld [vmem:[%s2128 + $0xa0] sm:$0xff]
      %v2150 = vld [vmem:[%s2128 + $0xa8] sm:$0xff]
      %v2151 = vld [vmem:[%s2128 + $0xb0] sm:$0xff]
      %v2152 = vld [vmem:[%s2128 + $0xb8] sm:$0xff]
      %v2153 = vld [vmem:[%s2128 + $0xc0] sm:$0xff]
      %v2154 = vld [vmem:[%s2128 + $0xc8] sm:$0xff]
      %v2155 = vld [vmem:[%s2128 + $0xd0] sm:$0xff]
      %v2156 = vld [vmem:[%s2128 + $0xd8] sm:$0xff]
      %v2157 = vld [vmem:[%s2128 + $0xe0] sm:$0xff]
      %v2158 = vld [vmem:[%s2128 + $0xe8] sm:$0xff]
      %v2159 = vld [vmem:[%s2128 + $0xf0] sm:$0xff]
      %v2160 = vld [vmem:[%s2128 + $0xf8] sm:$0xff]
      %v2161 = vld [vmem:[%s2128 + $0x100] sm:$0xff]
      %v2162 = vld [vmem:[%s2128 + $0x108] sm:$0xff]
      %v2163 = vld [vmem:[%s2128 + $0x110] sm:$0xff]
      %v2164 = vld [vmem:[%s2128 + $0x118] sm:$0xff]
      %v2167 = vunpack.c.l.b16 %v2126
      %v2168 = vunpack.c.h.b16 %v2126
      %v2169 = vunpack.c.l.b16 %v2127
      %v2170 = vpack.c.b16 %v1803, %v2167
      %v2171 = vpack.c.b16 %v1804, %v2168
      %v2172 = vpack.c.b16 %v1805, %v2169
      %v2173 = vrot.slane %v2170, 1
      %v2174 = vrot.slane %v1812, 1
      %v2175 = vsel %vm1137, %v2173, %v2174
      %v2176 = vrot.slane %v2171, 1
      %v2177 = vrot.slane %v1813, 1
      %v2178 = vsel %vm1137, %v2176, %v2177
      %v2179 = vrot.slane %v2172, 1
      %v2180 = vrot.slane %v1814, 1
      %v2181 = vsel %vm1137, %v2179, %v2180
      %v2220 = vunpack.c.l.b16 %v2129
      %v2221 = vunpack.c.h.b16 %v2129
      %v2222 = vunpack.c.l.b16 %v2130
      %v2223 = vunpack.c.h.b16 %v2130
      %v2224 = vunpack.c.l.b16 %v2131
      %v2225 = vunpack.c.h.b16 %v2131
      %v2226 = vunpack.c.l.b16 %v2132
      %v2227 = vunpack.c.h.b16 %v2132
      %v2228 = vunpack.c.l.b16 %v2133
      %v2229 = vunpack.c.h.b16 %v2133
      %v2230 = vunpack.c.l.b16 %v2134
      %v2231 = vunpack.c.h.b16 %v2134
      %v2232 = vunpack.c.l.b16 %v2135
      %v2233 = vunpack.c.h.b16 %v2135
      %v2234 = vunpack.c.l.b16 %v2136
      %v2235 = vunpack.c.h.b16 %v2136
      %v2236 = vunpack.c.l.b16 %v2137
      %v2237 = vunpack.c.h.b16 %v2137
      %v2238 = vunpack.c.l.b16 %v2138
      %v2239 = vunpack.c.h.b16 %v2138
      %v2240 = vunpack.c.l.b16 %v2139
      %v2241 = vunpack.c.h.b16 %v2139
      %v2242 = vunpack.c.l.b16 %v2140
      %v2243 = vunpack.c.h.b16 %v2140
      %v2244 = vunpack.c.l.b16 %v2141
      %v2245 = vunpack.c.h.b16 %v2141
      %v2246 = vunpack.c.l.b16 %v2142
      %v2247 = vunpack.c.h.b16 %v2142
      %v2248 = vunpack.c.l.b16 %v2143
      %v2249 = vunpack.c.h.b16 %v2143
      %v2250 = vunpack.c.l.b16 %v2144
      %v2251 = vunpack.c.h.b16 %v2144
      %v2252 = vunpack.c.l.b16 %v2145
      %v2253 = vunpack.c.h.b16 %v2145
      %v2254 = vunpack.c.l.b16 %v2146
      %v2255 = vunpack.c.h.b16 %v2146
      %v2256 = vunpack.c.l.b16 %v2147
      %v2257 = vunpack.c.h.b16 %v2147
      %v2258 = vunpack.c.l.b16 %v2148
      %v2259 = vunpack.c.h.b16 %v2148
      %v2260 = vunpack.c.l.b16 %v2149
      %v2261 = vunpack.c.h.b16 %v2149
      %v2262 = vunpack.c.l.b16 %v2150
      %v2263 = vunpack.c.h.b16 %v2150
      %v2264 = vunpack.c.l.b16 %v2151
      %v2265 = vunpack.c.h.b16 %v2151
      %v2266 = vunpack.c.l.b16 %v2152
      %v2267 = vunpack.c.h.b16 %v2152
      %v2268 = vunpack.c.l.b16 %v2153
      %v2269 = vunpack.c.h.b16 %v2153
      %v2270 = vunpack.c.l.b16 %v2154
      %v2271 = vunpack.c.h.b16 %v2154
      %v2272 = vunpack.c.l.b16 %v2155
      %v2273 = vunpack.c.h.b16 %v2155
      %v2274 = vunpack.c.l.b16 %v2156
      %v2275 = vunpack.c.h.b16 %v2156
      %v2276 = vunpack.c.l.b16 %v2157
      %v2277 = vunpack.c.h.b16 %v2157
      %v2278 = vunpack.c.l.b16 %v2158
      %v2279 = vunpack.c.h.b16 %v2158
      %v2280 = vunpack.c.l.b16 %v2159
      %v2281 = vunpack.c.h.b16 %v2159
      %v2282 = vunpack.c.l.b16 %v2160
      %v2283 = vunpack.c.h.b16 %v2160
      %v2284 = vunpack.c.l.b16 %v2161
      %v2285 = vunpack.c.h.b16 %v2161
      %v2286 = vunpack.c.l.b16 %v2162
      %v2287 = vunpack.c.h.b16 %v2162
      %v2288 = vunpack.c.l.b16 %v2163
      %v2289 = vunpack.c.h.b16 %v2163
      %v2290 = vunpack.c.l.b16 %v2164
      %v2291 = vunpack.c.h.b16 %v2164
      %v2292 = vpack.c.b16 %v2222, %v2220
      %v2293 = vpack.c.b16 %v2223, %v2221
      %v2294 = vpack.c.b16 %v2226, %v2224
      %v2295 = vpack.c.b16 %v2227, %v2225
      %v2296 = vpack.c.b16 %v2230, %v2228
      %v2297 = vpack.c.b16 %v2231, %v2229
      %v2298 = vpack.c.b16 %v2234, %v2232
      %v2299 = vpack.c.b16 %v2235, %v2233
      %v2300 = vpack.c.b16 %v2238, %v2236
      %v2301 = vpack.c.b16 %v2239, %v2237
      %v2302 = vpack.c.b16 %v2242, %v2240
      %v2303 = vpack.c.b16 %v2243, %v2241
      %v2304 = vpack.c.b16 %v2246, %v2244
      %v2305 = vpack.c.b16 %v2247, %v2245
      %v2306 = vpack.c.b16 %v2250, %v2248
      %v2307 = vpack.c.b16 %v2251, %v2249
      %v2308 = vpack.c.b16 %v2254, %v2252
      %v2309 = vpack.c.b16 %v2255, %v2253
      %v2310 = vpack.c.b16 %v2258, %v2256
      %v2311 = vpack.c.b16 %v2259, %v2257
      %v2312 = vpack.c.b16 %v2262, %v2260
      %v2313 = vpack.c.b16 %v2263, %v2261
      %v2314 = vpack.c.b16 %v2266, %v2264
      %v2315 = vpack.c.b16 %v2267, %v2265
      %v2316 = vpack.c.b16 %v2270, %v2268
      %v2317 = vpack.c.b16 %v2271, %v2269
      %v2318 = vpack.c.b16 %v2274, %v2272
      %v2319 = vpack.c.b16 %v2275, %v2273
      %v2320 = vpack.c.b16 %v2278, %v2276
      %v2321 = vpack.c.b16 %v2279, %v2277
      %v2322 = vpack.c.b16 %v2282, %v2280
      %v2323 = vpack.c.b16 %v2283, %v2281
      %v2324 = vpack.c.b16 %v2286, %v2284
      %v2325 = vpack.c.b16 %v2287, %v2285
      %v2326 = vpack.c.b16 %v2290, %v2288
      %v2327 = vpack.c.b16 %v2291, %v2289
      %v2365 = vsel %vm730, %v2181, 0
      %2367 = vmatprep.subr.bf16.mxu0 %v2293
      %2368 = vmatpush1.bf16.msra.mxu0 %v2292
      %2369 = vmatprep.subr.bf16.mxu0 %v2295
      %2370 = vmatpush1.bf16.msra.mxu0 %v2294
      %2371 = vmatprep.subr.bf16.mxu0 %v2297
      %2372 = vmatpush1.bf16.msra.mxu0 %v2296
      %2373 = vmatprep.subr.bf16.mxu0 %v2299
      %2374 = vmatpush1.bf16.msra.mxu0 %v2298
      %2375 = vmatprep.subr.bf16.mxu0 %v2301
      %2376 = vmatpush1.bf16.msra.mxu0 %v2300
      %2377 = vmatprep.subr.bf16.mxu0 %v2303
      %2378 = vmatpush1.bf16.msra.mxu0 %v2302
      %2379 = vmatprep.subr.bf16.mxu0 %v2305
      %2380 = vmatpush1.bf16.msra.mxu0 %v2304
      %2381 = vmatprep.subr.bf16.mxu0 %v2307
      %2382 = vmatpush1.bf16.msra.mxu0 %v2306
      %2383 = vmatprep.subr.bf16.mxu0 %v2309
      %2384 = vmatpush1.bf16.msra.mxu0 %v2308
      %2385 = vmatprep.subr.bf16.mxu0 %v2311
      %2386 = vmatpush1.bf16.msra.mxu0 %v2310
      %2387 = vmatprep.subr.bf16.mxu0 %v2313
      %2388 = vmatpush1.bf16.msra.mxu0 %v2312
      %2389 = vmatprep.subr.bf16.mxu0 %v2315
      %2390 = vmatpush1.bf16.msra.mxu0 %v2314
      %2391 = vmatprep.subr.bf16.mxu0 %v2317
      %2392 = vmatpush1.bf16.msra.mxu0 %v2316
      %2393 = vmatprep.subr.bf16.mxu0 %v2319
      %2394 = vmatpush1.bf16.msra.mxu0 %v2318
      %2395 = vmatprep.subr.bf16.mxu0 %v2321
      %2396 = vmatpush1.bf16.msra.mxu0 %v2320
      %2397 = vmatprep.subr.bf16.mxu0 %v2323
      %2398 = vmatpush1.bf16.msra.mxu0 %v2322
      %2399 = vmatprep.mubr.bf16.mxu0 %v2178
      %2400 = vmatmul.mubr.bf16.gmra.mrb[0].mxu0 %v2175
      %v2401 = vpop.f32.mrb[0].mxu0
      %v2402 = vadd.f32 0.0, %v2401
      %v2403 = vpop.f32.mrb[0].mxu0
      %v2404 = vadd.f32 0.0, %v2403
      %v2405 = vpop.f32.mrb[0].mxu0
      %v2406 = vadd.f32 0.0, %v2405
      %v2407 = vpop.f32.mrb[0].mxu0
      %v2408 = vadd.f32 0.0, %v2407
      %2409 = vdwg.mxu0
      %2410 = vmatprep.subr.bf16.mxu0 %v2325
      %2411 = vmatpush1.bf16.msra.mxu0 %v2324
      %2412 = vmatprep.subr.bf16.mxu0 %v2327
      %2413 = vmatpush1.bf16.msra.mxu0 %v2326
      %2414 = vmatprep.subr.bf16.mxu0 0
      %2415 = vmatpush1.bf16.msra.mxu0 0
      %2416 = vmatprep.subr.bf16.mxu0 0
      %2417 = vmatpush1.bf16.msra.mxu0 0
      %2418 = vmatprep.subr.bf16.mxu0 0
      %2419 = vmatpush1.bf16.msra.mxu0 0
      %2420 = vmatprep.subr.bf16.mxu0 0
      %2421 = vmatpush1.bf16.msra.mxu0 0
      %2422 = vmatprep.subr.bf16.mxu0 0
      %2423 = vmatpush1.bf16.msra.mxu0 0
      %2424 = vmatprep.subr.bf16.mxu0 0
      %2425 = vmatpush1.bf16.msra.mxu0 0
      %2426 = vmatprep.subr.bf16.mxu0 0
      %2427 = vmatpush1.bf16.msra.mxu0 0
      %2428 = vmatprep.subr.bf16.mxu0 0
      %2429 = vmatpush1.bf16.msra.mxu0 0
      %2430 = vmatprep.subr.bf16.mxu0 0
      %2431 = vmatpush1.bf16.msra.mxu0 0
      %2432 = vmatprep.subr.bf16.mxu0 0
      %2433 = vmatpush1.bf16.msra.mxu0 0
      %2434 = vmatprep.subr.bf16.mxu0 0
      %2435 = vmatpush1.bf16.msra.mxu0 0
      %2436 = vmatprep.subr.bf16.mxu0 0
      %2437 = vmatpush1.bf16.msra.mxu0 0
      %2438 = vmatprep.subr.bf16.mxu0 0
      %2439 = vmatpush1.bf16.msra.mxu0 0
      %2440 = vmatprep.subr.bf16.mxu0 0
      %2441 = vmatpush1.bf16.msra.mxu0 0
      %2442 = vmatprep.mubr.bf16.mxu0 0
      %2443 = vmatmul.mubr.bf16.gmra.mrb[0].mxu0 %v2365
      %v2444 = vpop.f32.mrb[0].mxu0
      %v2445 = vadd.f32 %v2402, %v2444
      %v2446 = vpop.f32.mrb[0].mxu0
      %v2447 = vadd.f32 %v2404, %v2446
      %v2448 = vpop.f32.mrb[0].mxu0
      %v2449 = vadd.f32 %v2406, %v2448
      %v2450 = vpop.f32.mrb[0].mxu0
      %v2451 = vadd.f32 %v2408, %v2450
      %2452 = vdwg.mxu0
      %v2453 = vadd.f32 %v2122, %v2445
      %v2454 = vadd.f32 %v2123, %v2447
      %v2455 = vadd.f32 %v2124, %v2449
      %v2456 = vadd.f32 %v2125, %v2451
      %v2457 = vld [vmem:[%s384] sm:$0xff]
      %v2458 = vld [vmem:[%s384 + $0x8] sm:$0xf]
      %v2459 = vld [vmem:[%s384 + $0xc] sm:$0xff]
      %v2460 = vld [vmem:[%s384 + $0x14] sm:$0xf]
      %s2461 = scalar_lea.vmem %s3, 1728
      %v2462 = vld [vmem:[%s2461] sm:$0xff]
      %v2463 = vld [vmem:[%s2461 + $0x8] sm:$0xff]
      %v2464 = vld [vmem:[%s2461 + $0x10] sm:$0xff]
      %v2465 = vld [vmem:[%s2461 + $0x18] sm:$0xff]
      %v2466 = vld [vmem:[%s2461 + $0x20] sm:$0xff]
      %v2467 = vld [vmem:[%s2461 + $0x28] sm:$0xff]
      %v2468 = vld [vmem:[%s2461 + $0x30] sm:$0xff]
      %v2469 = vld [vmem:[%s2461 + $0x38] sm:$0xff]
      %v2470 = vld [vmem:[%s2461 + $0x40] sm:$0xff]
      %v2471 = vld [vmem:[%s2461 + $0x48] sm:$0xff]
      %v2472 = vld [vmem:[%s2461 + $0x50] sm:$0xff]
      %v2473 = vld [vmem:[%s2461 + $0x58] sm:$0xff]
      %v2474 = vld [vmem:[%s2461 + $0x60] sm:$0xff]
      %v2475 = vld [vmem:[%s2461 + $0x68] sm:$0xff]
      %v2476 = vld [vmem:[%s2461 + $0x70] sm:$0xff]
      %v2477 = vld [vmem:[%s2461 + $0x78] sm:$0xff]
      %v2478 = vld [vmem:[%s2461 + $0x80] sm:$0xff]
      %v2479 = vld [vmem:[%s2461 + $0x88] sm:$0xff]
      %v2480 = vld [vmem:[%s2461 + $0x90] sm:$0xff]
      %v2481 = vld [vmem:[%s2461 + $0x98] sm:$0xff]
      %v2482 = vld [vmem:[%s2461 + $0xa0] sm:$0xff]
      %v2483 = vld [vmem:[%s2461 + $0xa8] sm:$0xff]
      %v2484 = vld [vmem:[%s2461 + $0xb0] sm:$0xff]
      %v2485 = vld [vmem:[%s2461 + $0xb8] sm:$0xff]
      %v2486 = vld [vmem:[%s2461 + $0xc0] sm:$0xff]
      %v2487 = vld [vmem:[%s2461 + $0xc8] sm:$0xff]
      %v2488 = vld [vmem:[%s2461 + $0xd0] sm:$0xff]
      %v2489 = vld [vmem:[%s2461 + $0xd8] sm:$0xff]
      %v2490 = vld [vmem:[%s2461 + $0xe0] sm:$0xff]
      %v2491 = vld [vmem:[%s2461 + $0xe8] sm:$0xff]
      %v2492 = vld [vmem:[%s2461 + $0xf0] sm:$0xff]
      %v2493 = vld [vmem:[%s2461 + $0xf8] sm:$0xff]
      %v2494 = vld [vmem:[%s2461 + $0x100] sm:$0xff]
      %v2495 = vld [vmem:[%s2461 + $0x108] sm:$0xff]
      %v2496 = vld [vmem:[%s2461 + $0x110] sm:$0xff]
      %v2497 = vld [vmem:[%s2461 + $0x118] sm:$0xff]
      %v2502 = vunpack.c.l.b16 %v2457
      %v2503 = vunpack.c.h.b16 %v2457
      %v2504 = vunpack.c.l.b16 %v2458
      %v2505 = vunpack.c.l.b16 %v2459
      %v2506 = vunpack.c.h.b16 %v2459
      %v2507 = vunpack.c.l.b16 %v2460
      %v2508 = vpack.c.b16 %v2505, %v2502
      %v2509 = vpack.c.b16 %v2506, %v2503
      %v2510 = vpack.c.b16 %v2507, %v2504
      %v2549 = vunpack.c.l.b16 %v2462
      %v2550 = vunpack.c.h.b16 %v2462
      %v2551 = vunpack.c.l.b16 %v2463
      %v2552 = vunpack.c.h.b16 %v2463
      %v2553 = vunpack.c.l.b16 %v2464
      %v2554 = vunpack.c.h.b16 %v2464
      %v2555 = vunpack.c.l.b16 %v2465
      %v2556 = vunpack.c.h.b16 %v2465
      %v2557 = vunpack.c.l.b16 %v2466
      %v2558 = vunpack.c.h.b16 %v2466
      %v2559 = vunpack.c.l.b16 %v2467
      %v2560 = vunpack.c.h.b16 %v2467
      %v2561 = vunpack.c.l.b16 %v2468
      %v2562 = vunpack.c.h.b16 %v2468
      %v2563 = vunpack.c.l.b16 %v2469
      %v2564 = vunpack.c.h.b16 %v2469
      %v2565 = vunpack.c.l.b16 %v2470
      %v2566 = vunpack.c.h.b16 %v2470
      %v2567 = vunpack.c.l.b16 %v2471
      %v2568 = vunpack.c.h.b16 %v2471
      %v2569 = vunpack.c.l.b16 %v2472
      %v2570 = vunpack.c.h.b16 %v2472
      %v2571 = vunpack.c.l.b16 %v2473
      %v2572 = vunpack.c.h.b16 %v2473
      %v2573 = vunpack.c.l.b16 %v2474
      %v2574 = vunpack.c.h.b16 %v2474
      %v2575 = vunpack.c.l.b16 %v2475
      %v2576 = vunpack.c.h.b16 %v2475
      %v2577 = vunpack.c.l.b16 %v2476
      %v2578 = vunpack.c.h.b16 %v2476
      %v2579 = vunpack.c.l.b16 %v2477
      %v2580 = vunpack.c.h.b16 %v2477
      %v2581 = vunpack.c.l.b16 %v2478
      %v2582 = vunpack.c.h.b16 %v2478
      %v2583 = vunpack.c.l.b16 %v2479
      %v2584 = vunpack.c.h.b16 %v2479
      %v2585 = vunpack.c.l.b16 %v2480
      %v2586 = vunpack.c.h.b16 %v2480
      %v2587 = vunpack.c.l.b16 %v2481
      %v2588 = vunpack.c.h.b16 %v2481
      %v2589 = vunpack.c.l.b16 %v2482
      %v2590 = vunpack.c.h.b16 %v2482
      %v2591 = vunpack.c.l.b16 %v2483
      %v2592 = vunpack.c.h.b16 %v2483
      %v2593 = vunpack.c.l.b16 %v2484
      %v2594 = vunpack.c.h.b16 %v2484
      %v2595 = vunpack.c.l.b16 %v2485
      %v2596 = vunpack.c.h.b16 %v2485
      %v2597 = vunpack.c.l.b16 %v2486
      %v2598 = vunpack.c.h.b16 %v2486
      %v2599 = vunpack.c.l.b16 %v2487
      %v2600 = vunpack.c.h.b16 %v2487
      %v2601 = vunpack.c.l.b16 %v2488
      %v2602 = vunpack.c.h.b16 %v2488
      %v2603 = vunpack.c.l.b16 %v2489
      %v2604 = vunpack.c.h.b16 %v2489
      %v2605 = vunpack.c.l.b16 %v2490
      %v2606 = vunpack.c.h.b16 %v2490
      %v2607 = vunpack.c.l.b16 %v2491
      %v2608 = vunpack.c.h.b16 %v2491
      %v2609 = vunpack.c.l.b16 %v2492
      %v2610 = vunpack.c.h.b16 %v2492
      %v2611 = vunpack.c.l.b16 %v2493
      %v2612 = vunpack.c.h.b16 %v2493
      %v2613 = vunpack.c.l.b16 %v2494
      %v2614 = vunpack.c.h.b16 %v2494
      %v2615 = vunpack.c.l.b16 %v2495
      %v2616 = vunpack.c.h.b16 %v2495
      %v2617 = vunpack.c.l.b16 %v2496
      %v2618 = vunpack.c.h.b16 %v2496
      %v2619 = vunpack.c.l.b16 %v2497
      %v2620 = vunpack.c.h.b16 %v2497
      %v2621 = vpack.c.b16 %v2551, %v2549
      %v2622 = vpack.c.b16 %v2552, %v2550
      %v2623 = vpack.c.b16 %v2555, %v2553
      %v2624 = vpack.c.b16 %v2556, %v2554
      %v2625 = vpack.c.b16 %v2559, %v2557
      %v2626 = vpack.c.b16 %v2560, %v2558
      %v2627 = vpack.c.b16 %v2563, %v2561
      %v2628 = vpack.c.b16 %v2564, %v2562
      %v2629 = vpack.c.b16 %v2567, %v2565
      %v2630 = vpack.c.b16 %v2568, %v2566
      %v2631 = vpack.c.b16 %v2571, %v2569
      %v2632 = vpack.c.b16 %v2572, %v2570
      %v2633 = vpack.c.b16 %v2575, %v2573
      %v2634 = vpack.c.b16 %v2576, %v2574
      %v2635 = vpack.c.b16 %v2579, %v2577
      %v2636 = vpack.c.b16 %v2580, %v2578
      %v2637 = vpack.c.b16 %v2583, %v2581
      %v2638 = vpack.c.b16 %v2584, %v2582
      %v2639 = vpack.c.b16 %v2587, %v2585
      %v2640 = vpack.c.b16 %v2588, %v2586
      %v2641 = vpack.c.b16 %v2591, %v2589
      %v2642 = vpack.c.b16 %v2592, %v2590
      %v2643 = vpack.c.b16 %v2595, %v2593
      %v2644 = vpack.c.b16 %v2596, %v2594
      %v2645 = vpack.c.b16 %v2599, %v2597
      %v2646 = vpack.c.b16 %v2600, %v2598
      %v2647 = vpack.c.b16 %v2603, %v2601
      %v2648 = vpack.c.b16 %v2604, %v2602
      %v2649 = vpack.c.b16 %v2607, %v2605
      %v2650 = vpack.c.b16 %v2608, %v2606
      %v2651 = vpack.c.b16 %v2611, %v2609
      %v2652 = vpack.c.b16 %v2612, %v2610
      %v2653 = vpack.c.b16 %v2615, %v2613
      %v2654 = vpack.c.b16 %v2616, %v2614
      %v2655 = vpack.c.b16 %v2619, %v2617
      %v2656 = vpack.c.b16 %v2620, %v2618
      %v2694 = vsel %vm730, %v2510, 0
      %2696 = vmatprep.subr.bf16.mxu0 %v2622
      %2697 = vmatpush1.bf16.msra.mxu0 %v2621
      %2698 = vmatprep.subr.bf16.mxu0 %v2624
      %2699 = vmatpush1.bf16.msra.mxu0 %v2623
      %2700 = vmatprep.subr.bf16.mxu0 %v2626
      %2701 = vmatpush1.bf16.msra.mxu0 %v2625
      %2702 = vmatprep.subr.bf16.mxu0 %v2628
      %2703 = vmatpush1.bf16.msra.mxu0 %v2627
      %2704 = vmatprep.subr.bf16.mxu0 %v2630
      %2705 = vmatpush1.bf16.msra.mxu0 %v2629
      %2706 = vmatprep.subr.bf16.mxu0 %v2632
      %2707 = vmatpush1.bf16.msra.mxu0 %v2631
      %2708 = vmatprep.subr.bf16.mxu0 %v2634
      %2709 = vmatpush1.bf16.msra.mxu0 %v2633
      %2710 = vmatprep.subr.bf16.mxu0 %v2636
      %2711 = vmatpush1.bf16.msra.mxu0 %v2635
      %2712 = vmatprep.subr.bf16.mxu0 %v2638
      %2713 = vmatpush1.bf16.msra.mxu0 %v2637
      %2714 = vmatprep.subr.bf16.mxu0 %v2640
      %2715 = vmatpush1.bf16.msra.mxu0 %v2639
      %2716 = vmatprep.subr.bf16.mxu0 %v2642
      %2717 = vmatpush1.bf16.msra.mxu0 %v2641
      %2718 = vmatprep.subr.bf16.mxu0 %v2644
      %2719 = vmatpush1.bf16.msra.mxu0 %v2643
      %2720 = vmatprep.subr.bf16.mxu0 %v2646
      %2721 = vmatpush1.bf16.msra.mxu0 %v2645
      %2722 = vmatprep.subr.bf16.mxu0 %v2648
      %2723 = vmatpush1.bf16.msra.mxu0 %v2647
      %2724 = vmatprep.subr.bf16.mxu0 %v2650
      %2725 = vmatpush1.bf16.msra.mxu0 %v2649
      %2726 = vmatprep.subr.bf16.mxu0 %v2652
      %2727 = vmatpush1.bf16.msra.mxu0 %v2651
      %2728 = vmatprep.mubr.bf16.mxu0 %v2509
      %2729 = vmatmul.mubr.bf16.gmra.mrb[0].mxu0 %v2508
      %v2730 = vpop.f32.mrb[0].mxu0
      %v2731 = vadd.f32 0.0, %v2730
      %v2732 = vpop.f32.mrb[0].mxu0
      %v2733 = vadd.f32 0.0, %v2732
      %v2734 = vpop.f32.mrb[0].mxu0
      %v2735 = vadd.f32 0.0, %v2734
      %v2736 = vpop.f32.mrb[0].mxu0
      %v2737 = vadd.f32 0.0, %v2736
      %2738 = vdwg.mxu0
      %2739 = vmatprep.subr.bf16.mxu0 %v2654
      %2740 = vmatpush1.bf16.msra.mxu0 %v2653
      %2741 = vmatprep.subr.bf16.mxu0 %v2656
      %2742 = vmatpush1.bf16.msra.mxu0 %v2655
      %2743 = vmatprep.subr.bf16.mxu0 0
      %2744 = vmatpush1.bf16.msra.mxu0 0
      %2745 = vmatprep.subr.bf16.mxu0 0
      %2746 = vmatpush1.bf16.msra.mxu0 0
      %2747 = vmatprep.subr.bf16.mxu0 0
      %2748 = vmatpush1.bf16.msra.mxu0 0
      %2749 = vmatprep.subr.bf16.mxu0 0
      %2750 = vmatpush1.bf16.msra.mxu0 0
      %2751 = vmatprep.subr.bf16.mxu0 0
      %2752 = vmatpush1.bf16.msra.mxu0 0
      %2753 = vmatprep.subr.bf16.mxu0 0
      %2754 = vmatpush1.bf16.msra.mxu0 0
      %2755 = vmatprep.subr.bf16.mxu0 0
      %2756 = vmatpush1.bf16.msra.mxu0 0
      %2757 = vmatprep.subr.bf16.mxu0 0
      %2758 = vmatpush1.bf16.msra.mxu0 0
      %2759 = vmatprep.subr.bf16.mxu0 0
      %2760 = vmatpush1.bf16.msra.mxu0 0
      %2761 = vmatprep.subr.bf16.mxu0 0
      %2762 = vmatpush1.bf16.msra.mxu0 0
      %2763 = vmatprep.subr.bf16.mxu0 0
      %2764 = vmatpush1.bf16.msra.mxu0 0
      %2765 = vmatprep.subr.bf16.mxu0 0
      %2766 = vmatpush1.bf16.msra.mxu0 0
      %2767 = vmatprep.subr.bf16.mxu0 0
      %2768 = vmatpush1.bf16.msra.mxu0 0
      %2769 = vmatprep.subr.bf16.mxu0 0
      %2770 = vmatpush1.bf16.msra.mxu0 0
      %2771 = vmatprep.mubr.bf16.mxu0 0
      %2772 = vmatmul.mubr.bf16.gmra.mrb[0].mxu0 %v2694
      %v2773 = vpop.f32.mrb[0].mxu0
      %v2774 = vadd.f32 %v2731, %v2773
      %v2775 = vpop.f32.mrb[0].mxu0
      %v2776 = vadd.f32 %v2733, %v2775
      %v2777 = vpop.f32.mrb[0].mxu0
      %v2778 = vadd.f32 %v2735, %v2777
      %v2779 = vpop.f32.mrb[0].mxu0
      %v2780 = vadd.f32 %v2737, %v2779
      %2781 = vdwg.mxu0
      %v2782 = vadd.f32 %v2453, %v2774
      %v2783 = vadd.f32 %v2454, %v2776
      %v2784 = vadd.f32 %v2455, %v2778
      %v2785 = vadd.f32 %v2456, %v2780
      %v2786 = vld [vmem:[%s384] sm:$0xff]
      %v2787 = vld [vmem:[%s384 + $0x8] sm:$0xf]
      %v2788 = vld [vmem:[%s384 + $0xc] sm:$0xff]
      %v2789 = vld [vmem:[%s384 + $0x14] sm:$0xf]
      %v2790 = vld [vmem:[%s384 + $0x18] sm:$0x11]
      %v2791 = vld [vmem:[%s384 + $0x20] sm:$0x1]
      %s2792 = scalar_lea.vmem %s3, 2016
      %v2793 = vld [vmem:[%s2792] sm:$0xff]
      %v2794 = vld [vmem:[%s2792 + $0x8] sm:$0xff]
      %v2795 = vld [vmem:[%s2792 + $0x10] sm:$0xff]
      %v2796 = vld [vmem:[%s2792 + $0x18] sm:$0xff]
      %v2797 = vld [vmem:[%s2792 + $0x20] sm:$0xff]
      %v2798 = vld [vmem:[%s2792 + $0x28] sm:$0xff]
      %v2799 = vld [vmem:[%s2792 + $0x30] sm:$0xff]
      %v2800 = vld [vmem:[%s2792 + $0x38] sm:$0xff]
      %v2801 = vld [vmem:[%s2792 + $0x40] sm:$0xff]
      %v2802 = vld [vmem:[%s2792 + $0x48] sm:$0xff]
      %v2803 = vld [vmem:[%s2792 + $0x50] sm:$0xff]
      %v2804 = vld [vmem:[%s2792 + $0x58] sm:$0xff]
      %v2805 = vld [vmem:[%s2792 + $0x60] sm:$0xff]
      %v2806 = vld [vmem:[%s2792 + $0x68] sm:$0xff]
      %v2807 = vld [vmem:[%s2792 + $0x70] sm:$0xff]
      %v2808 = vld [vmem:[%s2792 + $0x78] sm:$0xff]
      %v2809 = vld [vmem:[%s2792 + $0x80] sm:$0xff]
      %v2810 = vld [vmem:[%s2792 + $0x88] sm:$0xff]
      %v2811 = vld [vmem:[%s2792 + $0x90] sm:$0xff]
      %v2812 = vld [vmem:[%s2792 + $0x98] sm:$0xff]
      %v2813 = vld [vmem:[%s2792 + $0xa0] sm:$0xff]
      %v2814 = vld [vmem:[%s2792 + $0xa8] sm:$0xff]
      %v2815 = vld [vmem:[%s2792 + $0xb0] sm:$0xff]
      %v2816 = vld [vmem:[%s2792 + $0xb8] sm:$0xff]
      %v2817 = vld [vmem:[%s2792 + $0xc0] sm:$0xff]
      %v2818 = vld [vmem:[%s2792 + $0xc8] sm:$0xff]
      %v2819 = vld [vmem:[%s2792 + $0xd0] sm:$0xff]
      %v2820 = vld [vmem:[%s2792 + $0xd8] sm:$0xff]
      %v2821 = vld [vmem:[%s2792 + $0xe0] sm:$0xff]
      %v2822 = vld [vmem:[%s2792 + $0xe8] sm:$0xff]
      %v2823 = vld [vmem:[%s2792 + $0xf0] sm:$0xff]
      %v2824 = vld [vmem:[%s2792 + $0xf8] sm:$0xff]
      %v2825 = vld [vmem:[%s2792 + $0x100] sm:$0xff]
      %v2826 = vld [vmem:[%s2792 + $0x108] sm:$0xff]
      %v2827 = vld [vmem:[%s2792 + $0x110] sm:$0xff]
      %v2828 = vld [vmem:[%s2792 + $0x118] sm:$0xff]
      %v2835 = vunpack.c.l.b16 %v2786
      %v2836 = vunpack.c.h.b16 %v2786
      %v2837 = vunpack.c.l.b16 %v2787
      %v2838 = vunpack.c.l.b16 %v2788
      %v2839 = vunpack.c.h.b16 %v2788
      %v2840 = vunpack.c.l.b16 %v2789
      %v2841 = vunpack.c.l.b16 %v2790
      %v2842 = vunpack.c.h.b16 %v2790
      %v2843 = vunpack.c.l.b16 %v2791
      %v2844 = vpack.c.b16 %v2838, %v2835
      %v2845 = vpack.c.b16 %v2839, %v2836
      %v2846 = vpack.c.b16 %v2840, %v2837
      %v2847 = vpack.c.b16 %v2841, %v2841
      %v2848 = vpack.c.b16 %v2842, %v2842
      %v2849 = vpack.c.b16 %v2843, %v2843
      %v2851 = vshrl.u32 %v2844, 16
      %v2853 = vshll.u32 %v2844, 16
      %v2855 = vrot.slane %v2853, 1
      %v2856 = vor.u32 %v2851, %v2855
      %v2858 = vshll.u32 %v2847, 16
      %v2860 = vrot.slane %v2858, 1
      %v2861 = vsel %vm511, %v2856, %v2860
      %v2863 = vshrl.u32 %v2845, 16
      %v2865 = vshll.u32 %v2845, 16
      %v2867 = vrot.slane %v2865, 1
      %v2868 = vor.u32 %v2863, %v2867
      %v2870 = vshll.u32 %v2848, 16
      %v2872 = vrot.slane %v2870, 1
      %v2873 = vsel %vm511, %v2868, %v2872
      %v2875 = vshrl.u32 %v2846, 16
      %v2877 = vshll.u32 %v2846, 16
      %v2879 = vrot.slane %v2877, 1
      %v2880 = vor.u32 %v2875, %v2879
      %v2882 = vshll.u32 %v2849, 16
      %v2884 = vrot.slane %v2882, 1
      %v2885 = vsel %vm511, %v2880, %v2884
      %v2924 = vunpack.c.l.b16 %v2793
      %v2925 = vunpack.c.h.b16 %v2793
      %v2926 = vunpack.c.l.b16 %v2794
      %v2927 = vunpack.c.h.b16 %v2794
      %v2928 = vunpack.c.l.b16 %v2795
      %v2929 = vunpack.c.h.b16 %v2795
      %v2930 = vunpack.c.l.b16 %v2796
      %v2931 = vunpack.c.h.b16 %v2796
      %v2932 = vunpack.c.l.b16 %v2797
      %v2933 = vunpack.c.h.b16 %v2797
      %v2934 = vunpack.c.l.b16 %v2798
      %v2935 = vunpack.c.h.b16 %v2798
      %v2936 = vunpack.c.l.b16 %v2799
      %v2937 = vunpack.c.h.b16 %v2799
      %v2938 = vunpack.c.l.b16 %v2800
      %v2939 = vunpack.c.h.b16 %v2800
      %v2940 = vunpack.c.l.b16 %v2801
      %v2941 = vunpack.c.h.b16 %v2801
      %v2942 = vunpack.c.l.b16 %v2802
      %v2943 = vunpack.c.h.b16 %v2802
      %v2944 = vunpack.c.l.b16 %v2803
      %v2945 = vunpack.c.h.b16 %v2803
      %v2946 = vunpack.c.l.b16 %v2804
      %v2947 = vunpack.c.h.b16 %v2804
      %v2948 = vunpack.c.l.b16 %v2805
      %v2949 = vunpack.c.h.b16 %v2805
      %v2950 = vunpack.c.l.b16 %v2806
      %v2951 = vunpack.c.h.b16 %v2806
      %v2952 = vunpack.c.l.b16 %v2807
      %v2953 = vunpack.c.h.b16 %v2807
      %v2954 = vunpack.c.l.b16 %v2808
      %v2955 = vunpack.c.h.b16 %v2808
      %v2956 = vunpack.c.l.b16 %v2809
      %v2957 = vunpack.c.h.b16 %v2809
      %v2958 = vunpack.c.l.b16 %v2810
      %v2959 = vunpack.c.h.b16 %v2810
      %v2960 = vunpack.c.l.b16 %v2811
      %v2961 = vunpack.c.h.b16 %v2811
      %v2962 = vunpack.c.l.b16 %v2812
      %v2963 = vunpack.c.h.b16 %v2812
      %v2964 = vunpack.c.l.b16 %v2813
      %v2965 = vunpack.c.h.b16 %v2813
      %v2966 = vunpack.c.l.b16 %v2814
      %v2967 = vunpack.c.h.b16 %v2814
      %v2968 = vunpack.c.l.b16 %v2815
      %v2969 = vunpack.c.h.b16 %v2815
      %v2970 = vunpack.c.l.b16 %v2816
      %v2971 = vunpack.c.h.b16 %v2816
      %v2972 = vunpack.c.l.b16 %v2817
      %v2973 = vunpack.c.h.b16 %v2817
      %v2974 = vunpack.c.l.b16 %v2818
      %v2975 = vunpack.c.h.b16 %v2818
      %v2976 = vunpack.c.l.b16 %v2819
      %v2977 = vunpack.c.h.b16 %v2819
      %v2978 = vunpack.c.l.b16 %v2820
      %v2979 = vunpack.c.h.b16 %v2820
      %v2980 = vunpack.c.l.b16 %v2821
      %v2981 = vunpack.c.h.b16 %v2821
      %v2982 = vunpack.c.l.b16 %v2822
      %v2983 = vunpack.c.h.b16 %v2822
      %v2984 = vunpack.c.l.b16 %v2823
      %v2985 = vunpack.c.h.b16 %v2823
      %v2986 = vunpack.c.l.b16 %v2824
      %v2987 = vunpack.c.h.b16 %v2824
      %v2988 = vunpack.c.l.b16 %v2825
      %v2989 = vunpack.c.h.b16 %v2825
      %v2990 = vunpack.c.l.b16 %v2826
      %v2991 = vunpack.c.h.b16 %v2826
      %v2992 = vunpack.c.l.b16 %v2827
      %v2993 = vunpack.c.h.b16 %v2827
      %v2994 = vunpack.c.l.b16 %v2828
      %v2995 = vunpack.c.h.b16 %v2828
      %v2996 = vpack.c.b16 %v2926, %v2924
      %v2997 = vpack.c.b16 %v2927, %v2925
      %v2998 = vpack.c.b16 %v2930, %v2928
      %v2999 = vpack.c.b16 %v2931, %v2929
      %v3000 = vpack.c.b16 %v2934, %v2932
      %v3001 = vpack.c.b16 %v2935, %v2933
      %v3002 = vpack.c.b16 %v2938, %v2936
      %v3003 = vpack.c.b16 %v2939, %v2937
      %v3004 = vpack.c.b16 %v2942, %v2940
      %v3005 = vpack.c.b16 %v2943, %v2941
      %v3006 = vpack.c.b16 %v2946, %v2944
      %v3007 = vpack.c.b16 %v2947, %v2945
      %v3008 = vpack.c.b16 %v2950, %v2948
      %v3009 = vpack.c.b16 %v2951, %v2949
      %v3010 = vpack.c.b16 %v2954, %v2952
      %v3011 = vpack.c.b16 %v2955, %v2953
      %v3012 = vpack.c.b16 %v2958, %v2956
      %v3013 = vpack.c.b16 %v2959, %v2957
      %v3014 = vpack.c.b16 %v2962, %v2960
      %v3015 = vpack.c.b16 %v2963, %v2961
      %v3016 = vpack.c.b16 %v2966, %v2964
      %v3017 = vpack.c.b16 %v2967, %v2965
      %v3018 = vpack.c.b16 %v2970, %v2968
      %v3019 = vpack.c.b16 %v2971, %v2969
      %v3020 = vpack.c.b16 %v2974, %v2972
      %v3021 = vpack.c.b16 %v2975, %v2973
      %v3022 = vpack.c.b16 %v2978, %v2976
      %v3023 = vpack.c.b16 %v2979, %v2977
      %v3024 = vpack.c.b16 %v2982, %v2980
      %v3025 = vpack.c.b16 %v2983, %v2981
      %v3026 = vpack.c.b16 %v2986, %v2984
      %v3027 = vpack.c.b16 %v2987, %v2985
      %v3028 = vpack.c.b16 %v2990, %v2988
      %v3029 = vpack.c.b16 %v2991, %v2989
      %v3030 = vpack.c.b16 %v2994, %v2992
      %v3031 = vpack.c.b16 %v2995, %v2993
      %v3069 = vsel %vm730, %v2885, 0
      %3071 = vmatprep.subr.bf16.mxu0 %v2997
      %3072 = vmatpush1.bf16.msra.mxu0 %v2996
      %3073 = vmatprep.subr.bf16.mxu0 %v2999
      %3074 = vmatpush1.bf16.msra.mxu0 %v2998
      %3075 = vmatprep.subr.bf16.mxu0 %v3001
      %3076 = vmatpush1.bf16.msra.mxu0 %v3000
      %3077 = vmatprep.subr.bf16.mxu0 %v3003
      %3078 = vmatpush1.bf16.msra.mxu0 %v3002
      %3079 = vmatprep.subr.bf16.mxu0 %v3005
      %3080 = vmatpush1.bf16.msra.mxu0 %v3004
      %3081 = vmatprep.subr.bf16.mxu0 %v3007
      %3082 = vmatpush1.bf16.msra.mxu0 %v3006
      %3083 = vmatprep.subr.bf16.mxu0 %v3009
      %3084 = vmatpush1.bf16.msra.mxu0 %v3008
      %3085 = vmatprep.subr.bf16.mxu0 %v3011
      %3086 = vmatpush1.bf16.msra.mxu0 %v3010
      %3087 = vmatprep.subr.bf16.mxu0 %v3013
      %3088 = vmatpush1.bf16.msra.mxu0 %v3012
      %3089 = vmatprep.subr.bf16.mxu0 %v3015
      %3090 = vmatpush1.bf16.msra.mxu0 %v3014
      %3091 = vmatprep.subr.bf16.mxu0 %v3017
      %3092 = vmatpush1.bf16.msra.mxu0 %v3016
      %3093 = vmatprep.subr.bf16.mxu0 %v3019
      %3094 = vmatpush1.bf16.msra.mxu0 %v3018
      %3095 = vmatprep.subr.bf16.mxu0 %v3021
      %3096 = vmatpush1.bf16.msra.mxu0 %v3020
      %3097 = vmatprep.subr.bf16.mxu0 %v3023
      %3098 = vmatpush1.bf16.msra.mxu0 %v3022
      %3099 = vmatprep.subr.bf16.mxu0 %v3025
      %3100 = vmatpush1.bf16.msra.mxu0 %v3024
      %3101 = vmatprep.subr.bf16.mxu0 %v3027
      %3102 = vmatpush1.bf16.msra.mxu0 %v3026
      %3103 = vmatprep.mubr.bf16.mxu0 %v2873
      %3104 = vmatmul.mubr.bf16.gmra.mrb[0].mxu0 %v2861
      %v3105 = vpop.f32.mrb[0].mxu0
      %v3106 = vadd.f32 0.0, %v3105
      %v3107 = vpop.f32.mrb[0].mxu0
      %v3108 = vadd.f32 0.0, %v3107
      %v3109 = vpop.f32.mrb[0].mxu0
      %v3110 = vadd.f32 0.0, %v3109
      %v3111 = vpop.f32.mrb[0].mxu0
      %v3112 = vadd.f32 0.0, %v3111
      %3113 = vdwg.mxu0
      %3114 = vmatprep.subr.bf16.mxu0 %v3029
      %3115 = vmatpush1.bf16.msra.mxu0 %v3028
      %3116 = vmatprep.subr.bf16.mxu0 %v3031
      %3117 = vmatpush1.bf16.msra.mxu0 %v3030
      %3118 = vmatprep.subr.bf16.mxu0 0
      %3119 = vmatpush1.bf16.msra.mxu0 0
      %3120 = vmatprep.subr.bf16.mxu0 0
      %3121 = vmatpush1.bf16.msra.mxu0 0
      %3122 = vmatprep.subr.bf16.mxu0 0
      %3123 = vmatpush1.bf16.msra.mxu0 0
      %3124 = vmatprep.subr.bf16.mxu0 0
      %3125 = vmatpush1.bf16.msra.mxu0 0
      %3126 = vmatprep.subr.bf16.mxu0 0
      %3127 = vmatpush1.bf16.msra.mxu0 0
      %3128 = vmatprep.subr.bf16.mxu0 0
      %3129 = vmatpush1.bf16.msra.mxu0 0
      %3130 = vmatprep.subr.bf16.mxu0 0
      %3131 = vmatpush1.bf16.msra.mxu0 0
      %3132 = vmatprep.subr.bf16.mxu0 0
      %3133 = vmatpush1.bf16.msra.mxu0 0
      %3134 = vmatprep.subr.bf16.mxu0 0
      %3135 = vmatpush1.bf16.msra.mxu0 0
      %3136 = vmatprep.subr.bf16.mxu0 0
      %3137 = vmatpush1.bf16.msra.mxu0 0
      %3138 = vmatprep.subr.bf16.mxu0 0
      %3139 = vmatpush1.bf16.msra.mxu0 0
      %3140 = vmatprep.subr.bf16.mxu0 0
      %3141 = vmatpush1.bf16.msra.mxu0 0
      %3142 = vmatprep.subr.bf16.mxu0 0
      %3143 = vmatpush1.bf16.msra.mxu0 0
      %3144 = vmatprep.subr.bf16.mxu0 0
      %3145 = vmatpush1.bf16.msra.mxu0 0
      %3146 = vmatprep.mubr.bf16.mxu0 0
      %3147 = vmatmul.mubr.bf16.gmra.mrb[0].mxu0 %v3069
      %v3148 = vpop.f32.mrb[0].mxu0
      %v3149 = vadd.f32 %v3106, %v3148
      %v3150 = vpop.f32.mrb[0].mxu0
      %v3151 = vadd.f32 %v3108, %v3150
      %v3152 = vpop.f32.mrb[0].mxu0
      %v3153 = vadd.f32 %v3110, %v3152
      %v3154 = vpop.f32.mrb[0].mxu0
      %v3155 = vadd.f32 %v3112, %v3154
      %3156 = vdwg.mxu0
      %v3157 = vadd.f32 %v2782, %v3149
      %v3158 = vadd.f32 %v2783, %v3151
      %v3159 = vadd.f32 %v2784, %v3153
      %v3160 = vadd.f32 %v2785, %v3155
      %v3161 = vld [vmem:[%s384] sm:$0xee]
      %v3162 = vld [vmem:[%s384 + $0x8] sm:$0xe]
      %s3163 = scalar_lea.vmem %s3, 2304
      %v3164 = vld [vmem:[%s3163] sm:$0xff]
      %v3165 = vld [vmem:[%s3163 + $0x8] sm:$0xff]
      %v3166 = vld [vmem:[%s3163 + $0x10] sm:$0xff]
      %v3167 = vld [vmem:[%s3163 + $0x18] sm:$0xff]
      %v3168 = vld [vmem:[%s3163 + $0x20] sm:$0xff]
      %v3169 = vld [vmem:[%s3163 + $0x28] sm:$0xff]
      %v3170 = vld [vmem:[%s3163 + $0x30] sm:$0xff]
      %v3171 = vld [vmem:[%s3163 + $0x38] sm:$0xff]
      %v3172 = vld [vmem:[%s3163 + $0x40] sm:$0xff]
      %v3173 = vld [vmem:[%s3163 + $0x48] sm:$0xff]
      %v3174 = vld [vmem:[%s3163 + $0x50] sm:$0xff]
      %v3175 = vld [vmem:[%s3163 + $0x58] sm:$0xff]
      %v3176 = vld [vmem:[%s3163 + $0x60] sm:$0xff]
      %v3177 = vld [vmem:[%s3163 + $0x68] sm:$0xff]
      %v3178 = vld [vmem:[%s3163 + $0x70] sm:$0xff]
      %v3179 = vld [vmem:[%s3163 + $0x78] sm:$0xff]
      %v3180 = vld [vmem:[%s3163 + $0x80] sm:$0xff]
      %v3181 = vld [vmem:[%s3163 + $0x88] sm:$0xff]
      %v3182 = vld [vmem:[%s3163 + $0x90] sm:$0xff]
      %v3183 = vld [vmem:[%s3163 + $0x98] sm:$0xff]
      %v3184 = vld [vmem:[%s3163 + $0xa0] sm:$0xff]
      %v3185 = vld [vmem:[%s3163 + $0xa8] sm:$0xff]
      %v3186 = vld [vmem:[%s3163 + $0xb0] sm:$0xff]
      %v3187 = vld [vmem:[%s3163 + $0xb8] sm:$0xff]
      %v3188 = vld [vmem:[%s3163 + $0xc0] sm:$0xff]
      %v3189 = vld [vmem:[%s3163 + $0xc8] sm:$0xff]
      %v3190 = vld [vmem:[%s3163 + $0xd0] sm:$0xff]
      %v3191 = vld [vmem:[%s3163 + $0xd8] sm:$0xff]
      %v3192 = vld [vmem:[%s3163 + $0xe0] sm:$0xff]
      %v3193 = vld [vmem:[%s3163 + $0xe8] sm:$0xff]
      %v3194 = vld [vmem:[%s3163 + $0xf0] sm:$0xff]
      %v3195 = vld [vmem:[%s3163 + $0xf8] sm:$0xff]
      %v3196 = vld [vmem:[%s3163 + $0x100] sm:$0xff]
      %v3197 = vld [vmem:[%s3163 + $0x108] sm:$0xff]
      %v3198 = vld [vmem:[%s3163 + $0x110] sm:$0xff]
      %v3199 = vld [vmem:[%s3163 + $0x118] sm:$0xff]
      %v3202 = vunpack.c.l.b16 %v3161
      %v3203 = vunpack.c.h.b16 %v3161
      %v3204 = vunpack.c.l.b16 %v3162
      %v3205 = vpack.c.b16 %v2838, %v3202
      %v3206 = vpack.c.b16 %v2839, %v3203
      %v3207 = vpack.c.b16 %v2840, %v3204
      %v3208 = vrot.slane %v3205, 1
      %v3209 = vrot.slane %v2847, 1
      %v3210 = vsel %vm1137, %v3208, %v3209
      %v3211 = vrot.slane %v3206, 1
      %v3212 = vrot.slane %v2848, 1
      %v3213 = vsel %vm1137, %v3211, %v3212
      %v3214 = vrot.slane %v3207, 1
      %v3215 = vrot.slane %v2849, 1
      %v3216 = vsel %vm1137, %v3214, %v3215
      %v3255 = vunpack.c.l.b16 %v3164
      %v3256 = vunpack.c.h.b16 %v3164
      %v3257 = vunpack.c.l.b16 %v3165
      %v3258 = vunpack.c.h.b16 %v3165
      %v3259 = vunpack.c.l.b16 %v3166
      %v3260 = vunpack.c.h.b16 %v3166
      %v3261 = vunpack.c.l.b16 %v3167
      %v3262 = vunpack.c.h.b16 %v3167
      %v3263 = vunpack.c.l.b16 %v3168
      %v3264 = vunpack.c.h.b16 %v3168
      %v3265 = vunpack.c.l.b16 %v3169
      %v3266 = vunpack.c.h.b16 %v3169
      %v3267 = vunpack.c.l.b16 %v3170
      %v3268 = vunpack.c.h.b16 %v3170
      %v3269 = vunpack.c.l.b16 %v3171
      %v3270 = vunpack.c.h.b16 %v3171
      %v3271 = vunpack.c.l.b16 %v3172
      %v3272 = vunpack.c.h.b16 %v3172
      %v3273 = vunpack.c.l.b16 %v3173
      %v3274 = vunpack.c.h.b16 %v3173
      %v3275 = vunpack.c.l.b16 %v3174
      %v3276 = vunpack.c.h.b16 %v3174
      %v3277 = vunpack.c.l.b16 %v3175
      %v3278 = vunpack.c.h.b16 %v3175
      %v3279 = vunpack.c.l.b16 %v3176
      %v3280 = vunpack.c.h.b16 %v3176
      %v3281 = vunpack.c.l.b16 %v3177
      %v3282 = vunpack.c.h.b16 %v3177
      %v3283 = vunpack.c.l.b16 %v3178
      %v3284 = vunpack.c.h.b16 %v3178
      %v3285 = vunpack.c.l.b16 %v3179
      %v3286 = vunpack.c.h.b16 %v3179
      %v3287 = vunpack.c.l.b16 %v3180
      %v3288 = vunpack.c.h.b16 %v3180
      %v3289 = vunpack.c.l.b16 %v3181
      %v3290 = vunpack.c.h.b16 %v3181
      %v3291 = vunpack.c.l.b16 %v3182
      %v3292 = vunpack.c.h.b16 %v3182
      %v3293 = vunpack.c.l.b16 %v3183
      %v3294 = vunpack.c.h.b16 %v3183
      %v3295 = vunpack.c.l.b16 %v3184
      %v3296 = vunpack.c.h.b16 %v3184
      %v3297 = vunpack.c.l.b16 %v3185
      %v3298 = vunpack.c.h.b16 %v3185
      %v3299 = vunpack.c.l.b16 %v3186
      %v3300 = vunpack.c.h.b16 %v3186
      %v3301 = vunpack.c.l.b16 %v3187
      %v3302 = vunpack.c.h.b16 %v3187
      %v3303 = vunpack.c.l.b16 %v3188
      %v3304 = vunpack.c.h.b16 %v3188
      %v3305 = vunpack.c.l.b16 %v3189
      %v3306 = vunpack.c.h.b16 %v3189
      %v3307 = vunpack.c.l.b16 %v3190
      %v3308 = vunpack.c.h.b16 %v3190
      %v3309 = vunpack.c.l.b16 %v3191
      %v3310 = vunpack.c.h.b16 %v3191
      %v3311 = vunpack.c.l.b16 %v3192
      %v3312 = vunpack.c.h.b16 %v3192
      %v3313 = vunpack.c.l.b16 %v3193
      %v3314 = vunpack.c.h.b16 %v3193
      %v3315 = vunpack.c.l.b16 %v3194
      %v3316 = vunpack.c.h.b16 %v3194
      %v3317 = vunpack.c.l.b16 %v3195
      %v3318 = vunpack.c.h.b16 %v3195
      %v3319 = vunpack.c.l.b16 %v3196
      %v3320 = vunpack.c.h.b16 %v3196
      %v3321 = vunpack.c.l.b16 %v3197
      %v3322 = vunpack.c.h.b16 %v3197
      %v3323 = vunpack.c.l.b16 %v3198
      %v3324 = vunpack.c.h.b16 %v3198
      %v3325 = vunpack.c.l.b16 %v3199
      %v3326 = vunpack.c.h.b16 %v3199
      %v3327 = vpack.c.b16 %v3257, %v3255
      %v3328 = vpack.c.b16 %v3258, %v3256
      %v3329 = vpack.c.b16 %v3261, %v3259
      %v3330 = vpack.c.b16 %v3262, %v3260
      %v3331 = vpack.c.b16 %v3265, %v3263
      %v3332 = vpack.c.b16 %v3266, %v3264
      %v3333 = vpack.c.b16 %v3269, %v3267
      %v3334 = vpack.c.b16 %v3270, %v3268
      %v3335 = vpack.c.b16 %v3273, %v3271
      %v3336 = vpack.c.b16 %v3274, %v3272
      %v3337 = vpack.c.b16 %v3277, %v3275
      %v3338 = vpack.c.b16 %v3278, %v3276
      %v3339 = vpack.c.b16 %v3281, %v3279
      %v3340 = vpack.c.b16 %v3282, %v3280
      %v3341 = vpack.c.b16 %v3285, %v3283
      %v3342 = vpack.c.b16 %v3286, %v3284
      %v3343 = vpack.c.b16 %v3289, %v3287
      %v3344 = vpack.c.b16 %v3290, %v3288
      %v3345 = vpack.c.b16 %v3293, %v3291
      %v3346 = vpack.c.b16 %v3294, %v3292
      %v3347 = vpack.c.b16 %v3297, %v3295
      %v3348 = vpack.c.b16 %v3298, %v3296
      %v3349 = vpack.c.b16 %v3301, %v3299
      %v3350 = vpack.c.b16 %v3302, %v3300
      %v3351 = vpack.c.b16 %v3305, %v3303
      %v3352 = vpack.c.b16 %v3306, %v3304
      %v3353 = vpack.c.b16 %v3309, %v3307
      %v3354 = vpack.c.b16 %v3310, %v3308
      %v3355 = vpack.c.b16 %v3313, %v3311
      %v3356 = vpack.c.b16 %v3314, %v3312
      %v3357 = vpack.c.b16 %v3317, %v3315
      %v3358 = vpack.c.b16 %v3318, %v3316
      %v3359 = vpack.c.b16 %v3321, %v3319
      %v3360 = vpack.c.b16 %v3322, %v3320
      %v3361 = vpack.c.b16 %v3325, %v3323
      %v3362 = vpack.c.b16 %v3326, %v3324
      %v3400 = vsel %vm730, %v3216, 0
      %3402 = vmatprep.subr.bf16.mxu0 %v3328
      %3403 = vmatpush1.bf16.msra.mxu0 %v3327
      %3404 = vmatprep.subr.bf16.mxu0 %v3330
      %3405 = vmatpush1.bf16.msra.mxu0 %v3329
      %3406 = vmatprep.subr.bf16.mxu0 %v3332
      %3407 = vmatpush1.bf16.msra.mxu0 %v3331
      %3408 = vmatprep.subr.bf16.mxu0 %v3334
      %3409 = vmatpush1.bf16.msra.mxu0 %v3333
      %3410 = vmatprep.subr.bf16.mxu0 %v3336
      %3411 = vmatpush1.bf16.msra.mxu0 %v3335
      %3412 = vmatprep.subr.bf16.mxu0 %v3338
      %3413 = vmatpush1.bf16.msra.mxu0 %v3337
      %3414 = vmatprep.subr.bf16.mxu0 %v3340
      %3415 = vmatpush1.bf16.msra.mxu0 %v3339
      %3416 = vmatprep.subr.bf16.mxu0 %v3342
      %3417 = vmatpush1.bf16.msra.mxu0 %v3341
      %3418 = vmatprep.subr.bf16.mxu0 %v3344
      %3419 = vmatpush1.bf16.msra.mxu0 %v3343
      %3420 = vmatprep.subr.bf16.mxu0 %v3346
      %3421 = vmatpush1.bf16.msra.mxu0 %v3345
      %3422 = vmatprep.subr.bf16.mxu0 %v3348
      %3423 = vmatpush1.bf16.msra.mxu0 %v3347
      %3424 = vmatprep.subr.bf16.mxu0 %v3350
      %3425 = vmatpush1.bf16.msra.mxu0 %v3349
      %3426 = vmatprep.subr.bf16.mxu0 %v3352
      %3427 = vmatpush1.bf16.msra.mxu0 %v3351
      %3428 = vmatprep.subr.bf16.mxu0 %v3354
      %3429 = vmatpush1.bf16.msra.mxu0 %v3353
      %3430 = vmatprep.subr.bf16.mxu0 %v3356
      %3431 = vmatpush1.bf16.msra.mxu0 %v3355
      %3432 = vmatprep.subr.bf16.mxu0 %v3358
      %3433 = vmatpush1.bf16.msra.mxu0 %v3357
      %3434 = vmatprep.mubr.bf16.mxu0 %v3213
      %3435 = vmatmul.mubr.bf16.gmra.mrb[0].mxu0 %v3210
      %v3436 = vpop.f32.mrb[0].mxu0
      %v3437 = vadd.f32 0.0, %v3436
      %v3438 = vpop.f32.mrb[0].mxu0
      %v3439 = vadd.f32 0.0, %v3438
      %v3440 = vpop.f32.mrb[0].mxu0
      %v3441 = vadd.f32 0.0, %v3440
      %v3442 = vpop.f32.mrb[0].mxu0
      %v3443 = vadd.f32 0.0, %v3442
      %3444 = vdwg.mxu0
      %3445 = vmatprep.subr.bf16.mxu0 %v3360
      %3446 = vmatpush1.bf16.msra.mxu0 %v3359
      %3447 = vmatprep.subr.bf16.mxu0 %v3362
      %3448 = vmatpush1.bf16.msra.mxu0 %v3361
      %3449 = vmatprep.subr.bf16.mxu0 0
      %3450 = vmatpush1.bf16.msra.mxu0 0
      %3451 = vmatprep.subr.bf16.mxu0 0
      %3452 = vmatpush1.bf16.msra.mxu0 0
      %3453 = vmatprep.subr.bf16.mxu0 0
      %3454 = vmatpush1.bf16.msra.mxu0 0
      %3455 = vmatprep.subr.bf16.mxu0 0
      %3456 = vmatpush1.bf16.msra.mxu0 0
      %3457 = vmatprep.subr.bf16.mxu0 0
      %3458 = vmatpush1.bf16.msra.mxu0 0
      %3459 = vmatprep.subr.bf16.mxu0 0
      %3460 = vmatpush1.bf16.msra.mxu0 0
      %3461 = vmatprep.subr.bf16.mxu0 0
      %3462 = vmatpush1.bf16.msra.mxu0 0
      %3463 = vmatprep.subr.bf16.mxu0 0
      %3464 = vmatpush1.bf16.msra.mxu0 0
      %3465 = vmatprep.subr.bf16.mxu0 0
      %3466 = vmatpush1.bf16.msra.mxu0 0
      %3467 = vmatprep.subr.bf16.mxu0 0
      %3468 = vmatpush1.bf16.msra.mxu0 0
      %3469 = vmatprep.subr.bf16.mxu0 0
      %3470 = vmatpush1.bf16.msra.mxu0 0
      %3471 = vmatprep.subr.bf16.mxu0 0
      %3472 = vmatpush1.bf16.msra.mxu0 0
      %3473 = vmatprep.subr.bf16.mxu0 0
      %3474 = vmatpush1.bf16.msra.mxu0 0
      %3475 = vmatprep.subr.bf16.mxu0 0
      %3476 = vmatpush1.bf16.msra.mxu0 0
      %3477 = vmatprep.mubr.bf16.mxu0 0
      %3478 = vmatmul.mubr.bf16.gmra.mrb[0].mxu0 %v3400
      %v3479 = vpop.f32.mrb[0].mxu0
      %v3480 = vadd.f32 %v3437, %v3479
      %v3481 = vpop.f32.mrb[0].mxu0
      %v3482 = vadd.f32 %v3439, %v3481
      %v3483 = vpop.f32.mrb[0].mxu0
      %v3484 = vadd.f32 %v3441, %v3483
      %v3485 = vpop.f32.mrb[0].mxu0
      %v3486 = vadd.f32 %v3443, %v3485
      %3487 = vdwg.mxu0
      %v3488 = vadd.f32 %v3157, %v3480
      %v3489 = vadd.f32 %v3158, %v3482
      %v3490 = vadd.f32 %v3159, %v3484
      %v3491 = vadd.f32 %v3160, %v3486
      %v3492 = vld [vmem:[%s4] sm:$0x3]
      %v3494 = vlaneseq
      %v3495 = vshrl.u32 %v3494, 7
      %v3496 = vsub.s32 0, %v3495
      %v3497 = vrot.slane %v3492, %v3496
      %v3498 = vlaneseq
      %v3499 = vshrl.u32 %v3498, 7
      %v3500 = vsub.s32 1, %v3499
      %v3501 = vrot.slane %v3492, %v3500
      %v3504 = vadd.f32 %v3488, %v3497
      %v3505 = vadd.f32 %v3489, %v3501
      %v3506 = vadd.f32 %v3490, %v3497
      %v3507 = vadd.f32 %v3491, %v3501
      %v3508 = vtanh.pop %v3504
      %v3509 = vtanh.pop %v3506
      %v3510 = vxor.u32 %v3505, 2147483648
      %v3511 = vxor.u32 %v3507, 2147483648
      %v3512 = vmul.f32 %v3510, 1.442695
      %v3513 = vpow.pop %v3512
      %v3514 = vmul.f32 %v3511, 1.442695
      %v3515 = vpow.pop %v3514
      %v3516 = vadd.f32 %v3513, 1.0
      %v3517 = vadd.f32 %v3515, 1.0
      %v3518 = vrcp.pop %v3516
      %v3519 = vmul.f32 1.0, %v3518
      %v3520 = vrcp.pop %v3517
      %v3521 = vmul.f32 1.0, %v3520
      %v3522 = vld [vmem:[#allocation2] sm:$0xff]
      %v3523 = vld [vmem:[#allocation2 + $0x8] sm:$0xff]
      %v3524 = vmul.f32 %v3519, %v3522
      %v3525 = vmul.f32 %v3521, %v3523
      %v3526 = vsub.f32 1.0, %v3519
      %v3527 = vsub.f32 1.0, %v3521
      %v3528 = vmul.f32 %v3526, %v3508
      %v3529 = vmul.f32 %v3527, %v3509
      %v3530 = vadd.f32 %v3524, %v3528
      %v3531 = vadd.f32 %v3525, %v3529
      %3532 = vst [vmem:[#allocation2] sm:$0xff] %v3530
      %3533 = vst [vmem:[#allocation2 + $0x8] sm:$0xff] %v3531
      %v3534 = vld [vmem:[%s394] sm:$0xf]
      %v3535 = vld [vmem:[%s394 + $0x4] sm:$0xf]
      %v3536 = vunpack.c.l.bf16 %v3534
      %v3537 = vunpack.c.l.bf16 %v3535
      %v3538 = vadd.f32 %v3530, %v3536
      %v3539 = vadd.f32 %v3531, %v3537
      %v3540 = vpack.c.bf16 %v3539, %v3538
      %v3542 = vunpack.c.l.b16 %v3540
      %v3543 = vunpack.c.h.b16 %v3540
      %v3544 = vpack.c.b16 %v3542, %v3542
      %v3545 = vpack.c.b16 %v3543, %v3543
      %3548 = vst [vmem:[%s403] sm:$0xf] %v3544
      %3549 = vst [vmem:[%s403 + $0x4] sm:$0xf] %v3545
      %p3550 = scmp.lt.s32.totalorder %s21, 1
      %s3551 = scalar_select %p3550, %s21, 1
      %p3552 = scmp.lt.s32.totalorder %s22, 7
      %s3553 = scalar_select %p3552, %s22, 7
      %s3554 = smul.addr %s3553, 2
      %s3555 = smul.addr %s3551, 16
      %s3556 = sadd.s32 %s3554, %s3555
      %s3557 = smul.addr %s3556, 4
      %s3558 = scalar_lea.vmem %s6, %s3557
      // Predicated region
      $region49: #{_lambda_.2} parent=43 // pred_check
        %p3559 = pneg %p207
      $region50: #{_lambda_.2} parent=43 // pred_check_branch
        %3561 = sbr.rel (%p3559) target = $region52
      $region51: #{_lambda_.2} parent=43 // pred_region
        _
      $region52: #{_lambda_.2} parent=43 // pred_fallthru
        _
    $region44: #{_lambda_.2} parent=5 // pred_fallthru
      _
    %p3562 = scmp.le.s32.totalorder 2, %s12
    // Predicated region
    $region53: #{_lambda_.2} parent=5 // pred_check
      %p3563 = pneg %p3562
    $region54: #{_lambda_.2} parent=5 // pred_check_branch
      %3565 = sbr.rel (%p3563) target = $region56
    $region55: #{_lambda_.2} parent=5 // pred_region
      %s3566 = ssub.s32 %s12, 2
      // Predicated region
      $region57: #{_lambda_.2} parent=55 // pred_check
        %p3567 = pneg %p213
      $region58: #{_lambda_.2} parent=55 // pred_check_branch
        %3569 = sbr.rel (%p3567) target = $region60
      $region59: #{_lambda_.2} parent=55 // pred_region
        %p3570 = scmp.lt.s32.totalorder %s23, 1
        %s3571 = scalar_select %p3570, %s23, 1
        %p3572 = scmp.lt.s32.totalorder %s24, 7
        %s3573 = scalar_select %p3572, %s24, 7
        %s3574 = smul.addr %s3573, 2
        %s3575 = smul.addr %s3571, 16
        %s3576 = sadd.s32 %s3574, %s3575
        %s3577 = smul.addr %s3576, 4
        %s3578 = scalar_lea.vmem %s6, %s3577
      $region60: #{_lambda_.2} parent=55 // pred_fallthru
        _
    $region56: #{_lambda_.2} parent=5 // pred_fallthru
      _
  $region6: #{_lambda_.2} parent=0 // loop_footer
    %s16 = sadd.s32 1, %s12
  $region7: #{_lambda_.2} parent=0 // loop_footer_branch
    %11 = sbr.rel target = $region3
  $region8: #{_lambda_.2} parent=0 // loop_exit
    _

// kernel: _lambda_.3
$region0: #{_lambda_.3}
  #allocation0 [shape = 'u32[]', space=smem, size = 0x4, offset = 0x4, fixed_abs, tag = 'smem constant byte address 0x4 - core index']
  #allocation1 [shape = 'u32[144,128]{1,0:T(1,128)}', space=vmem, size = 0x12000, scoped, tag = 'internal scratch']
  #allocation2 [shape = 'f32[16,128]{1,0:T(8,128)}', space=vmem, size = 0x2000, scoped, tag = 'scratch operand']
  %s0 = inlined_call_operand.vmem [shape: bf16[2,10,18,144], index: 0, kind: input, shape index: {}, may-alias: {0,1,2}]
  %s1 = inlined_call_operand.vmem [shape: bf16[2,10,18,144], index: 1, kind: input, shape index: {}, may-alias: {0,1,2}]
  %s2 = inlined_call_operand.vmem [shape: bf16[2,10,18,144], index: 2, kind: input, shape index: {}, may-alias: {0,1,2}]
  %s3 = inlined_call_operand.vmem [shape: bf16[3,3,144,256], index: 3, kind: input, shape index: {}]
  %s4 = inlined_call_operand.vmem [shape: f32[1,256], index: 4, kind: input, shape index: {}]
  %s5 = inlined_call_operand.vmem [shape: bf16[2,8,16,128], index: 5, kind: output, shape index: {}]
  %s6 = sld [smem:[#allocation0]]
  $region57: #{_lambda_.3} parent=0
    _
  %s8 = ssub.s32 1, %s6
  %s9 = scalar_select 0, %s8, %s6
  loop: start=0, step=1, limit=18
  $region2: #{_lambda_.3} parent=0 // loop_pre_header
    _
  $region3: #{_lambda_.3} parent=0 // loop_header
    %s11 = sphi 0, %s15
    %p12 = scmp.ge.s32.totalorder %s11, 18
    %s18 = sphi 0, %s30
    %s19 = sphi 0, %s26
    %s20 = sphi 0, %s18
    %s21 = sphi 0, %s19
    %s22 = sphi 0, %s20
    %s23 = sphi 0, %s21
    %s37 = sphi 0, %s39
    %s40 = sphi 0, %s37
    %s41 = sphi 0, %s40
    %s57 = sphi 0, %s41
    %s67 = sphi 0, %s69
    %s70 = sphi 0, %s67
    %s71 = sphi 0, %s70
    %s87 = sphi 0, %s71
    %s97 = sphi 0, %s99
    %s100 = sphi 0, %s97
    %s101 = sphi 0, %s100
    %s117 = sphi 0, %s101
    %s121 = sphi 0, %s121
    %s123 = sphi 0, %s121
    %s124 = sphi 0, %s123
    %s138 = sphi 0, %s124
    %s142 = sphi 0, %s142
    %s144 = sphi 0, %s142
    %s145 = sphi 0, %s144
    %s159 = sphi 0, %s145
    %s169 = sphi 0, %s171
    %s172 = sphi 0, %s169
    %s173 = sphi 0, %s172
    %s189 = sphi 0, %s173
  $region4: #{_lambda_.3} parent=0 // loop_header_branch
    %14 = sbr.rel (%p12) target = $region8
  $region5: #{_lambda_.3} parent=0 // loop_body
    %s16 = ssub.s32 %s11, 1
    %s17 = ssub.s32 %s11, 2
    %s24 = sadd.s32 1, %s19
    %p25 = scmp.ge.s32.totalorder %s24, 8
    %s26 = scalar_select %p25, 0, %s24
    %s27 = sadd.s32 1, %s18
    %s28 = scalar_select %p25, %s27, %s18
    %p29 = scmp.ge.s32.totalorder %s28, 2
    %s30 = scalar_select %p29, 0, %s28
    %s31 = ssub.s32 7, %s19
    %s32 = ssub.s32 7, %s26
    %s33 = ssub.s32 %s18, %s30
    %s34 = ssub.s32 %s31, %s32
    %s35 = sor.u32 %s33, %s34
    %p36 = scmp.eq.s32.totalorder %s35, 0
    %s38 = sadd.s32 %s37, 1
    %s39 = scalar_select %p36, %s37, %s38
    %p42 = pneg %p36
    %p43 = scmp.eq.s32.totalorder %s11, 15
    %p44 = por %p42, %p43
    %p45 = scmp.ne.s32.totalorder %s37, %s40
    %p46 = scmp.eq.s32.totalorder %s11, 0
    %p47 = por %p45, %p46
    %p48 = scmp.ne.s32.totalorder %s37, %s40
    %p49 = scmp.eq.s32.totalorder %s16, 15
    %p50 = por %p48, %p49
    %p51 = scmp.ne.s32.totalorder %s40, %s41
    %p52 = scmp.eq.s32.totalorder %s16, 0
    %p53 = por %p51, %p52
    %p54 = scmp.ne.s32.totalorder %s40, %s41
    %p55 = scmp.eq.s32.totalorder %s17, 15
    %p56 = por %p54, %p55
    %p58 = scmp.ne.s32.totalorder %s41, %s57
    %p59 = scmp.eq.s32.totalorder %s17, 0
    %p60 = por %p58, %p59
    %s61 = ssub.s32 8, %s19
    %s62 = ssub.s32 8, %s26
    %s63 = ssub.s32 %s18, %s30
    %s64 = ssub.s32 %s61, %s62
    %s65 = sor.u32 %s63, %s64
    %p66 = scmp.eq.s32.totalorder %s65, 0
    %s68 = sadd.s32 %s67, 1
    %s69 = scalar_select %p66, %s67, %s68
    %p72 = pneg %p66
    %p73 = scmp.eq.s32.totalorder %s11, 15
    %p74 = por %p72, %p73
    %p75 = scmp.ne.s32.totalorder %s67, %s70
    %p76 = scmp.eq.s32.totalorder %s11, 0
    %p77 = por %p75, %p76
    %p78 = scmp.ne.s32.totalorder %s67, %s70
    %p79 = scmp.eq.s32.totalorder %s16, 15
    %p80 = por %p78, %p79
    %p81 = scmp.ne.s32.totalorder %s70, %s71
    %p82 = scmp.eq.s32.totalorder %s16, 0
    %p83 = por %p81, %p82
    %p84 = scmp.ne.s32.totalorder %s70, %s71
    %p85 = scmp.eq.s32.totalorder %s17, 15
    %p86 = por %p84, %p85
    %p88 = scmp.ne.s32.totalorder %s71, %s87
    %p89 = scmp.eq.s32.totalorder %s17, 0
    %p90 = por %p88, %p89
    %s91 = ssub.s32 9, %s19
    %s92 = ssub.s32 9, %s26
    %s93 = ssub.s32 %s18, %s30
    %s94 = ssub.s32 %s91, %s92
    %s95 = sor.u32 %s93, %s94
    %p96 = scmp.eq.s32.totalorder %s95, 0
    %s98 = sadd.s32 %s97, 1
    %s99 = scalar_select %p96, %s97, %s98
    %p102 = pneg %p96
    %p103 = scmp.eq.s32.totalorder %s11, 15
    %p104 = por %p102, %p103
    %p105 = scmp.ne.s32.totalorder %s97, %s100
    %p106 = scmp.eq.s32.totalorder %s11, 0
    %p107 = por %p105, %p106
    %p108 = scmp.ne.s32.totalorder %s97, %s100
    %p109 = scmp.eq.s32.totalorder %s16, 15
    %p110 = por %p108, %p109
    %p111 = scmp.ne.s32.totalorder %s100, %s101
    %p112 = scmp.eq.s32.totalorder %s16, 0
    %p113 = por %p111, %p112
    %p114 = scmp.ne.s32.totalorder %s100, %s101
    %p115 = scmp.eq.s32.totalorder %s17, 15
    %p116 = por %p114, %p115
    %p118 = scmp.ne.s32.totalorder %s101, %s117
    %p119 = scmp.eq.s32.totalorder %s17, 0
    %p120 = por %p118, %p119
    %s122 = sadd.s32 %s121, 1
    %p125 = scmp.eq.s32.totalorder %s11, 15
    %p126 = scmp.ne.s32.totalorder %s121, %s123
    %p127 = scmp.eq.s32.totalorder %s11, 0
    %p128 = por %p126, %p127
    %p129 = scmp.ne.s32.totalorder %s121, %s123
    %p130 = scmp.eq.s32.totalorder %s16, 15
    %p131 = por %p129, %p130
    %p132 = scmp.ne.s32.totalorder %s123, %s124
    %p133 = scmp.eq.s32.totalorder %s16, 0
    %p134 = por %p132, %p133
    %p135 = scmp.ne.s32.totalorder %s123, %s124
    %p136 = scmp.eq.s32.totalorder %s17, 15
    %p137 = por %p135, %p136
    %p139 = scmp.ne.s32.totalorder %s124, %s138
    %p140 = scmp.eq.s32.totalorder %s17, 0
    %p141 = por %p139, %p140
    %s143 = sadd.s32 %s142, 1
    %p146 = scmp.eq.s32.totalorder %s11, 15
    %p147 = scmp.ne.s32.totalorder %s142, %s144
    %p148 = scmp.eq.s32.totalorder %s11, 0
    %p149 = por %p147, %p148
    %p150 = scmp.ne.s32.totalorder %s142, %s144
    %p151 = scmp.eq.s32.totalorder %s16, 15
    %p152 = por %p150, %p151
    %p153 = scmp.ne.s32.totalorder %s144, %s145
    %p154 = scmp.eq.s32.totalorder %s16, 0
    %p155 = por %p153, %p154
    %p156 = scmp.ne.s32.totalorder %s144, %s145
    %p157 = scmp.eq.s32.totalorder %s17, 15
    %p158 = por %p156, %p157
    %p160 = scmp.ne.s32.totalorder %s145, %s159
    %p161 = scmp.eq.s32.totalorder %s17, 0
    %p162 = por %p160, %p161
    %s163 = ssub.s32 7, %s19
    %s164 = ssub.s32 7, %s26
    %s165 = ssub.s32 %s18, %s30
    %s166 = ssub.s32 %s163, %s164
    %s167 = sor.u32 %s165, %s166
    %p168 = scmp.eq.s32.totalorder %s167, 0
    %s170 = sadd.s32 %s169, 1
    %s171 = scalar_select %p168, %s169, %s170
    %p174 = pneg %p168
    %p175 = scmp.eq.s32.totalorder %s11, 15
    %p176 = por %p174, %p175
    %p177 = scmp.ne.s32.totalorder %s169, %s172
    %p178 = scmp.eq.s32.totalorder %s11, 0
    %p179 = por %p177, %p178
    %p180 = scmp.ne.s32.totalorder %s169, %s172
    %p181 = scmp.eq.s32.totalorder %s16, 15
    %p182 = por %p180, %p181
    %p183 = scmp.ne.s32.totalorder %s172, %s173
    %p184 = scmp.eq.s32.totalorder %s16, 0
    %p185 = por %p183, %p184
    %p186 = scmp.ne.s32.totalorder %s172, %s173
    %p187 = scmp.eq.s32.totalorder %s17, 15
    %p188 = por %p186, %p187
    %p190 = scmp.ne.s32.totalorder %s173, %s189
    %p191 = scmp.eq.s32.totalorder %s17, 0
    %p192 = por %p190, %p191
    %p193 = scmp.le.s32.totalorder 1, %s11
    %p194 = scmp.lt.s32.totalorder %s11, 17
    %p195 = pnand %p193, %p194
    %p196 = pneg %p195
    // Predicated region
    $region9: #{_lambda_.3} parent=5 // pred_check
      _
    $region10: #{_lambda_.3} parent=5 // pred_check_branch
      %198 = sbr.rel (%p195) target = $region12
    $region11: #{_lambda_.3} parent=5 // pred_region
      %s199 = ssub.s32 %s11, 1
      // Predicated region
      $region13: #{_lambda_.3} parent=11 // pred_check
        %p200 = pneg %p134
      $region14: #{_lambda_.3} parent=11 // pred_check_branch
        %202 = sbr.rel (%p200) target = $region16
      $region15: #{_lambda_.3} parent=11 // pred_region
        _
      $region16: #{_lambda_.3} parent=11 // pred_fallthru
        _
      // Predicated region
      $region17: #{_lambda_.3} parent=11 // pred_check
        %p203 = pneg %p155
      $region18: #{_lambda_.3} parent=11 // pred_check_branch
        %205 = sbr.rel (%p203) target = $region20
      $region19: #{_lambda_.3} parent=11 // pred_region
        _
      $region20: #{_lambda_.3} parent=11 // pred_fallthru
        _
    $region12: #{_lambda_.3} parent=5 // pred_fallthru
      _
    %p206 = scmp.lt.s32.totalorder %s11, 16
    // Predicated region
    $region21: #{_lambda_.3} parent=5 // pred_check
      %p207 = pneg %p206
    $region22: #{_lambda_.3} parent=5 // pred_check_branch
      %209 = sbr.rel (%p207) target = $region24
    $region23: #{_lambda_.3} parent=5 // pred_region
      // Predicated region
      $region25: #{_lambda_.3} parent=23 // pred_check
        %p210 = pneg %p47
      $region26: #{_lambda_.3} parent=23 // pred_check_branch
        %212 = sbr.rel (%p210) target = $region28
      $region27: #{_lambda_.3} parent=23 // pred_region
        %s213 = ssub.s32 7, %s19
        %p214 = scmp.lt.s32.totalorder %s18, 1
        %s215 = scalar_select %p214, %s18, 1
        %p216 = scmp.lt.s32.totalorder %s213, 9
        %s217 = scalar_select %p216, %s213, 9
        %s218 = smul.addr %s217, 6
        %s219 = smul.addr %s215, 60
        %s220 = sadd.s32 %s218, %s219
        %s221 = smul.addr %s220, 4
        %s222 = scalar_lea.vmem %s0, %s221
        %s223 = ssub.s32 7, %s19
      $region28: #{_lambda_.3} parent=23 // pred_fallthru
        _
      // Predicated region
      $region29: #{_lambda_.3} parent=23 // pred_check
        %p224 = pneg %p77
      $region30: #{_lambda_.3} parent=23 // pred_check_branch
        %226 = sbr.rel (%p224) target = $region32
      $region31: #{_lambda_.3} parent=23 // pred_region
        %s227 = ssub.s32 8, %s19
        %p228 = scmp.lt.s32.totalorder %s18, 1
        %s229 = scalar_select %p228, %s18, 1
        %p230 = scmp.lt.s32.totalorder %s227, 9
        %s231 = scalar_select %p230, %s227, 9
        %s232 = smul.addr %s231, 6
        %s233 = smul.addr %s229, 60
        %s234 = sadd.s32 %s232, %s233
        %s235 = smul.addr %s234, 4
        %s236 = scalar_lea.vmem %s1, %s235
        %s237 = ssub.s32 8, %s19
      $region32: #{_lambda_.3} parent=23 // pred_fallthru
        _
      // Predicated region
      $region33: #{_lambda_.3} parent=23 // pred_check
        %p238 = pneg %p107
      $region34: #{_lambda_.3} parent=23 // pred_check_branch
        %240 = sbr.rel (%p238) target = $region36
      $region35: #{_lambda_.3} parent=23 // pred_region
        %s241 = ssub.s32 9, %s19
        %p242 = scmp.lt.s32.totalorder %s18, 1
        %s243 = scalar_select %p242, %s18, 1
        %p244 = scmp.lt.s32.totalorder %s241, 9
        %s245 = scalar_select %p244, %s241, 9
        %s246 = smul.addr %s245, 6
        %s247 = smul.addr %s243, 60
        %s248 = sadd.s32 %s246, %s247
        %s249 = smul.addr %s248, 4
        %s250 = scalar_lea.vmem %s2, %s249
        %s251 = ssub.s32 9, %s19
      $region36: #{_lambda_.3} parent=23 // pred_fallthru
        _
    $region24: #{_lambda_.3} parent=5 // pred_fallthru
      _
    %p252 = scmp.le.s32.totalorder 1, %s11
    %p253 = scmp.lt.s32.totalorder %s11, 17
    %p254 = pnand %p252, %p253
    %p255 = pneg %p254
    // Predicated region
    $region37: #{_lambda_.3} parent=5 // pred_check
      _
    $region38: #{_lambda_.3} parent=5 // pred_check_branch
      %257 = sbr.rel (%p254) target = $region40
    $region39: #{_lambda_.3} parent=5 // pred_region
      %s258 = ssub.s32 %s11, 1
      %s259 = ssub.s32 7, %s21
      %p260 = scmp.lt.s32.totalorder %s20, 1
      %s261 = scalar_select %p260, %s20, 1
      %p262 = scmp.lt.s32.totalorder %s259, 9
      %s263 = scalar_select %p262, %s259, 9
      %s264 = smul.addr %s263, 6
      %s265 = smul.addr %s261, 60
      %s266 = sadd.s32 %s264, %s265
      %s267 = smul.addr %s266, 4
      %s268 = scalar_lea.vmem %s0, %s267
      %p269 = pneg %p53
      %p270 = pneg %p50
      %s271 = ssub.s32 8, %s21
      %p272 = scmp.lt.s32.totalorder %s20, 1
      %s273 = scalar_select %p272, %s20, 1
      %p274 = scmp.lt.s32.totalorder %s271, 9
      %s275 = scalar_select %p274, %s271, 9
      %s276 = smul.addr %s275, 6
      %s277 = smul.addr %s273, 60
      %s278 = sadd.s32 %s276, %s277
      %s279 = smul.addr %s278, 4
      %s280 = scalar_lea.vmem %s1, %s279
      %p281 = pneg %p83
      %p282 = pneg %p80
      %s283 = ssub.s32 9, %s21
      %p284 = scmp.lt.s32.totalorder %s20, 1
      %s285 = scalar_select %p284, %s20, 1
      %p286 = scmp.lt.s32.totalorder %s283, 9
      %s287 = scalar_select %p286, %s283, 9
      %s288 = smul.addr %s287, 6
      %s289 = smul.addr %s285, 60
      %s290 = sadd.s32 %s288, %s289
      %s291 = smul.addr %s290, 4
      %s292 = scalar_lea.vmem %s2, %s291
      %p293 = pneg %p113
      %p294 = pneg %p110
      %p295 = pneg %p134
      %p296 = pneg %p131
      %p297 = pneg %p155
      %p298 = pneg %p152
      %p299 = pneg %p185
      %p300 = pneg %p182
      %s301 = ssub.s32 7, %s21
      %p302 = scmp.lt.s32.totalorder %s20, 1
      %s303 = scalar_select %p302, %s20, 1
      %p304 = scmp.lt.s32.totalorder %s301, 7
      %s305 = scalar_select %p304, %s301, 7
      %s306 = smul.addr %s305, 2
      %s307 = smul.addr %s303, 16
      %s308 = sadd.s32 %s306, %s307
      %s309 = smul.addr %s308, 4
      %s310 = scalar_lea.vmem %s5, %s309
      %s311 = ssub.s32 7, %s21
      %p312 = scmp.lt.s32.totalorder %s20, 1
      %s313 = scalar_select %p312, %s20, 1
      %p314 = scmp.lt.s32.totalorder %s311, 9
      %s315 = scalar_select %p314, %s311, 9
      %s316 = smul.addr %s315, 6
      %s317 = smul.addr %s313, 60
      %s318 = sadd.s32 %s316, %s317
      %s319 = smul.addr %s318, 4
      %s320 = scalar_lea.vmem %s0, %s319
      %s321 = ssub.s32 7, %s21
      %s322 = ssub.s32 8, %s21
      %p323 = scmp.lt.s32.totalorder %s20, 1
      %s324 = scalar_select %p323, %s20, 1
      %p325 = scmp.lt.s32.totalorder %s322, 9
      %s326 = scalar_select %p325, %s322, 9
      %s327 = smul.addr %s326, 6
      %s328 = smul.addr %s324, 60
      %s329 = sadd.s32 %s327, %s328
      %s330 = smul.addr %s329, 4
      %s331 = scalar_lea.vmem %s1, %s330
      %s332 = ssub.s32 8, %s21
      %s333 = ssub.s32 9, %s21
      %p334 = scmp.lt.s32.totalorder %s20, 1
      %s335 = scalar_select %p334, %s20, 1
      %p336 = scmp.lt.s32.totalorder %s333, 9
      %s337 = scalar_select %p336, %s333, 9
      %s338 = smul.addr %s337, 6
      %s339 = smul.addr %s335, 60
      %s340 = sadd.s32 %s338, %s339
      %s341 = smul.addr %s340, 4
      %s342 = scalar_lea.vmem %s2, %s341
      %s343 = ssub.s32 9, %s21
      %s344 = ssub.s32 7, %s21
      %p345 = scmp.lt.s32.totalorder %s20, 1
      %s346 = scalar_select %p345, %s20, 1
      %p347 = scmp.lt.s32.totalorder %s344, 7
      %s348 = scalar_select %p347, %s344, 7
      %s349 = smul.addr %s348, 2
      %s350 = smul.addr %s346, 16
      %s351 = sadd.s32 %s349, %s350
      %s352 = smul.addr %s351, 4
      %s353 = scalar_lea.vmem %s5, %s352
      %s354 = ssub.s32 7, %s21
      %p356 = scmp.eq.s32.totalorder %s21, 0
      // Predicated region
      $region41: #{_lambda_.3} parent=39 // pred_check
        %p357 = pneg %p356
      $region42: #{_lambda_.3} parent=39 // pred_check_branch
        %359 = sbr.rel (%p357) target = $region44
      $region43: #{_lambda_.3} parent=39 // pred_region
        %360 = vst [vmem:[#allocation2] sm:$0xff] 0.0
        %361 = vst [vmem:[#allocation2 + $0x8] sm:$0xff] 0.0
      $region44: #{_lambda_.3} parent=39 // pred_fallthru
        _
      %v362 = vld [vmem:[%s320] sm:$0xff]
      %v363 = vld [vmem:[%s320 + $0x8] sm:$0xff]
      %v364 = vld [vmem:[%s3] sm:$0xff]
      %v365 = vld [vmem:[%s3 + $0x8] sm:$0xff]
      %v366 = vld [vmem:[%s3 + $0x10] sm:$0xff]
      %v367 = vld [vmem:[%s3 + $0x18] sm:$0xff]
      %v368 = vld [vmem:[%s3 + $0x20] sm:$0xff]
      %v369 = vld [vmem:[%s3 + $0x28] sm:$0xff]
      %v370 = vld [vmem:[%s3 + $0x30] sm:$0xff]
      %v371 = vld [vmem:[%s3 + $0x38] sm:$0xff]
      %v372 = vld [vmem:[%s3 + $0x40] sm:$0xff]
      %v373 = vld [vmem:[%s3 + $0x48] sm:$0xff]
      %v374 = vld [vmem:[%s3 + $0x50] sm:$0xff]
      %v375 = vld [vmem:[%s3 + $0x58] sm:$0xff]
      %v376 = vld [vmem:[%s3 + $0x60] sm:$0xff]
      %v377 = vld [vmem:[%s3 + $0x68] sm:$0xff]
      %v378 = vld [vmem:[%s3 + $0x70] sm:$0xff]
      %v379 = vld [vmem:[%s3 + $0x78] sm:$0xff]
      %v380 = vld [vmem:[%s3 + $0x80] sm:$0xff]
      %v381 = vld [vmem:[%s3 + $0x88] sm:$0xff]
      %v382 = vld [vmem:[%s320 + $0x10] sm:$0x11]
      %s383 = scalar_lea.vmem %s3, 144
      %v384 = vld [vmem:[%s383] sm:$0xff]
      %v385 = vld [vmem:[%s383 + $0x8] sm:$0xff]
      %v386 = vld [vmem:[%s383 + $0x10] sm:$0xff]
      %v387 = vld [vmem:[%s383 + $0x18] sm:$0xff]
      %v388 = vld [vmem:[%s383 + $0x20] sm:$0xff]
      %v389 = vld [vmem:[%s383 + $0x28] sm:$0xff]
      %v390 = vld [vmem:[%s383 + $0x30] sm:$0xff]
      %v391 = vld [vmem:[%s383 + $0x38] sm:$0xff]
      %v392 = vld [vmem:[%s383 + $0x40] sm:$0xff]
      %v393 = vld [vmem:[%s383 + $0x48] sm:$0xff]
      %v394 = vld [vmem:[%s383 + $0x50] sm:$0xff]
      %v395 = vld [vmem:[%s383 + $0x58] sm:$0xff]
      %v396 = vld [vmem:[%s383 + $0x60] sm:$0xff]
      %v397 = vld [vmem:[%s383 + $0x68] sm:$0xff]
      %v398 = vld [vmem:[%s383 + $0x70] sm:$0xff]
      %v399 = vld [vmem:[%s383 + $0x78] sm:$0xff]
      %v400 = vld [vmem:[%s383 + $0x80] sm:$0xff]
      %v401 = vld [vmem:[%s383 + $0x88] sm:$0xff]
      %v405 = vunpack.c.l.b16 %v362
      %v406 = vunpack.c.h.b16 %v362
      %v407 = vunpack.c.l.b16 %v363
      %v408 = vunpack.c.h.b16 %v363
      %v409 = vunpack.c.l.b16 %v382
      %v410 = vunpack.c.h.b16 %v382
      %v411 = vpack.c.b16 %v407, %v405
      %v412 = vpack.c.b16 %v408, %v406
      %v413 = vpack.c.b16 %v409, %v409
      %v414 = vpack.c.b16 %v410, %v410
      %vm415 = vsmask.f32 7424
      %v417 = vshrl.u32 %v411, 16
      %v419 = vshll.u32 %v411, 16
      %v421 = vrot.slane %v419, 1
      %v422 = vor.u32 %v417, %v421
      %v424 = vshll.u32 %v413, 16
      %v426 = vrot.slane %v424, 1
      %v427 = vsel %vm415, %v422, %v426
      %v429 = vshrl.u32 %v412, 16
      %v431 = vshll.u32 %v412, 16
      %v433 = vrot.slane %v431, 1
      %v434 = vor.u32 %v429, %v433
      %v436 = vshll.u32 %v414, 16
      %v438 = vrot.slane %v436, 1
      %v439 = vsel %vm415, %v434, %v438
      %v459 = vunpack.c.l.b16 %v384
      %v460 = vunpack.c.h.b16 %v384
      %v461 = vunpack.c.l.b16 %v385
      %v462 = vunpack.c.h.b16 %v385
      %v463 = vunpack.c.l.b16 %v386
      %v464 = vunpack.c.h.b16 %v386
      %v465 = vunpack.c.l.b16 %v387
      %v466 = vunpack.c.h.b16 %v387
      %v467 = vunpack.c.l.b16 %v388
      %v468 = vunpack.c.h.b16 %v388
      %v469 = vunpack.c.l.b16 %v389
      %v470 = vunpack.c.h.b16 %v389
      %v471 = vunpack.c.l.b16 %v390
      %v472 = vunpack.c.h.b16 %v390
      %v473 = vunpack.c.l.b16 %v391
      %v474 = vunpack.c.h.b16 %v391
      %v475 = vunpack.c.l.b16 %v392
      %v476 = vunpack.c.h.b16 %v392
      %v477 = vunpack.c.l.b16 %v393
      %v478 = vunpack.c.h.b16 %v393
      %v479 = vunpack.c.l.b16 %v394
      %v480 = vunpack.c.h.b16 %v394
      %v481 = vunpack.c.l.b16 %v395
      %v482 = vunpack.c.h.b16 %v395
      %v483 = vunpack.c.l.b16 %v396
      %v484 = vunpack.c.h.b16 %v396
      %v485 = vunpack.c.l.b16 %v397
      %v486 = vunpack.c.h.b16 %v397
      %v487 = vunpack.c.l.b16 %v398
      %v488 = vunpack.c.h.b16 %v398
      %v489 = vunpack.c.l.b16 %v399
      %v490 = vunpack.c.h.b16 %v399
      %v491 = vunpack.c.l.b16 %v400
      %v492 = vunpack.c.h.b16 %v400
      %v493 = vunpack.c.l.b16 %v401
      %v494 = vunpack.c.h.b16 %v401
      %v495 = vpack.c.b16 %v461, %v459
      %v496 = vpack.c.b16 %v462, %v460
      %v497 = vpack.c.b16 %v465, %v463
      %v498 = vpack.c.b16 %v466, %v464
      %v499 = vpack.c.b16 %v469, %v467
      %v500 = vpack.c.b16 %v470, %v468
      %v501 = vpack.c.b16 %v473, %v471
      %v502 = vpack.c.b16 %v474, %v472
      %v503 = vpack.c.b16 %v477, %v475
      %v504 = vpack.c.b16 %v478, %v476
      %v505 = vpack.c.b16 %v481, %v479
      %v506 = vpack.c.b16 %v482, %v480
      %v507 = vpack.c.b16 %v485, %v483
      %v508 = vpack.c.b16 %v486, %v484
      %v509 = vpack.c.b16 %v489, %v487
      %v510 = vpack.c.b16 %v490, %v488
      %v511 = vpack.c.b16 %v493, %v491
      %v512 = vpack.c.b16 %v494, %v492
      %vm531 = vcmask 130048
      %v533 = vsel %vm531, %v439, 0
      %535 = vmatprep.subr.bf16.mxu0 %v496
      %536 = vmatpush1.bf16.msra.mxu0 %v495
      %537 = vmatprep.subr.bf16.mxu0 %v498
      %538 = vmatpush1.bf16.msra.mxu0 %v497
      %539 = vmatprep.subr.bf16.mxu0 %v500
      %540 = vmatpush1.bf16.msra.mxu0 %v499
      %541 = vmatprep.subr.bf16.mxu0 %v502
      %542 = vmatpush1.bf16.msra.mxu0 %v501
      %543 = vmatprep.subr.bf16.mxu0 %v504
      %544 = vmatpush1.bf16.msra.mxu0 %v503
      %545 = vmatprep.subr.bf16.mxu0 %v506
      %546 = vmatpush1.bf16.msra.mxu0 %v505
      %547 = vmatprep.subr.bf16.mxu0 %v508
      %548 = vmatpush1.bf16.msra.mxu0 %v507
      %549 = vmatprep.subr.bf16.mxu0 %v510
      %550 = vmatpush1.bf16.msra.mxu0 %v509
      %551 = vmatprep.subr.bf16.mxu0 %v512
      %552 = vmatpush1.bf16.msra.mxu0 %v511
      %553 = vmatprep.subr.bf16.mxu0 0
      %554 = vmatpush1.bf16.msra.mxu0 0
      %555 = vmatprep.subr.bf16.mxu0 0
      %556 = vmatpush1.bf16.msra.mxu0 0
      %557 = vmatprep.subr.bf16.mxu0 0
      %558 = vmatpush1.bf16.msra.mxu0 0
      %559 = vmatprep.subr.bf16.mxu0 0
      %560 = vmatpush1.bf16.msra.mxu0 0
      %561 = vmatprep.subr.bf16.mxu0 0
      %562 = vmatpush1.bf16.msra.mxu0 0
      %563 = vmatprep.subr.bf16.mxu0 0
      %564 = vmatpush1.bf16.msra.mxu0 0
      %565 = vmatprep.subr.bf16.mxu0 0
      %566 = vmatpush1.bf16.msra.mxu0 0
      %567 = vmatprep.mubr.bf16.mxu0 %v533
      %568 = vmatmul.mubr.bf16.gmra.mrb[0].mxu0 %v427
      %v569 = vpop.f32.mrb[0].mxu0
      %v570 = vadd.f32 0.0, %v569
      %v571 = vpop.f32.mrb[0].mxu0
      %v572 = vadd.f32 0.0, %v571
      %v573 = vpop.f32.mrb[0].mxu0
      %v574 = vadd.f32 0.0, %v573
      %v575 = vpop.f32.mrb[0].mxu0
      %v576 = vadd.f32 0.0, %v575
      %577 = vdwg.mxu0
      %v597 = vunpack.c.l.b16 %v364
      %v598 = vunpack.c.h.b16 %v364
      %v599 = vunpack.c.l.b16 %v365
      %v600 = vunpack.c.h.b16 %v365
      %v601 = vunpack.c.l.b16 %v366
      %v602 = vunpack.c.h.b16 %v366
      %v603 = vunpack.c.l.b16 %v367
      %v604 = vunpack.c.h.b16 %v367
      %v605 = vunpack.c.l.b16 %v368
      %v606 = vunpack.c.h.b16 %v368
      %v607 = vunpack.c.l.b16 %v369
      %v608 = vunpack.c.h.b16 %v369
      %v609 = vunpack.c.l.b16 %v370
      %v610 = vunpack.c.h.b16 %v370
      %v611 = vunpack.c.l.b16 %v371
      %v612 = vunpack.c.h.b16 %v371
      %v613 = vunpack.c.l.b16 %v372
      %v614 = vunpack.c.h.b16 %v372
      %v615 = vunpack.c.l.b16 %v373
      %v616 = vunpack.c.h.b16 %v373
      %v617 = vunpack.c.l.b16 %v374
      %v618 = vunpack.c.h.b16 %v374
      %v619 = vunpack.c.l.b16 %v375
      %v620 = vunpack.c.h.b16 %v375
      %v621 = vunpack.c.l.b16 %v376
      %v622 = vunpack.c.h.b16 %v376
      %v623 = vunpack.c.l.b16 %v377
      %v624 = vunpack.c.h.b16 %v377
      %v625 = vunpack.c.l.b16 %v378
      %v626 = vunpack.c.h.b16 %v378
      %v627 = vunpack.c.l.b16 %v379
      %v628 = vunpack.c.h.b16 %v379
      %v629 = vunpack.c.l.b16 %v380
      %v630 = vunpack.c.h.b16 %v380
      %v631 = vunpack.c.l.b16 %v381
      %v632 = vunpack.c.h.b16 %v381
      %v633 = vpack.c.b16 %v599, %v597
      %v634 = vpack.c.b16 %v600, %v598
      %v635 = vpack.c.b16 %v603, %v601
      %v636 = vpack.c.b16 %v604, %v602
      %v637 = vpack.c.b16 %v607, %v605
      %v638 = vpack.c.b16 %v608, %v606
      %v639 = vpack.c.b16 %v611, %v609
      %v640 = vpack.c.b16 %v612, %v610
      %v641 = vpack.c.b16 %v615, %v613
      %v642 = vpack.c.b16 %v616, %v614
      %v643 = vpack.c.b16 %v619, %v617
      %v644 = vpack.c.b16 %v620, %v618
      %v645 = vpack.c.b16 %v623, %v621
      %v646 = vpack.c.b16 %v624, %v622
      %v647 = vpack.c.b16 %v627, %v625
      %v648 = vpack.c.b16 %v628, %v626
      %v649 = vpack.c.b16 %v631, %v629
      %v650 = vpack.c.b16 %v632, %v630
      %v669 = vsel %vm531, %v412, 0
      %671 = vmatprep.subr.bf16.mxu0 %v634
      %672 = vmatpush1.bf16.msra.mxu0 %v633
      %673 = vmatprep.subr.bf16.mxu0 %v636
      %674 = vmatpush1.bf16.msra.mxu0 %v635
      %675 = vmatprep.subr.bf16.mxu0 %v638
      %676 = vmatpush1.bf16.msra.mxu0 %v637
      %677 = vmatprep.subr.bf16.mxu0 %v640
      %678 = vmatpush1.bf16.msra.mxu0 %v639
      %679 = vmatprep.subr.bf16.mxu0 %v642
      %680 = vmatpush1.bf16.msra.mxu0 %v641
      %681 = vmatprep.subr.bf16.mxu0 %v644
      %682 = vmatpush1.bf16.msra.mxu0 %v643
      %683 = vmatprep.subr.bf16.mxu0 %v646
      %684 = vmatpush1.bf16.msra.mxu0 %v645
      %685 = vmatprep.subr.bf16.mxu0 %v648
      %686 = vmatpush1.bf16.msra.mxu0 %v647
      %687 = vmatprep.subr.bf16.mxu0 %v650
      %688 = vmatpush1.bf16.msra.mxu0 %v649
      %689 = vmatprep.subr.bf16.mxu0 0
      %690 = vmatpush1.bf16.msra.mxu0 0
      %691 = vmatprep.subr.bf16.mxu0 0
      %692 = vmatpush1.bf16.msra.mxu0 0
      %693 = vmatprep.subr.bf16.mxu0 0
      %694 = vmatpush1.bf16.msra.mxu0 0
      %695 = vmatprep.subr.bf16.mxu0 0
      %696 = vmatpush1.bf16.msra.mxu0 0
      %697 = vmatprep.subr.bf16.mxu0 0
      %698 = vmatpush1.bf16.msra.mxu0 0
      %699 = vmatprep.subr.bf16.mxu0 0
      %700 = vmatpush1.bf16.msra.mxu0 0
      %701 = vmatprep.subr.bf16.mxu0 0
      %702 = vmatpush1.bf16.msra.mxu0 0
      %703 = vmatprep.mubr.bf16.mxu0 %v669
      %704 = vmatmul.mubr.bf16.gmra.mrb[0].mxu0 %v411
      %v705 = vpop.f32.mrb[0].mxu0
      %v706 = vadd.f32 %v570, %v705
      %v707 = vpop.f32.mrb[0].mxu0
      %v708 = vadd.f32 %v572, %v707
      %v709 = vpop.f32.mrb[0].mxu0
      %v710 = vadd.f32 %v574, %v709
      %v711 = vpop.f32.mrb[0].mxu0
      %v712 = vadd.f32 %v576, %v711
      %713 = vdwg.mxu0
      %v714 = vld [vmem:[%s320] sm:$0xee]
      %s715 = scalar_lea.vmem %s3, 288
      %v716 = vld [vmem:[%s715] sm:$0xff]
      %v717 = vld [vmem:[%s715 + $0x8] sm:$0xff]
      %v718 = vld [vmem:[%s715 + $0x10] sm:$0xff]
      %v719 = vld [vmem:[%s715 + $0x18] sm:$0xff]
      %v720 = vld [vmem:[%s715 + $0x20] sm:$0xff]
      %v721 = vld [vmem:[%s715 + $0x28] sm:$0xff]
      %v722 = vld [vmem:[%s715 + $0x30] sm:$0xff]
      %v723 = vld [vmem:[%s715 + $0x38] sm:$0xff]
      %v724 = vld [vmem:[%s715 + $0x40] sm:$0xff]
      %v725 = vld [vmem:[%s715 + $0x48] sm:$0xff]
      %v726 = vld [vmem:[%s715 + $0x50] sm:$0xff]
      %v727 = vld [vmem:[%s715 + $0x58] sm:$0xff]
      %v728 = vld [vmem:[%s715 + $0x60] sm:$0xff]
      %v729 = vld [vmem:[%s715 + $0x68] sm:$0xff]
      %v730 = vld [vmem:[%s715 + $0x70] sm:$0xff]
      %v731 = vld [vmem:[%s715 + $0x78] sm:$0xff]
      %v732 = vld [vmem:[%s715 + $0x80] sm:$0xff]
      %v733 = vld [vmem:[%s715 + $0x88] sm:$0xff]
      %v735 = vunpack.c.l.b16 %v714
      %v736 = vunpack.c.h.b16 %v714
      %v737 = vpack.c.b16 %v407, %v735
      %v738 = vpack.c.b16 %v408, %v736
      %vm739 = vcmask 1046528
      %v740 = vrot.slane %v737, 1
      %v741 = vrot.slane %v413, 1
      %v742 = vsel %vm739, %v740, %v741
      %v743 = vrot.slane %v738, 1
      %v744 = vrot.slane %v414, 1
      %v745 = vsel %vm739, %v743, %v744
      %v765 = vunpack.c.l.b16 %v716
      %v766 = vunpack.c.h.b16 %v716
      %v767 = vunpack.c.l.b16 %v717
      %v768 = vunpack.c.h.b16 %v717
      %v769 = vunpack.c.l.b16 %v718
      %v770 = vunpack.c.h.b16 %v718
      %v771 = vunpack.c.l.b16 %v719
      %v772 = vunpack.c.h.b16 %v719
      %v773 = vunpack.c.l.b16 %v720
      %v774 = vunpack.c.h.b16 %v720
      %v775 = vunpack.c.l.b16 %v721
      %v776 = vunpack.c.h.b16 %v721
      %v777 = vunpack.c.l.b16 %v722
      %v778 = vunpack.c.h.b16 %v722
      %v779 = vunpack.c.l.b16 %v723
      %v780 = vunpack.c.h.b16 %v723
      %v781 = vunpack.c.l.b16 %v724
      %v782 = vunpack.c.h.b16 %v724
      %v783 = vunpack.c.l.b16 %v725
      %v784 = vunpack.c.h.b16 %v725
      %v785 = vunpack.c.l.b16 %v726
      %v786 = vunpack.c.h.b16 %v726
      %v787 = vunpack.c.l.b16 %v727
      %v788 = vunpack.c.h.b16 %v727
      %v789 = vunpack.c.l.b16 %v728
      %v790 = vunpack.c.h.b16 %v728
      %v791 = vunpack.c.l.b16 %v729
      %v792 = vunpack.c.h.b16 %v729
      %v793 = vunpack.c.l.b16 %v730
      %v794 = vunpack.c.h.b16 %v730
      %v795 = vunpack.c.l.b16 %v731
      %v796 = vunpack.c.h.b16 %v731
      %v797 = vunpack.c.l.b16 %v732
      %v798 = vunpack.c.h.b16 %v732
      %v799 = vunpack.c.l.b16 %v733
      %v800 = vunpack.c.h.b16 %v733
      %v801 = vpack.c.b16 %v767, %v765
      %v802 = vpack.c.b16 %v768, %v766
      %v803 = vpack.c.b16 %v771, %v769
      %v804 = vpack.c.b16 %v772, %v770
      %v805 = vpack.c.b16 %v775, %v773
      %v806 = vpack.c.b16 %v776, %v774
      %v807 = vpack.c.b16 %v779, %v777
      %v808 = vpack.c.b16 %v780, %v778
      %v809 = vpack.c.b16 %v783, %v781
      %v810 = vpack.c.b16 %v784, %v782
      %v811 = vpack.c.b16 %v787, %v785
      %v812 = vpack.c.b16 %v788, %v786
      %v813 = vpack.c.b16 %v791, %v789
      %v814 = vpack.c.b16 %v792, %v790
      %v815 = vpack.c.b16 %v795, %v793
      %v816 = vpack.c.b16 %v796, %v794
      %v817 = vpack.c.b16 %v799, %v797
      %v818 = vpack.c.b16 %v800, %v798
      %v838 = vsel %vm531, %v745, 0
      %840 = vmatprep.subr.bf16.mxu0 %v802
      %841 = vmatpush1.bf16.msra.mxu0 %v801
      %842 = vmatprep.subr.bf16.mxu0 %v804
      %843 = vmatpush1.bf16.msra.mxu0 %v803
      %844 = vmatprep.subr.bf16.mxu0 %v806
      %845 = vmatpush1.bf16.msra.mxu0 %v805
      %846 = vmatprep.subr.bf16.mxu0 %v808
      %847 = vmatpush1.bf16.msra.mxu0 %v807
      %848 = vmatprep.subr.bf16.mxu0 %v810
      %849 = vmatpush1.bf16.msra.mxu0 %v809
      %850 = vmatprep.subr.bf16.mxu0 %v812
      %851 = vmatpush1.bf16.msra.mxu0 %v811
      %852 = vmatprep.subr.bf16.mxu0 %v814
      %853 = vmatpush1.bf16.msra.mxu0 %v813
      %854 = vmatprep.subr.bf16.mxu0 %v816
      %855 = vmatpush1.bf16.msra.mxu0 %v815
      %856 = vmatprep.subr.bf16.mxu0 %v818
      %857 = vmatpush1.bf16.msra.mxu0 %v817
      %858 = vmatprep.subr.bf16.mxu0 0
      %859 = vmatpush1.bf16.msra.mxu0 0
      %860 = vmatprep.subr.bf16.mxu0 0
      %861 = vmatpush1.bf16.msra.mxu0 0
      %862 = vmatprep.subr.bf16.mxu0 0
      %863 = vmatpush1.bf16.msra.mxu0 0
      %864 = vmatprep.subr.bf16.mxu0 0
      %865 = vmatpush1.bf16.msra.mxu0 0
      %866 = vmatprep.subr.bf16.mxu0 0
      %867 = vmatpush1.bf16.msra.mxu0 0
      %868 = vmatprep.subr.bf16.mxu0 0
      %869 = vmatpush1.bf16.msra.mxu0 0
      %870 = vmatprep.subr.bf16.mxu0 0
      %871 = vmatpush1.bf16.msra.mxu0 0
      %872 = vmatprep.mubr.bf16.mxu0 %v838
      %873 = vmatmul.mubr.bf16.gmra.mrb[0].mxu0 %v742
      %v874 = vpop.f32.mrb[0].mxu0
      %v875 = vadd.f32 0.0, %v874
      %v876 = vpop.f32.mrb[0].mxu0
      %v877 = vadd.f32 0.0, %v876
      %v878 = vpop.f32.mrb[0].mxu0
      %v879 = vadd.f32 0.0, %v878
      %v880 = vpop.f32.mrb[0].mxu0
      %v881 = vadd.f32 0.0, %v880
      %882 = vdwg.mxu0
      %v883 = vadd.f32 %v706, %v875
      %v884 = vadd.f32 %v708, %v877
      %v885 = vadd.f32 %v710, %v879
      %v886 = vadd.f32 %v712, %v881
      %v887 = vld [vmem:[%s331] sm:$0xff]
      %v888 = vld [vmem:[%s331 + $0x8] sm:$0xff]
      %s889 = scalar_lea.vmem %s3, 432
      %v890 = vld [vmem:[%s889] sm:$0xff]
      %v891 = vld [vmem:[%s889 + $0x8] sm:$0xff]
      %v892 = vld [vmem:[%s889 + $0x10] sm:$0xff]
      %v893 = vld [vmem:[%s889 + $0x18] sm:$0xff]
      %v894 = vld [vmem:[%s889 + $0x20] sm:$0xff]
      %v895 = vld [vmem:[%s889 + $0x28] sm:$0xff]
      %v896 = vld [vmem:[%s889 + $0x30] sm:$0xff]
      %v897 = vld [vmem:[%s889 + $0x38] sm:$0xff]
      %v898 = vld [vmem:[%s889 + $0x40] sm:$0xff]
      %v899 = vld [vmem:[%s889 + $0x48] sm:$0xff]
      %v900 = vld [vmem:[%s889 + $0x50] sm:$0xff]
      %v901 = vld [vmem:[%s889 + $0x58] sm:$0xff]
      %v902 = vld [vmem:[%s889 + $0x60] sm:$0xff]
      %v903 = vld [vmem:[%s889 + $0x68] sm:$0xff]
      %v904 = vld [vmem:[%s889 + $0x70] sm:$0xff]
      %v905 = vld [vmem:[%s889 + $0x78] sm:$0xff]
      %v906 = vld [vmem:[%s889 + $0x80] sm:$0xff]
      %v907 = vld [vmem:[%s889 + $0x88] sm:$0xff]
      %v910 = vunpack.c.l.b16 %v887
      %v911 = vunpack.c.h.b16 %v887
      %v912 = vunpack.c.l.b16 %v888
      %v913 = vunpack.c.h.b16 %v888
      %v914 = vpack.c.b16 %v912, %v910
      %v915 = vpack.c.b16 %v913, %v911
      %v935 = vunpack.c.l.b16 %v890
      %v936 = vunpack.c.h.b16 %v890
      %v937 = vunpack.c.l.b16 %v891
      %v938 = vunpack.c.h.b16 %v891
      %v939 = vunpack.c.l.b16 %v892
      %v940 = vunpack.c.h.b16 %v892
      %v941 = vunpack.c.l.b16 %v893
      %v942 = vunpack.c.h.b16 %v893
      %v943 = vunpack.c.l.b16 %v894
      %v944 = vunpack.c.h.b16 %v894
      %v945 = vunpack.c.l.b16 %v895
      %v946 = vunpack.c.h.b16 %v895
      %v947 = vunpack.c.l.b16 %v896
      %v948 = vunpack.c.h.b16 %v896
      %v949 = vunpack.c.l.b16 %v897
      %v950 = vunpack.c.h.b16 %v897
      %v951 = vunpack.c.l.b16 %v898
      %v952 = vunpack.c.h.b16 %v898
      %v953 = vunpack.c.l.b16 %v899
      %v954 = vunpack.c.h.b16 %v899
      %v955 = vunpack.c.l.b16 %v900
      %v956 = vunpack.c.h.b16 %v900
      %v957 = vunpack.c.l.b16 %v901
      %v958 = vunpack.c.h.b16 %v901
      %v959 = vunpack.c.l.b16 %v902
      %v960 = vunpack.c.h.b16 %v902
      %v961 = vunpack.c.l.b16 %v903
      %v962 = vunpack.c.h.b16 %v903
      %v963 = vunpack.c.l.b16 %v904
      %v964 = vunpack.c.h.b16 %v904
      %v965 = vunpack.c.l.b16 %v905
      %v966 = vunpack.c.h.b16 %v905
      %v967 = vunpack.c.l.b16 %v906
      %v968 = vunpack.c.h.b16 %v906
      %v969 = vunpack.c.l.b16 %v907
      %v970 = vunpack.c.h.b16 %v907
      %v971 = vpack.c.b16 %v937, %v935
      %v972 = vpack.c.b16 %v938, %v936
      %v973 = vpack.c.b16 %v941, %v939
      %v974 = vpack.c.b16 %v942, %v940
      %v975 = vpack.c.b16 %v945, %v943
      %v976 = vpack.c.b16 %v946, %v944
      %v977 = vpack.c.b16 %v949, %v947
      %v978 = vpack.c.b16 %v950, %v948
      %v979 = vpack.c.b16 %v953, %v951
      %v980 = vpack.c.b16 %v954, %v952
      %v981 = vpack.c.b16 %v957, %v955
      %v982 = vpack.c.b16 %v958, %v956
      %v983 = vpack.c.b16 %v961, %v959
      %v984 = vpack.c.b16 %v962, %v960
      %v985 = vpack.c.b16 %v965, %v963
      %v986 = vpack.c.b16 %v966, %v964
      %v987 = vpack.c.b16 %v969, %v967
      %v988 = vpack.c.b16 %v970, %v968
      %v1008 = vsel %vm531, %v915, 0
      %1010 = vmatprep.subr.bf16.mxu0 %v972
      %1011 = vmatpush1.bf16.msra.mxu0 %v971
      %1012 = vmatprep.subr.bf16.mxu0 %v974
      %1013 = vmatpush1.bf16.msra.mxu0 %v973
      %1014 = vmatprep.subr.bf16.mxu0 %v976
      %1015 = vmatpush1.bf16.msra.mxu0 %v975
      %1016 = vmatprep.subr.bf16.mxu0 %v978
      %1017 = vmatpush1.bf16.msra.mxu0 %v977
      %1018 = vmatprep.subr.bf16.mxu0 %v980
      %1019 = vmatpush1.bf16.msra.mxu0 %v979
      %1020 = vmatprep.subr.bf16.mxu0 %v982
      %1021 = vmatpush1.bf16.msra.mxu0 %v981
      %1022 = vmatprep.subr.bf16.mxu0 %v984
      %1023 = vmatpush1.bf16.msra.mxu0 %v983
      %1024 = vmatprep.subr.bf16.mxu0 %v986
      %1025 = vmatpush1.bf16.msra.mxu0 %v985
      %1026 = vmatprep.subr.bf16.mxu0 %v988
      %1027 = vmatpush1.bf16.msra.mxu0 %v987
      %1028 = vmatprep.subr.bf16.mxu0 0
      %1029 = vmatpush1.bf16.msra.mxu0 0
      %1030 = vmatprep.subr.bf16.mxu0 0
      %1031 = vmatpush1.bf16.msra.mxu0 0
      %1032 = vmatprep.subr.bf16.mxu0 0
      %1033 = vmatpush1.bf16.msra.mxu0 0
      %1034 = vmatprep.subr.bf16.mxu0 0
      %1035 = vmatpush1.bf16.msra.mxu0 0
      %1036 = vmatprep.subr.bf16.mxu0 0
      %1037 = vmatpush1.bf16.msra.mxu0 0
      %1038 = vmatprep.subr.bf16.mxu0 0
      %1039 = vmatpush1.bf16.msra.mxu0 0
      %1040 = vmatprep.subr.bf16.mxu0 0
      %1041 = vmatpush1.bf16.msra.mxu0 0
      %1042 = vmatprep.mubr.bf16.mxu0 %v1008
      %1043 = vmatmul.mubr.bf16.gmra.mrb[0].mxu0 %v914
      %v1044 = vpop.f32.mrb[0].mxu0
      %v1045 = vadd.f32 0.0, %v1044
      %v1046 = vpop.f32.mrb[0].mxu0
      %v1047 = vadd.f32 0.0, %v1046
      %v1048 = vpop.f32.mrb[0].mxu0
      %v1049 = vadd.f32 0.0, %v1048
      %v1050 = vpop.f32.mrb[0].mxu0
      %v1051 = vadd.f32 0.0, %v1050
      %1052 = vdwg.mxu0
      %v1053 = vadd.f32 %v883, %v1045
      %v1054 = vadd.f32 %v884, %v1047
      %v1055 = vadd.f32 %v885, %v1049
      %v1056 = vadd.f32 %v886, %v1051
      %v1057 = vld [vmem:[%s331] sm:$0xff]
      %v1058 = vld [vmem:[%s331 + $0x8] sm:$0xff]
      %v1059 = vld [vmem:[%s331 + $0x10] sm:$0x11]
      %s1060 = scalar_lea.vmem %s3, 576
      %v1061 = vld [vmem:[%s1060] sm:$0xff]
      %v1062 = vld [vmem:[%s1060 + $0x8] sm:$0xff]
      %v1063 = vld [vmem:[%s1060 + $0x10] sm:$0xff]
      %v1064 = vld [vmem:[%s1060 + $0x18] sm:$0xff]
      %v1065 = vld [vmem:[%s1060 + $0x20] sm:$0xff]
      %v1066 = vld [vmem:[%s1060 + $0x28] sm:$0xff]
      %v1067 = vld [vmem:[%s1060 + $0x30] sm:$0xff]
      %v1068 = vld [vmem:[%s1060 + $0x38] sm:$0xff]
      %v1069 = vld [vmem:[%s1060 + $0x40] sm:$0xff]
      %v1070 = vld [vmem:[%s1060 + $0x48] sm:$0xff]
      %v1071 = vld [vmem:[%s1060 + $0x50] sm:$0xff]
      %v1072 = vld [vmem:[%s1060 + $0x58] sm:$0xff]
      %v1073 = vld [vmem:[%s1060 + $0x60] sm:$0xff]
      %v1074 = vld [vmem:[%s1060 + $0x68] sm:$0xff]
      %v1075 = vld [vmem:[%s1060 + $0x70] sm:$0xff]
      %v1076 = vld [vmem:[%s1060 + $0x78] sm:$0xff]
      %v1077 = vld [vmem:[%s1060 + $0x80] sm:$0xff]
      %v1078 = vld [vmem:[%s1060 + $0x88] sm:$0xff]
      %v1082 = vunpack.c.l.b16 %v1057
      %v1083 = vunpack.c.h.b16 %v1057
      %v1084 = vunpack.c.l.b16 %v1058
      %v1085 = vunpack.c.h.b16 %v1058
      %v1086 = vunpack.c.l.b16 %v1059
      %v1087 = vunpack.c.h.b16 %v1059
      %v1088 = vpack.c.b16 %v1084, %v1082
      %v1089 = vpack.c.b16 %v1085, %v1083
      %v1090 = vpack.c.b16 %v1086, %v1086
      %v1091 = vpack.c.b16 %v1087, %v1087
      %v1093 = vshrl.u32 %v1088, 16
      %v1095 = vshll.u32 %v1088, 16
      %v1097 = vrot.slane %v1095, 1
      %v1098 = vor.u32 %v1093, %v1097
      %v1100 = vshll.u32 %v1090, 16
      %v1102 = vrot.slane %v1100, 1
      %v1103 = vsel %vm415, %v1098, %v1102
      %v1105 = vshrl.u32 %v1089, 16
      %v1107 = vshll.u32 %v1089, 16
      %v1109 = vrot.slane %v1107, 1
      %v1110 = vor.u32 %v1105, %v1109
      %v1112 = vshll.u32 %v1091, 16
      %v1114 = vrot.slane %v1112, 1
      %v1115 = vsel %vm415, %v1110, %v1114
      %v1135 = vunpack.c.l.b16 %v1061
      %v1136 = vunpack.c.h.b16 %v1061
      %v1137 = vunpack.c.l.b16 %v1062
      %v1138 = vunpack.c.h.b16 %v1062
      %v1139 = vunpack.c.l.b16 %v1063
      %v1140 = vunpack.c.h.b16 %v1063
      %v1141 = vunpack.c.l.b16 %v1064
      %v1142 = vunpack.c.h.b16 %v1064
      %v1143 = vunpack.c.l.b16 %v1065
      %v1144 = vunpack.c.h.b16 %v1065
      %v1145 = vunpack.c.l.b16 %v1066
      %v1146 = vunpack.c.h.b16 %v1066
      %v1147 = vunpack.c.l.b16 %v1067
      %v1148 = vunpack.c.h.b16 %v1067
      %v1149 = vunpack.c.l.b16 %v1068
      %v1150 = vunpack.c.h.b16 %v1068
      %v1151 = vunpack.c.l.b16 %v1069
      %v1152 = vunpack.c.h.b16 %v1069
      %v1153 = vunpack.c.l.b16 %v1070
      %v1154 = vunpack.c.h.b16 %v1070
      %v1155 = vunpack.c.l.b16 %v1071
      %v1156 = vunpack.c.h.b16 %v1071
      %v1157 = vunpack.c.l.b16 %v1072
      %v1158 = vunpack.c.h.b16 %v1072
      %v1159 = vunpack.c.l.b16 %v1073
      %v1160 = vunpack.c.h.b16 %v1073
      %v1161 = vunpack.c.l.b16 %v1074
      %v1162 = vunpack.c.h.b16 %v1074
      %v1163 = vunpack.c.l.b16 %v1075
      %v1164 = vunpack.c.h.b16 %v1075
      %v1165 = vunpack.c.l.b16 %v1076
      %v1166 = vunpack.c.h.b16 %v1076
      %v1167 = vunpack.c.l.b16 %v1077
      %v1168 = vunpack.c.h.b16 %v1077
      %v1169 = vunpack.c.l.b16 %v1078
      %v1170 = vunpack.c.h.b16 %v1078
      %v1171 = vpack.c.b16 %v1137, %v1135
      %v1172 = vpack.c.b16 %v1138, %v1136
      %v1173 = vpack.c.b16 %v1141, %v1139
      %v1174 = vpack.c.b16 %v1142, %v1140
      %v1175 = vpack.c.b16 %v1145, %v1143
      %v1176 = vpack.c.b16 %v1146, %v1144
      %v1177 = vpack.c.b16 %v1149, %v1147
      %v1178 = vpack.c.b16 %v1150, %v1148
      %v1179 = vpack.c.b16 %v1153, %v1151
      %v1180 = vpack.c.b16 %v1154, %v1152
      %v1181 = vpack.c.b16 %v1157, %v1155
      %v1182 = vpack.c.b16 %v1158, %v1156
      %v1183 = vpack.c.b16 %v1161, %v1159
      %v1184 = vpack.c.b16 %v1162, %v1160
      %v1185 = vpack.c.b16 %v1165, %v1163
      %v1186 = vpack.c.b16 %v1166, %v1164
      %v1187 = vpack.c.b16 %v1169, %v1167
      %v1188 = vpack.c.b16 %v1170, %v1168
      %v1208 = vsel %vm531, %v1115, 0
      %1210 = vmatprep.subr.bf16.mxu0 %v1172
      %1211 = vmatpush1.bf16.msra.mxu0 %v1171
      %1212 = vmatprep.subr.bf16.mxu0 %v1174
      %1213 = vmatpush1.bf16.msra.mxu0 %v1173
      %1214 = vmatprep.subr.bf16.mxu0 %v1176
      %1215 = vmatpush1.bf16.msra.mxu0 %v1175
      %1216 = vmatprep.subr.bf16.mxu0 %v1178
      %1217 = vmatpush1.bf16.msra.mxu0 %v1177
      %1218 = vmatprep.subr.bf16.mxu0 %v1180
      %1219 = vmatpush1.bf16.msra.mxu0 %v1179
      %1220 = vmatprep.subr.bf16.mxu0 %v1182
      %1221 = vmatpush1.bf16.msra.mxu0 %v1181
      %1222 = vmatprep.subr.bf16.mxu0 %v1184
      %1223 = vmatpush1.bf16.msra.mxu0 %v1183
      %1224 = vmatprep.subr.bf16.mxu0 %v1186
      %1225 = vmatpush1.bf16.msra.mxu0 %v1185
      %1226 = vmatprep.subr.bf16.mxu0 %v1188
      %1227 = vmatpush1.bf16.msra.mxu0 %v1187
      %1228 = vmatprep.subr.bf16.mxu0 0
      %1229 = vmatpush1.bf16.msra.mxu0 0
      %1230 = vmatprep.subr.bf16.mxu0 0
      %1231 = vmatpush1.bf16.msra.mxu0 0
      %1232 = vmatprep.subr.bf16.mxu0 0
      %1233 = vmatpush1.bf16.msra.mxu0 0
      %1234 = vmatprep.subr.bf16.mxu0 0
      %1235 = vmatpush1.bf16.msra.mxu0 0
      %1236 = vmatprep.subr.bf16.mxu0 0
      %1237 = vmatpush1.bf16.msra.mxu0 0
      %1238 = vmatprep.subr.bf16.mxu0 0
      %1239 = vmatpush1.bf16.msra.mxu0 0
      %1240 = vmatprep.subr.bf16.mxu0 0
      %1241 = vmatpush1.bf16.msra.mxu0 0
      %1242 = vmatprep.mubr.bf16.mxu0 %v1208
      %1243 = vmatmul.mubr.bf16.gmra.mrb[0].mxu0 %v1103
      %v1244 = vpop.f32.mrb[0].mxu0
      %v1245 = vadd.f32 0.0, %v1244
      %v1246 = vpop.f32.mrb[0].mxu0
      %v1247 = vadd.f32 0.0, %v1246
      %v1248 = vpop.f32.mrb[0].mxu0
      %v1249 = vadd.f32 0.0, %v1248
      %v1250 = vpop.f32.mrb[0].mxu0
      %v1251 = vadd.f32 0.0, %v1250
      %1252 = vdwg.mxu0
      %v1253 = vadd.f32 %v1053, %v1245
      %v1254 = vadd.f32 %v1054, %v1247
      %v1255 = vadd.f32 %v1055, %v1249
      %v1256 = vadd.f32 %v1056, %v1251
      %v1257 = vld [vmem:[%s331] sm:$0xee]
      %s1258 = scalar_lea.vmem %s3, 720
      %v1259 = vld [vmem:[%s1258] sm:$0xff]
      %v1260 = vld [vmem:[%s1258 + $0x8] sm:$0xff]
      %v1261 = vld [vmem:[%s1258 + $0x10] sm:$0xff]
      %v1262 = vld [vmem:[%s1258 + $0x18] sm:$0xff]
      %v1263 = vld [vmem:[%s1258 + $0x20] sm:$0xff]
      %v1264 = vld [vmem:[%s1258 + $0x28] sm:$0xff]
      %v1265 = vld [vmem:[%s1258 + $0x30] sm:$0xff]
      %v1266 = vld [vmem:[%s1258 + $0x38] sm:$0xff]
      %v1267 = vld [vmem:[%s1258 + $0x40] sm:$0xff]
      %v1268 = vld [vmem:[%s1258 + $0x48] sm:$0xff]
      %v1269 = vld [vmem:[%s1258 + $0x50] sm:$0xff]
      %v1270 = vld [vmem:[%s1258 + $0x58] sm:$0xff]
      %v1271 = vld [vmem:[%s1258 + $0x60] sm:$0xff]
      %v1272 = vld [vmem:[%s1258 + $0x68] sm:$0xff]
      %v1273 = vld [vmem:[%s1258 + $0x70] sm:$0xff]
      %v1274 = vld [vmem:[%s1258 + $0x78] sm:$0xff]
      %v1275 = vld [vmem:[%s1258 + $0x80] sm:$0xff]
      %v1276 = vld [vmem:[%s1258 + $0x88] sm:$0xff]
      %v1278 = vunpack.c.l.b16 %v1257
      %v1279 = vunpack.c.h.b16 %v1257
      %v1280 = vpack.c.b16 %v1084, %v1278
      %v1281 = vpack.c.b16 %v1085, %v1279
      %v1282 = vrot.slane %v1280, 1
      %v1283 = vrot.slane %v1090, 1
      %v1284 = vsel %vm739, %v1282, %v1283
      %v1285 = vrot.slane %v1281, 1
      %v1286 = vrot.slane %v1091, 1
      %v1287 = vsel %vm739, %v1285, %v1286
      %v1307 = vunpack.c.l.b16 %v1259
      %v1308 = vunpack.c.h.b16 %v1259
      %v1309 = vunpack.c.l.b16 %v1260
      %v1310 = vunpack.c.h.b16 %v1260
      %v1311 = vunpack.c.l.b16 %v1261
      %v1312 = vunpack.c.h.b16 %v1261
      %v1313 = vunpack.c.l.b16 %v1262
      %v1314 = vunpack.c.h.b16 %v1262
      %v1315 = vunpack.c.l.b16 %v1263
      %v1316 = vunpack.c.h.b16 %v1263
      %v1317 = vunpack.c.l.b16 %v1264
      %v1318 = vunpack.c.h.b16 %v1264
      %v1319 = vunpack.c.l.b16 %v1265
      %v1320 = vunpack.c.h.b16 %v1265
      %v1321 = vunpack.c.l.b16 %v1266
      %v1322 = vunpack.c.h.b16 %v1266
      %v1323 = vunpack.c.l.b16 %v1267
      %v1324 = vunpack.c.h.b16 %v1267
      %v1325 = vunpack.c.l.b16 %v1268
      %v1326 = vunpack.c.h.b16 %v1268
      %v1327 = vunpack.c.l.b16 %v1269
      %v1328 = vunpack.c.h.b16 %v1269
      %v1329 = vunpack.c.l.b16 %v1270
      %v1330 = vunpack.c.h.b16 %v1270
      %v1331 = vunpack.c.l.b16 %v1271
      %v1332 = vunpack.c.h.b16 %v1271
      %v1333 = vunpack.c.l.b16 %v1272
      %v1334 = vunpack.c.h.b16 %v1272
      %v1335 = vunpack.c.l.b16 %v1273
      %v1336 = vunpack.c.h.b16 %v1273
      %v1337 = vunpack.c.l.b16 %v1274
      %v1338 = vunpack.c.h.b16 %v1274
      %v1339 = vunpack.c.l.b16 %v1275
      %v1340 = vunpack.c.h.b16 %v1275
      %v1341 = vunpack.c.l.b16 %v1276
      %v1342 = vunpack.c.h.b16 %v1276
      %v1343 = vpack.c.b16 %v1309, %v1307
      %v1344 = vpack.c.b16 %v1310, %v1308
      %v1345 = vpack.c.b16 %v1313, %v1311
      %v1346 = vpack.c.b16 %v1314, %v1312
      %v1347 = vpack.c.b16 %v1317, %v1315
      %v1348 = vpack.c.b16 %v1318, %v1316
      %v1349 = vpack.c.b16 %v1321, %v1319
      %v1350 = vpack.c.b16 %v1322, %v1320
      %v1351 = vpack.c.b16 %v1325, %v1323
      %v1352 = vpack.c.b16 %v1326, %v1324
      %v1353 = vpack.c.b16 %v1329, %v1327
      %v1354 = vpack.c.b16 %v1330, %v1328
      %v1355 = vpack.c.b16 %v1333, %v1331
      %v1356 = vpack.c.b16 %v1334, %v1332
      %v1357 = vpack.c.b16 %v1337, %v1335
      %v1358 = vpack.c.b16 %v1338, %v1336
      %v1359 = vpack.c.b16 %v1341, %v1339
      %v1360 = vpack.c.b16 %v1342, %v1340
      %v1380 = vsel %vm531, %v1287, 0
      %1382 = vmatprep.subr.bf16.mxu0 %v1344
      %1383 = vmatpush1.bf16.msra.mxu0 %v1343
      %1384 = vmatprep.subr.bf16.mxu0 %v1346
      %1385 = vmatpush1.bf16.msra.mxu0 %v1345
      %1386 = vmatprep.subr.bf16.mxu0 %v1348
      %1387 = vmatpush1.bf16.msra.mxu0 %v1347
      %1388 = vmatprep.subr.bf16.mxu0 %v1350
      %1389 = vmatpush1.bf16.msra.mxu0 %v1349
      %1390 = vmatprep.subr.bf16.mxu0 %v1352
      %1391 = vmatpush1.bf16.msra.mxu0 %v1351
      %1392 = vmatprep.subr.bf16.mxu0 %v1354
      %1393 = vmatpush1.bf16.msra.mxu0 %v1353
      %1394 = vmatprep.subr.bf16.mxu0 %v1356
      %1395 = vmatpush1.bf16.msra.mxu0 %v1355
      %1396 = vmatprep.subr.bf16.mxu0 %v1358
      %1397 = vmatpush1.bf16.msra.mxu0 %v1357
      %1398 = vmatprep.subr.bf16.mxu0 %v1360
      %1399 = vmatpush1.bf16.msra.mxu0 %v1359
      %1400 = vmatprep.subr.bf16.mxu0 0
      %1401 = vmatpush1.bf16.msra.mxu0 0
      %1402 = vmatprep.subr.bf16.mxu0 0
      %1403 = vmatpush1.bf16.msra.mxu0 0
      %1404 = vmatprep.subr.bf16.mxu0 0
      %1405 = vmatpush1.bf16.msra.mxu0 0
      %1406 = vmatprep.subr.bf16.mxu0 0
      %1407 = vmatpush1.bf16.msra.mxu0 0
      %1408 = vmatprep.subr.bf16.mxu0 0
      %1409 = vmatpush1.bf16.msra.mxu0 0
      %1410 = vmatprep.subr.bf16.mxu0 0
      %1411 = vmatpush1.bf16.msra.mxu0 0
      %1412 = vmatprep.subr.bf16.mxu0 0
      %1413 = vmatpush1.bf16.msra.mxu0 0
      %1414 = vmatprep.mubr.bf16.mxu0 %v1380
      %1415 = vmatmul.mubr.bf16.gmra.mrb[0].mxu0 %v1284
      %v1416 = vpop.f32.mrb[0].mxu0
      %v1417 = vadd.f32 0.0, %v1416
      %v1418 = vpop.f32.mrb[0].mxu0
      %v1419 = vadd.f32 0.0, %v1418
      %v1420 = vpop.f32.mrb[0].mxu0
      %v1421 = vadd.f32 0.0, %v1420
      %v1422 = vpop.f32.mrb[0].mxu0
      %v1423 = vadd.f32 0.0, %v1422
      %1424 = vdwg.mxu0
      %v1425 = vadd.f32 %v1253, %v1417
      %v1426 = vadd.f32 %v1254, %v1419
      %v1427 = vadd.f32 %v1255, %v1421
      %v1428 = vadd.f32 %v1256, %v1423
      %v1429 = vld [vmem:[%s342] sm:$0xff]
      %v1430 = vld [vmem:[%s342 + $0x8] sm:$0xff]
      %s1431 = scalar_lea.vmem %s3, 864
      %v1432 = vld [vmem:[%s1431] sm:$0xff]
      %v1433 = vld [vmem:[%s1431 + $0x8] sm:$0xff]
      %v1434 = vld [vmem:[%s1431 + $0x10] sm:$0xff]
      %v1435 = vld [vmem:[%s1431 + $0x18] sm:$0xff]
      %v1436 = vld [vmem:[%s1431 + $0x20] sm:$0xff]
      %v1437 = vld [vmem:[%s1431 + $0x28] sm:$0xff]
      %v1438 = vld [vmem:[%s1431 + $0x30] sm:$0xff]
      %v1439 = vld [vmem:[%s1431 + $0x38] sm:$0xff]
      %v1440 = vld [vmem:[%s1431 + $0x40] sm:$0xff]
      %v1441 = vld [vmem:[%s1431 + $0x48] sm:$0xff]
      %v1442 = vld [vmem:[%s1431 + $0x50] sm:$0xff]
      %v1443 = vld [vmem:[%s1431 + $0x58] sm:$0xff]
      %v1444 = vld [vmem:[%s1431 + $0x60] sm:$0xff]
      %v1445 = vld [vmem:[%s1431 + $0x68] sm:$0xff]
      %v1446 = vld [vmem:[%s1431 + $0x70] sm:$0xff]
      %v1447 = vld [vmem:[%s1431 + $0x78] sm:$0xff]
      %v1448 = vld [vmem:[%s1431 + $0x80] sm:$0xff]
      %v1449 = vld [vmem:[%s1431 + $0x88] sm:$0xff]
      %v1452 = vunpack.c.l.b16 %v1429
      %v1453 = vunpack.c.h.b16 %v1429
      %v1454 = vunpack.c.l.b16 %v1430
      %v1455 = vunpack.c.h.b16 %v1430
      %v1456 = vpack.c.b16 %v1454, %v1452
      %v1457 = vpack.c.b16 %v1455, %v1453
      %v1477 = vunpack.c.l.b16 %v1432
      %v1478 = vunpack.c.h.b16 %v1432
      %v1479 = vunpack.c.l.b16 %v1433
      %v1480 = vunpack.c.h.b16 %v1433
      %v1481 = vunpack.c.l.b16 %v1434
      %v1482 = vunpack.c.h.b16 %v1434
      %v1483 = vunpack.c.l.b16 %v1435
      %v1484 = vunpack.c.h.b16 %v1435
      %v1485 = vunpack.c.l.b16 %v1436
      %v1486 = vunpack.c.h.b16 %v1436
      %v1487 = vunpack.c.l.b16 %v1437
      %v1488 = vunpack.c.h.b16 %v1437
      %v1489 = vunpack.c.l.b16 %v1438
      %v1490 = vunpack.c.h.b16 %v1438
      %v1491 = vunpack.c.l.b16 %v1439
      %v1492 = vunpack.c.h.b16 %v1439
      %v1493 = vunpack.c.l.b16 %v1440
      %v1494 = vunpack.c.h.b16 %v1440
      %v1495 = vunpack.c.l.b16 %v1441
      %v1496 = vunpack.c.h.b16 %v1441
      %v1497 = vunpack.c.l.b16 %v1442
      %v1498 = vunpack.c.h.b16 %v1442
      %v1499 = vunpack.c.l.b16 %v1443
      %v1500 = vunpack.c.h.b16 %v1443
      %v1501 = vunpack.c.l.b16 %v1444
      %v1502 = vunpack.c.h.b16 %v1444
      %v1503 = vunpack.c.l.b16 %v1445
      %v1504 = vunpack.c.h.b16 %v1445
      %v1505 = vunpack.c.l.b16 %v1446
      %v1506 = vunpack.c.h.b16 %v1446
      %v1507 = vunpack.c.l.b16 %v1447
      %v1508 = vunpack.c.h.b16 %v1447
      %v1509 = vunpack.c.l.b16 %v1448
      %v1510 = vunpack.c.h.b16 %v1448
      %v1511 = vunpack.c.l.b16 %v1449
      %v1512 = vunpack.c.h.b16 %v1449
      %v1513 = vpack.c.b16 %v1479, %v1477
      %v1514 = vpack.c.b16 %v1480, %v1478
      %v1515 = vpack.c.b16 %v1483, %v1481
      %v1516 = vpack.c.b16 %v1484, %v1482
      %v1517 = vpack.c.b16 %v1487, %v1485
      %v1518 = vpack.c.b16 %v1488, %v1486
      %v1519 = vpack.c.b16 %v1491, %v1489
      %v1520 = vpack.c.b16 %v1492, %v1490
      %v1521 = vpack.c.b16 %v1495, %v1493
      %v1522 = vpack.c.b16 %v1496, %v1494
      %v1523 = vpack.c.b16 %v1499, %v1497
      %v1524 = vpack.c.b16 %v1500, %v1498
      %v1525 = vpack.c.b16 %v1503, %v1501
      %v1526 = vpack.c.b16 %v1504, %v1502
      %v1527 = vpack.c.b16 %v1507, %v1505
      %v1528 = vpack.c.b16 %v1508, %v1506
      %v1529 = vpack.c.b16 %v1511, %v1509
      %v1530 = vpack.c.b16 %v1512, %v1510
      %v1550 = vsel %vm531, %v1457, 0
      %1552 = vmatprep.subr.bf16.mxu0 %v1514
      %1553 = vmatpush1.bf16.msra.mxu0 %v1513
      %1554 = vmatprep.subr.bf16.mxu0 %v1516
      %1555 = vmatpush1.bf16.msra.mxu0 %v1515
      %1556 = vmatprep.subr.bf16.mxu0 %v1518
      %1557 = vmatpush1.bf16.msra.mxu0 %v1517
      %1558 = vmatprep.subr.bf16.mxu0 %v1520
      %1559 = vmatpush1.bf16.msra.mxu0 %v1519
      %1560 = vmatprep.subr.bf16.mxu0 %v1522
      %1561 = vmatpush1.bf16.msra.mxu0 %v1521
      %1562 = vmatprep.subr.bf16.mxu0 %v1524
      %1563 = vmatpush1.bf16.msra.mxu0 %v1523
      %1564 = vmatprep.subr.bf16.mxu0 %v1526
      %1565 = vmatpush1.bf16.msra.mxu0 %v1525
      %1566 = vmatprep.subr.bf16.mxu0 %v1528
      %1567 = vmatpush1.bf16.msra.mxu0 %v1527
      %1568 = vmatprep.subr.bf16.mxu0 %v1530
      %1569 = vmatpush1.bf16.msra.mxu0 %v1529
      %1570 = vmatprep.subr.bf16.mxu0 0
      %1571 = vmatpush1.bf16.msra.mxu0 0
      %1572 = vmatprep.subr.bf16.mxu0 0
      %1573 = vmatpush1.bf16.msra.mxu0 0
      %1574 = vmatprep.subr.bf16.mxu0 0
      %1575 = vmatpush1.bf16.msra.mxu0 0
      %1576 = vmatprep.subr.bf16.mxu0 0
      %1577 = vmatpush1.bf16.msra.mxu0 0
      %1578 = vmatprep.subr.bf16.mxu0 0
      %1579 = vmatpush1.bf16.msra.mxu0 0
      %1580 = vmatprep.subr.bf16.mxu0 0
      %1581 = vmatpush1.bf16.msra.mxu0 0
      %1582 = vmatprep.subr.bf16.mxu0 0
      %1583 = vmatpush1.bf16.msra.mxu0 0
      %1584 = vmatprep.mubr.bf16.mxu0 %v1550
      %1585 = vmatmul.mubr.bf16.gmra.mrb[0].mxu0 %v1456
      %v1586 = vpop.f32.mrb[0].mxu0
      %v1587 = vadd.f32 0.0, %v1586
      %v1588 = vpop.f32.mrb[0].mxu0
      %v1589 = vadd.f32 0.0, %v1588
      %v1590 = vpop.f32.mrb[0].mxu0
      %v1591 = vadd.f32 0.0, %v1590
      %v1592 = vpop.f32.mrb[0].mxu0
      %v1593 = vadd.f32 0.0, %v1592
      %1594 = vdwg.mxu0
      %v1595 = vadd.f32 %v1425, %v1587
      %v1596 = vadd.f32 %v1426, %v1589
      %v1597 = vadd.f32 %v1427, %v1591
      %v1598 = vadd.f32 %v1428, %v1593
      %v1599 = vld [vmem:[%s342] sm:$0xff]
      %v1600 = vld [vmem:[%s342 + $0x8] sm:$0xff]
      %v1601 = vld [vmem:[%s342 + $0x10] sm:$0x11]
      %s1602 = scalar_lea.vmem %s3, 1008
      %v1603 = vld [vmem:[%s1602] sm:$0xff]
      %v1604 = vld [vmem:[%s1602 + $0x8] sm:$0xff]
      %v1605 = vld [vmem:[%s1602 + $0x10] sm:$0xff]
      %v1606 = vld [vmem:[%s1602 + $0x18] sm:$0xff]
      %v1607 = vld [vmem:[%s1602 + $0x20] sm:$0xff]
      %v1608 = vld [vmem:[%s1602 + $0x28] sm:$0xff]
      %v1609 = vld [vmem:[%s1602 + $0x30] sm:$0xff]
      %v1610 = vld [vmem:[%s1602 + $0x38] sm:$0xff]
      %v1611 = vld [vmem:[%s1602 + $0x40] sm:$0xff]
      %v1612 = vld [vmem:[%s1602 + $0x48] sm:$0xff]
      %v1613 = vld [vmem:[%s1602 + $0x50] sm:$0xff]
      %v1614 = vld [vmem:[%s1602 + $0x58] sm:$0xff]
      %v1615 = vld [vmem:[%s1602 + $0x60] sm:$0xff]
      %v1616 = vld [vmem:[%s1602 + $0x68] sm:$0xff]
      %v1617 = vld [vmem:[%s1602 + $0x70] sm:$0xff]
      %v1618 = vld [vmem:[%s1602 + $0x78] sm:$0xff]
      %v1619 = vld [vmem:[%s1602 + $0x80] sm:$0xff]
      %v1620 = vld [vmem:[%s1602 + $0x88] sm:$0xff]
      %v1624 = vunpack.c.l.b16 %v1599
      %v1625 = vunpack.c.h.b16 %v1599
      %v1626 = vunpack.c.l.b16 %v1600
      %v1627 = vunpack.c.h.b16 %v1600
      %v1628 = vunpack.c.l.b16 %v1601
      %v1629 = vunpack.c.h.b16 %v1601
      %v1630 = vpack.c.b16 %v1626, %v1624
      %v1631 = vpack.c.b16 %v1627, %v1625
      %v1632 = vpack.c.b16 %v1628, %v1628
      %v1633 = vpack.c.b16 %v1629, %v1629
      %v1635 = vshrl.u32 %v1630, 16
      %v1637 = vshll.u32 %v1630, 16
      %v1639 = vrot.slane %v1637, 1
      %v1640 = vor.u32 %v1635, %v1639
      %v1642 = vshll.u32 %v1632, 16
      %v1644 = vrot.slane %v1642, 1
      %v1645 = vsel %vm415, %v1640, %v1644
      %v1647 = vshrl.u32 %v1631, 16
      %v1649 = vshll.u32 %v1631, 16
      %v1651 = vrot.slane %v1649, 1
      %v1652 = vor.u32 %v1647, %v1651
      %v1654 = vshll.u32 %v1633, 16
      %v1656 = vrot.slane %v1654, 1
      %v1657 = vsel %vm415, %v1652, %v1656
      %v1677 = vunpack.c.l.b16 %v1603
      %v1678 = vunpack.c.h.b16 %v1603
      %v1679 = vunpack.c.l.b16 %v1604
      %v1680 = vunpack.c.h.b16 %v1604
      %v1681 = vunpack.c.l.b16 %v1605
      %v1682 = vunpack.c.h.b16 %v1605
      %v1683 = vunpack.c.l.b16 %v1606
      %v1684 = vunpack.c.h.b16 %v1606
      %v1685 = vunpack.c.l.b16 %v1607
      %v1686 = vunpack.c.h.b16 %v1607
      %v1687 = vunpack.c.l.b16 %v1608
      %v1688 = vunpack.c.h.b16 %v1608
      %v1689 = vunpack.c.l.b16 %v1609
      %v1690 = vunpack.c.h.b16 %v1609
      %v1691 = vunpack.c.l.b16 %v1610
      %v1692 = vunpack.c.h.b16 %v1610
      %v1693 = vunpack.c.l.b16 %v1611
      %v1694 = vunpack.c.h.b16 %v1611
      %v1695 = vunpack.c.l.b16 %v1612
      %v1696 = vunpack.c.h.b16 %v1612
      %v1697 = vunpack.c.l.b16 %v1613
      %v1698 = vunpack.c.h.b16 %v1613
      %v1699 = vunpack.c.l.b16 %v1614
      %v1700 = vunpack.c.h.b16 %v1614
      %v1701 = vunpack.c.l.b16 %v1615
      %v1702 = vunpack.c.h.b16 %v1615
      %v1703 = vunpack.c.l.b16 %v1616
      %v1704 = vunpack.c.h.b16 %v1616
      %v1705 = vunpack.c.l.b16 %v1617
      %v1706 = vunpack.c.h.b16 %v1617
      %v1707 = vunpack.c.l.b16 %v1618
      %v1708 = vunpack.c.h.b16 %v1618
      %v1709 = vunpack.c.l.b16 %v1619
      %v1710 = vunpack.c.h.b16 %v1619
      %v1711 = vunpack.c.l.b16 %v1620
      %v1712 = vunpack.c.h.b16 %v1620
      %v1713 = vpack.c.b16 %v1679, %v1677
      %v1714 = vpack.c.b16 %v1680, %v1678
      %v1715 = vpack.c.b16 %v1683, %v1681
      %v1716 = vpack.c.b16 %v1684, %v1682
      %v1717 = vpack.c.b16 %v1687, %v1685
      %v1718 = vpack.c.b16 %v1688, %v1686
      %v1719 = vpack.c.b16 %v1691, %v1689
      %v1720 = vpack.c.b16 %v1692, %v1690
      %v1721 = vpack.c.b16 %v1695, %v1693
      %v1722 = vpack.c.b16 %v1696, %v1694
      %v1723 = vpack.c.b16 %v1699, %v1697
      %v1724 = vpack.c.b16 %v1700, %v1698
      %v1725 = vpack.c.b16 %v1703, %v1701
      %v1726 = vpack.c.b16 %v1704, %v1702
      %v1727 = vpack.c.b16 %v1707, %v1705
      %v1728 = vpack.c.b16 %v1708, %v1706
      %v1729 = vpack.c.b16 %v1711, %v1709
      %v1730 = vpack.c.b16 %v1712, %v1710
      %v1750 = vsel %vm531, %v1657, 0
      %1752 = vmatprep.subr.bf16.mxu0 %v1714
      %1753 = vmatpush1.bf16.msra.mxu0 %v1713
      %1754 = vmatprep.subr.bf16.mxu0 %v1716
      %1755 = vmatpush1.bf16.msra.mxu0 %v1715
      %1756 = vmatprep.subr.bf16.mxu0 %v1718
      %1757 = vmatpush1.bf16.msra.mxu0 %v1717
      %1758 = vmatprep.subr.bf16.mxu0 %v1720
      %1759 = vmatpush1.bf16.msra.mxu0 %v1719
      %1760 = vmatprep.subr.bf16.mxu0 %v1722
      %1761 = vmatpush1.bf16.msra.mxu0 %v1721
      %1762 = vmatprep.subr.bf16.mxu0 %v1724
      %1763 = vmatpush1.bf16.msra.mxu0 %v1723
      %1764 = vmatprep.subr.bf16.mxu0 %v1726
      %1765 = vmatpush1.bf16.msra.mxu0 %v1725
      %1766 = vmatprep.subr.bf16.mxu0 %v1728
      %1767 = vmatpush1.bf16.msra.mxu0 %v1727
      %1768 = vmatprep.subr.bf16.mxu0 %v1730
      %1769 = vmatpush1.bf16.msra.mxu0 %v1729
      %1770 = vmatprep.subr.bf16.mxu0 0
      %1771 = vmatpush1.bf16.msra.mxu0 0
      %1772 = vmatprep.subr.bf16.mxu0 0
      %1773 = vmatpush1.bf16.msra.mxu0 0
      %1774 = vmatprep.subr.bf16.mxu0 0
      %1775 = vmatpush1.bf16.msra.mxu0 0
      %1776 = vmatprep.subr.bf16.mxu0 0
      %1777 = vmatpush1.bf16.msra.mxu0 0
      %1778 = vmatprep.subr.bf16.mxu0 0
      %1779 = vmatpush1.bf16.msra.mxu0 0
      %1780 = vmatprep.subr.bf16.mxu0 0
      %1781 = vmatpush1.bf16.msra.mxu0 0
      %1782 = vmatprep.subr.bf16.mxu0 0
      %1783 = vmatpush1.bf16.msra.mxu0 0
      %1784 = vmatprep.mubr.bf16.mxu0 %v1750
      %1785 = vmatmul.mubr.bf16.gmra.mrb[0].mxu0 %v1645
      %v1786 = vpop.f32.mrb[0].mxu0
      %v1787 = vadd.f32 0.0, %v1786
      %v1788 = vpop.f32.mrb[0].mxu0
      %v1789 = vadd.f32 0.0, %v1788
      %v1790 = vpop.f32.mrb[0].mxu0
      %v1791 = vadd.f32 0.0, %v1790
      %v1792 = vpop.f32.mrb[0].mxu0
      %v1793 = vadd.f32 0.0, %v1792
      %1794 = vdwg.mxu0
      %v1795 = vadd.f32 %v1595, %v1787
      %v1796 = vadd.f32 %v1596, %v1789
      %v1797 = vadd.f32 %v1597, %v1791
      %v1798 = vadd.f32 %v1598, %v1793
      %v1799 = vld [vmem:[%s342] sm:$0xee]
      %s1800 = scalar_lea.vmem %s3, 1152
      %v1801 = vld [vmem:[%s1800] sm:$0xff]
      %v1802 = vld [vmem:[%s1800 + $0x8] sm:$0xff]
      %v1803 = vld [vmem:[%s1800 + $0x10] sm:$0xff]
      %v1804 = vld [vmem:[%s1800 + $0x18] sm:$0xff]
      %v1805 = vld [vmem:[%s1800 + $0x20] sm:$0xff]
      %v1806 = vld [vmem:[%s1800 + $0x28] sm:$0xff]
      %v1807 = vld [vmem:[%s1800 + $0x30] sm:$0xff]
      %v1808 = vld [vmem:[%s1800 + $0x38] sm:$0xff]
      %v1809 = vld [vmem:[%s1800 + $0x40] sm:$0xff]
      %v1810 = vld [vmem:[%s1800 + $0x48] sm:$0xff]
      %v1811 = vld [vmem:[%s1800 + $0x50] sm:$0xff]
      %v1812 = vld [vmem:[%s1800 + $0x58] sm:$0xff]
      %v1813 = vld [vmem:[%s1800 + $0x60] sm:$0xff]
      %v1814 = vld [vmem:[%s1800 + $0x68] sm:$0xff]
      %v1815 = vld [vmem:[%s1800 + $0x70] sm:$0xff]
      %v1816 = vld [vmem:[%s1800 + $0x78] sm:$0xff]
      %v1817 = vld [vmem:[%s1800 + $0x80] sm:$0xff]
      %v1818 = vld [vmem:[%s1800 + $0x88] sm:$0xff]
      %v1820 = vunpack.c.l.b16 %v1799
      %v1821 = vunpack.c.h.b16 %v1799
      %v1822 = vpack.c.b16 %v1626, %v1820
      %v1823 = vpack.c.b16 %v1627, %v1821
      %v1824 = vrot.slane %v1822, 1
      %v1825 = vrot.slane %v1632, 1
      %v1826 = vsel %vm739, %v1824, %v1825
      %v1827 = vrot.slane %v1823, 1
      %v1828 = vrot.slane %v1633, 1
      %v1829 = vsel %vm739, %v1827, %v1828
      %v1849 = vunpack.c.l.b16 %v1801
      %v1850 = vunpack.c.h.b16 %v1801
      %v1851 = vunpack.c.l.b16 %v1802
      %v1852 = vunpack.c.h.b16 %v1802
      %v1853 = vunpack.c.l.b16 %v1803
      %v1854 = vunpack.c.h.b16 %v1803
      %v1855 = vunpack.c.l.b16 %v1804
      %v1856 = vunpack.c.h.b16 %v1804
      %v1857 = vunpack.c.l.b16 %v1805
      %v1858 = vunpack.c.h.b16 %v1805
      %v1859 = vunpack.c.l.b16 %v1806
      %v1860 = vunpack.c.h.b16 %v1806
      %v1861 = vunpack.c.l.b16 %v1807
      %v1862 = vunpack.c.h.b16 %v1807
      %v1863 = vunpack.c.l.b16 %v1808
      %v1864 = vunpack.c.h.b16 %v1808
      %v1865 = vunpack.c.l.b16 %v1809
      %v1866 = vunpack.c.h.b16 %v1809
      %v1867 = vunpack.c.l.b16 %v1810
      %v1868 = vunpack.c.h.b16 %v1810
      %v1869 = vunpack.c.l.b16 %v1811
      %v1870 = vunpack.c.h.b16 %v1811
      %v1871 = vunpack.c.l.b16 %v1812
      %v1872 = vunpack.c.h.b16 %v1812
      %v1873 = vunpack.c.l.b16 %v1813
      %v1874 = vunpack.c.h.b16 %v1813
      %v1875 = vunpack.c.l.b16 %v1814
      %v1876 = vunpack.c.h.b16 %v1814
      %v1877 = vunpack.c.l.b16 %v1815
      %v1878 = vunpack.c.h.b16 %v1815
      %v1879 = vunpack.c.l.b16 %v1816
      %v1880 = vunpack.c.h.b16 %v1816
      %v1881 = vunpack.c.l.b16 %v1817
      %v1882 = vunpack.c.h.b16 %v1817
      %v1883 = vunpack.c.l.b16 %v1818
      %v1884 = vunpack.c.h.b16 %v1818
      %v1885 = vpack.c.b16 %v1851, %v1849
      %v1886 = vpack.c.b16 %v1852, %v1850
      %v1887 = vpack.c.b16 %v1855, %v1853
      %v1888 = vpack.c.b16 %v1856, %v1854
      %v1889 = vpack.c.b16 %v1859, %v1857
      %v1890 = vpack.c.b16 %v1860, %v1858
      %v1891 = vpack.c.b16 %v1863, %v1861
      %v1892 = vpack.c.b16 %v1864, %v1862
      %v1893 = vpack.c.b16 %v1867, %v1865
      %v1894 = vpack.c.b16 %v1868, %v1866
      %v1895 = vpack.c.b16 %v1871, %v1869
      %v1896 = vpack.c.b16 %v1872, %v1870
      %v1897 = vpack.c.b16 %v1875, %v1873
      %v1898 = vpack.c.b16 %v1876, %v1874
      %v1899 = vpack.c.b16 %v1879, %v1877
      %v1900 = vpack.c.b16 %v1880, %v1878
      %v1901 = vpack.c.b16 %v1883, %v1881
      %v1902 = vpack.c.b16 %v1884, %v1882
      %v1922 = vsel %vm531, %v1829, 0
      %1924 = vmatprep.subr.bf16.mxu0 %v1886
      %1925 = vmatpush1.bf16.msra.mxu0 %v1885
      %1926 = vmatprep.subr.bf16.mxu0 %v1888
      %1927 = vmatpush1.bf16.msra.mxu0 %v1887
      %1928 = vmatprep.subr.bf16.mxu0 %v1890
      %1929 = vmatpush1.bf16.msra.mxu0 %v1889
      %1930 = vmatprep.subr.bf16.mxu0 %v1892
      %1931 = vmatpush1.bf16.msra.mxu0 %v1891
      %1932 = vmatprep.subr.bf16.mxu0 %v1894
      %1933 = vmatpush1.bf16.msra.mxu0 %v1893
      %1934 = vmatprep.subr.bf16.mxu0 %v1896
      %1935 = vmatpush1.bf16.msra.mxu0 %v1895
      %1936 = vmatprep.subr.bf16.mxu0 %v1898
      %1937 = vmatpush1.bf16.msra.mxu0 %v1897
      %1938 = vmatprep.subr.bf16.mxu0 %v1900
      %1939 = vmatpush1.bf16.msra.mxu0 %v1899
      %1940 = vmatprep.subr.bf16.mxu0 %v1902
      %1941 = vmatpush1.bf16.msra.mxu0 %v1901
      %1942 = vmatprep.subr.bf16.mxu0 0
      %1943 = vmatpush1.bf16.msra.mxu0 0
      %1944 = vmatprep.subr.bf16.mxu0 0
      %1945 = vmatpush1.bf16.msra.mxu0 0
      %1946 = vmatprep.subr.bf16.mxu0 0
      %1947 = vmatpush1.bf16.msra.mxu0 0
      %1948 = vmatprep.subr.bf16.mxu0 0
      %1949 = vmatpush1.bf16.msra.mxu0 0
      %1950 = vmatprep.subr.bf16.mxu0 0
      %1951 = vmatpush1.bf16.msra.mxu0 0
      %1952 = vmatprep.subr.bf16.mxu0 0
      %1953 = vmatpush1.bf16.msra.mxu0 0
      %1954 = vmatprep.subr.bf16.mxu0 0
      %1955 = vmatpush1.bf16.msra.mxu0 0
      %1956 = vmatprep.mubr.bf16.mxu0 %v1922
      %1957 = vmatmul.mubr.bf16.gmra.mrb[0].mxu0 %v1826
      %v1958 = vpop.f32.mrb[0].mxu0
      %v1959 = vadd.f32 0.0, %v1958
      %v1960 = vpop.f32.mrb[0].mxu0
      %v1961 = vadd.f32 0.0, %v1960
      %v1962 = vpop.f32.mrb[0].mxu0
      %v1963 = vadd.f32 0.0, %v1962
      %v1964 = vpop.f32.mrb[0].mxu0
      %v1965 = vadd.f32 0.0, %v1964
      %1966 = vdwg.mxu0
      %v1967 = vadd.f32 %v1795, %v1959
      %v1968 = vadd.f32 %v1796, %v1961
      %v1969 = vadd.f32 %v1797, %v1963
      %v1970 = vadd.f32 %v1798, %v1965
      %v1971 = vld [vmem:[%s4] sm:$0x3]
      %v1973 = vlaneseq
      %v1974 = vshrl.u32 %v1973, 7
      %v1975 = vsub.s32 0, %v1974
      %v1976 = vrot.slane %v1971, %v1975
      %v1977 = vlaneseq
      %v1978 = vshrl.u32 %v1977, 7
      %v1979 = vsub.s32 1, %v1978
      %v1980 = vrot.slane %v1971, %v1979
      %v1983 = vadd.f32 %v1967, %v1976
      %v1984 = vadd.f32 %v1968, %v1980
      %v1985 = vadd.f32 %v1969, %v1976
      %v1986 = vadd.f32 %v1970, %v1980
      %v1987 = vtanh.pop %v1983
      %v1988 = vtanh.pop %v1985
      %v1989 = vxor.u32 %v1984, 2147483648
      %v1990 = vxor.u32 %v1986, 2147483648
      %v1991 = vmul.f32 %v1989, 1.442695
      %v1992 = vpow.pop %v1991
      %v1993 = vmul.f32 %v1990, 1.442695
      %v1994 = vpow.pop %v1993
      %v1995 = vadd.f32 %v1992, 1.0
      %v1996 = vadd.f32 %v1994, 1.0
      %v1997 = vrcp.pop %v1995
      %v1998 = vmul.f32 1.0, %v1997
      %v1999 = vrcp.pop %v1996
      %v2000 = vmul.f32 1.0, %v1999
      %v2001 = vld [vmem:[#allocation2] sm:$0xff]
      %v2002 = vld [vmem:[#allocation2 + $0x8] sm:$0xff]
      %v2003 = vmul.f32 %v1998, %v2001
      %v2004 = vmul.f32 %v2000, %v2002
      %v2005 = vsub.f32 1.0, %v1998
      %v2006 = vsub.f32 1.0, %v2000
      %v2007 = vmul.f32 %v2005, %v1987
      %v2008 = vmul.f32 %v2006, %v1988
      %v2009 = vadd.f32 %v2003, %v2007
      %v2010 = vadd.f32 %v2004, %v2008
      %2011 = vst [vmem:[#allocation2] sm:$0xff] %v2009
      %2012 = vst [vmem:[#allocation2 + $0x8] sm:$0xff] %v2010
      %v2013 = vpack.c.bf16 %v2010, %v2009
      %v2015 = vunpack.c.l.b16 %v2013
      %v2016 = vunpack.c.h.b16 %v2013
      %v2017 = vpack.c.b16 %v2015, %v2015
      %v2018 = vpack.c.b16 %v2016, %v2016
      %2021 = vst [vmem:[%s353] sm:$0xf] %v2017
      %2022 = vst [vmem:[%s353 + $0x4] sm:$0xf] %v2018
      %s2023 = ssub.s32 7, %s21
      %p2024 = scmp.lt.s32.totalorder %s20, 1
      %s2025 = scalar_select %p2024, %s20, 1
      %p2026 = scmp.lt.s32.totalorder %s2023, 7
      %s2027 = scalar_select %p2026, %s2023, 7
      %s2028 = smul.addr %s2027, 2
      %s2029 = smul.addr %s2025, 16
      %s2030 = sadd.s32 %s2028, %s2029
      %s2031 = smul.addr %s2030, 4
      %s2032 = scalar_lea.vmem %s5, %s2031
      // Predicated region
      $region45: #{_lambda_.3} parent=39 // pred_check
        %p2033 = pneg %p182
      $region46: #{_lambda_.3} parent=39 // pred_check_branch
        %2035 = sbr.rel (%p2033) target = $region48
      $region47: #{_lambda_.3} parent=39 // pred_region
        %s2036 = ssub.s32 7, %s21
      $region48: #{_lambda_.3} parent=39 // pred_fallthru
        _
    $region40: #{_lambda_.3} parent=5 // pred_fallthru
      _
    %p2037 = scmp.le.s32.totalorder 2, %s11
    // Predicated region
    $region49: #{_lambda_.3} parent=5 // pred_check
      %p2038 = pneg %p2037
    $region50: #{_lambda_.3} parent=5 // pred_check_branch
      %2040 = sbr.rel (%p2038) target = $region52
    $region51: #{_lambda_.3} parent=5 // pred_region
      %s2041 = ssub.s32 %s11, 2
      // Predicated region
      $region53: #{_lambda_.3} parent=51 // pred_check
        %p2042 = pneg %p188
      $region54: #{_lambda_.3} parent=51 // pred_check_branch
        %2044 = sbr.rel (%p2042) target = $region56
      $region55: #{_lambda_.3} parent=51 // pred_region
        %s2045 = ssub.s32 7, %s23
        %p2046 = scmp.lt.s32.totalorder %s22, 1
        %s2047 = scalar_select %p2046, %s22, 1
        %p2048 = scmp.lt.s32.totalorder %s2045, 7
        %s2049 = scalar_select %p2048, %s2045, 7
        %s2050 = smul.addr %s2049, 2
        %s2051 = smul.addr %s2047, 16
        %s2052 = sadd.s32 %s2050, %s2051
        %s2053 = smul.addr %s2052, 4
        %s2054 = scalar_lea.vmem %s5, %s2053
      $region56: #{_lambda_.3} parent=51 // pred_fallthru
        _
    $region52: #{_lambda_.3} parent=5 // pred_fallthru
      _
  $region6: #{_lambda_.3} parent=0 // loop_footer
    %s15 = sadd.s32 1, %s11
  $region7: #{_lambda_.3} parent=0 // loop_footer_branch
    %10 = sbr.rel target = $region3
  $region8: #{_lambda_.3} parent=0 // loop_exit
    _

</llo_original>
